<compile_context>
chip_gen: v5e
topology: v5e:2x2
jax: 0.10.0
libtpu: 0.0.40
codegen_flags: <defaults>
</compile_context>

<pallas_src>
import functools

import jax
import jax.numpy as jnp
from jax import lax
from jax.experimental import pallas as pl
from jax.experimental.pallas import tpu as pltpu

EPS = 1e-5
VMEM_LIMIT = 32 * 1024 * 1024  # safe on v5e/v6e/v7x scoped-VMEM budgets


def _cdiv(a, b):
    return -(-a // b)


def _round_up(x, m):
    return _cdiv(x, m) * m


def _fold_bn(b, gamma, beta, mean, var):
    scale = gamma / jnp.sqrt(var + EPS)
    shift = beta - mean * scale + b * scale
    return scale.astype(jnp.float32), shift.astype(jnp.float32)


def _swish(y):
    # exact sigmoid keeps the fp32 path tight vs. the reference;
    # pl.reciprocal(1 + exp(-y), approx=True) would move the divide onto the EUP.
    return y * jax.nn.sigmoid(y)


def _pick_pixel_tile(P, target=512):
    n_chunks = max(1, _cdiv(P, target))
    TP = _round_up(_cdiv(P, n_chunks), 8)
    Pp = _round_up(P, TP)
    return TP, Pp


# ----------------------------------------------------------------------------
# Kernel 1 (stem): fused conv1 (1x1 + BN + swish + swish) and conv2 (1x1 + BN + swish)
# ----------------------------------------------------------------------------
def _stem_kernel(x_ref, w1_ref, s1_ref, t1_ref, w2_ref, s2_ref, t2_ref,
                 l_ref, r_ref):
    x = x_ref[...]
    a = jnp.dot(x, w1_ref[...], preferred_element_type=jnp.float32)
    a = a * s1_ref[...] + t1_ref[...]
    a = _swish(_swish(a))            # CNNBlock swish + CSPBlock.act swish (left branch)
    l_ref[...] = a.astype(l_ref.dtype)

    c = jnp.dot(x, w2_ref[...], preferred_element_type=jnp.float32)
    c = c * s2_ref[...] + t2_ref[...]
    c = _swish(c)                    # CNNBlock swish only (residual chain follows)
    r_ref[...] = c.astype(r_ref.dtype)


def csp_stem(xf, p1, p2, compute_dtype, TP, Pp):
    P, Cin = xf.shape
    w1, b1, g1, be1, m1, v1 = p1
    w2, b2, g2, be2, m2, v2 = p2
    Ch = w1.shape[1]
    s1, t1 = _fold_bn(b1, g1, be1, m1, v1)
    s2, t2 = _fold_bn(b2, g2, be2, m2, v2)

    xf = jnp.pad(xf, ((0, Pp - P), (0, 0))).astype(compute_dtype)
    w1 = w1.astype(compute_dtype)
    w2 = w2.astype(compute_dtype)

    return pl.pallas_call(
        _stem_kernel,
        out_shape=(jax.ShapeDtypeStruct((Pp, Ch), compute_dtype),
                   jax.ShapeDtypeStruct((Pp, Ch), compute_dtype)),
        grid_spec=pltpu.PrefetchScalarGridSpec(
            num_scalar_prefetch=0,
            grid=(Pp // TP,),
            in_specs=[
                pl.BlockSpec((TP, Cin), lambda i: (i, 0)),
                pl.BlockSpec((Cin, Ch), lambda i: (0, 0)),
                pl.BlockSpec((1, Ch), lambda i: (0, 0)),
                pl.BlockSpec((1, Ch), lambda i: (0, 0)),
                pl.BlockSpec((Cin, Ch), lambda i: (0, 0)),
                pl.BlockSpec((1, Ch), lambda i: (0, 0)),
                pl.BlockSpec((1, Ch), lambda i: (0, 0)),
            ],
            out_specs=[
                pl.BlockSpec((TP, Ch), lambda i: (i, 0)),
                pl.BlockSpec((TP, Ch), lambda i: (i, 0)),
            ],
        ),
        compiler_params=pltpu.CompilerParams(
            dimension_semantics=("parallel",),
            vmem_limit_bytes=VMEM_LIMIT),
    )(xf, w1, s1.reshape(1, Ch), t1.reshape(1, Ch),
      w2, s2.reshape(1, Ch), t2.reshape(1, Ch))


# ----------------------------------------------------------------------------
# Kernel 2 (fused residual step):
#   1x1 CNNBlock (c1) + zero-pad mask + 3x3 CNNBlock (c2) + residual add (+ outer swish)
#   r state lives in a row/col zero-padded layout (rows padded to nb*TH+3, cols to
#   Wp = round_up(W+2, 8)).  Each grid step handles a TH-row band of one image; the
#   halo'd input band (TH+3 rows) is fetched with a manual async DMA.
# ----------------------------------------------------------------------------
def _res_step_kernel(rp_hbm, mask_ref, w1_ref, s1_ref, t1_ref,
                     w2_ref, s2_ref, t2_ref, o_ref, rband, sem,
                     *, TH, Wp, out_act):
    n = pl.program_id(0)
    b = pl.program_id(1)
    rows = TH + 3
    L = TH * Wp

    # manual halo DMA: padded rows [b*TH, b*TH + TH + 3) of image n
    start = pl.multiple_of(b * (TH * Wp), 8)
    cp = pltpu.make_async_copy(rp_hbm.at[n, pl.ds(start, rows * Wp)],
                               rband, sem.at[0])
    cp.start()
    cp.wait()
    band = rband[...]                                     # (rows*Wp, Ch)

    # fused 1x1 CNNBlock (c1): conv + folded BN + swish
    mid = jnp.dot(band, w1_ref[...], preferred_element_type=jnp.float32)
    mid = mid * s1_ref[...] + t1_ref[...]
    mid = _swish(mid)
    # zero positions outside the valid image -> realizes the 3x3 conv's zero padding
    mid = mid * mask_ref[0]
    mid = mid.astype(band.dtype)

    # 3x3 conv (padding=1) as 9 shifted matmuls on the flattened, width-Wp band
    acc = jnp.zeros((L, o_ref.shape[-1]), jnp.float32)
    for ky in range(3):
        for kx in range(3):
            off = ky * Wp + kx
            acc = acc + jnp.dot(mid[off:off + L, :], w2_ref[ky * 3 + kx],
                                preferred_element_type=jnp.float32)
    y = acc * s2_ref[...] + t2_ref[...]
    y = _swish(y)                                         # CNNBlock swish
    # ResidualBlock: x + layer(x); old r at the output pixels sits Wp+1 further in
    y = y + band[Wp + 1: Wp + 1 + L, :].astype(jnp.float32)
    if out_act:
        y = _swish(y)                                     # CSPBlock.act on r (last repeat)
    o_ref[0] = y.astype(o_ref.dtype)


def _make_band_mask(H, W, Wp, TH, nb):
    rows = TH + 3
    b = jnp.arange(nb)[:, None, None]
    lr = jnp.arange(rows)[None, :, None]
    lc = jnp.arange(Wp)[None, None, :]
    y = b * TH + lr                                       # global padded row
    valid = (y >= 1) & (y <= H) & (lc >= 1) & (lc <= W)
    return valid.astype(jnp.float32).reshape(nb, rows * Wp, 1)


def residual_step(rp, band_mask, pres, *, N, Wp, TH, nb, Ch,
                  compute_dtype, out_act):
    w1, b1, g1, be1, m1, v1 = pres['c1']
    w2, b2, g2, be2, m2, v2 = pres['c2']
    Cm = w1.shape[1]
    s1, t1 = _fold_bn(b1, g1, be1, m1, v1)
    s2, t2 = _fold_bn(b2, g2, be2, m2, v2)
    w1 = w1.astype(compute_dtype)
    w2f = w2.reshape(9, Cm, Ch).astype(compute_dtype)
    rows = TH + 3

    return pl.pallas_call(
        functools.partial(_res_step_kernel, TH=TH, Wp=Wp, out_act=out_act),
        out_shape=jax.ShapeDtypeStruct((N, nb * TH * Wp, Ch), compute_dtype),
        grid_spec=pltpu.PrefetchScalarGridSpec(
            num_scalar_prefetch=0,
            grid=(N, nb),
            in_specs=[
                pl.BlockSpec(memory_space=pl.ANY),                       # r state (HBM)
                pl.BlockSpec((1, rows * Wp, 1), lambda n, b: (b, 0, 0)),  # pad mask
                pl.BlockSpec((Ch, Cm), lambda n, b: (0, 0)),
                pl.BlockSpec((1, Cm), lambda n, b: (0, 0)),
                pl.BlockSpec((1, Cm), lambda n, b: (0, 0)),
                pl.BlockSpec((9, Cm, Ch), lambda n, b: (0, 0, 0)),
                pl.BlockSpec((1, Ch), lambda n, b: (0, 0)),
                pl.BlockSpec((1, Ch), lambda n, b: (0, 0)),
            ],
            out_specs=pl.BlockSpec((1, TH * Wp, Ch), lambda n, b: (n, b, 0)),
            scratch_shapes=[
                pltpu.VMEM((rows * Wp, Ch), compute_dtype),
                pltpu.SemaphoreType.DMA((1,)),
            ],
        ),
        compiler_params=pltpu.CompilerParams(
            dimension_semantics=("parallel", "parallel"),
            vmem_limit_bytes=VMEM_LIMIT),
    )(rp, band_mask, w1, s1.reshape(1, Cm), t1.reshape(1, Cm),
      w2f, s2.reshape(1, Ch), t2.reshape(1, Ch))


# ----------------------------------------------------------------------------
# Kernel 3 (merge): fused "concat + conv3" via split weights (no concat in HBM)
# ----------------------------------------------------------------------------
def _merge_kernel(l_ref, r_ref, wl_ref, wr_ref, s_ref, t_ref, o_ref):
    acc = jnp.dot(l_ref[...], wl_ref[...], preferred_element_type=jnp.float32)
    acc = acc + jnp.dot(r_ref[...], wr_ref[...], preferred_element_type=jnp.float32)
    acc = acc * s_ref[...] + t_ref[...]
    acc = _swish(acc)
    o_ref[...] = acc.astype(o_ref.dtype)


def csp_merge(lf, rf, p3, compute_dtype, TP):
    Pp, Ch = lf.shape
    w3, b3, g3, be3, m3, v3 = p3
    Cout = w3.shape[1]
    s3, t3 = _fold_bn(b3, g3, be3, m3, v3)
    wl = w3[:Ch].astype(compute_dtype)     # channels of l come first in the concat
    wr = w3[Ch:].astype(compute_dtype)

    return pl.pallas_call(
        _merge_kernel,
        out_shape=jax.ShapeDtypeStruct((Pp, Cout), jnp.float32),
        grid_spec=pltpu.PrefetchScalarGridSpec(
            num_scalar_prefetch=0,
            grid=(Pp // TP,),
            in_specs=[
                pl.BlockSpec((TP, Ch), lambda i: (i, 0)),
                pl.BlockSpec((TP, Ch), lambda i: (i, 0)),
                pl.BlockSpec((Ch, Cout), lambda i: (0, 0)),
                pl.BlockSpec((Ch, Cout), lambda i: (0, 0)),
                pl.BlockSpec((1, Cout), lambda i: (0, 0)),
                pl.BlockSpec((1, Cout), lambda i: (0, 0)),
            ],
            out_specs=pl.BlockSpec((TP, Cout), lambda i: (i, 0)),
        ),
        compiler_params=pltpu.CompilerParams(
            dimension_semantics=("parallel",),
            vmem_limit_bytes=VMEM_LIMIT),
    )(lf, rf, wl, wr, s3.reshape(1, Cout), t3.reshape(1, Cout))


# ----------------------------------------------------------------------------
# CSPBlock forward (Pallas path)
# ----------------------------------------------------------------------------
def csp_block_pallas(x_nchw, params, num_repeat=1,
                     compute_dtype=jnp.float32, pixel_tile=512, row_tile=8):
    N, C, H, W = x_nchw.shape
    x = jnp.transpose(x_nchw, (0, 2, 3, 1))               # NCHW -> NHWC
    P = N * H * W
    Ch = params['conv1'][0].shape[1]                       # out_channels // 2
    Cout = params['conv3'][0].shape[1]

    TP, Pp = _pick_pixel_tile(P, pixel_tile)

    # stem: l (double swish) and r0 (single swish) from one pass over x
    l, r = csp_stem(x.reshape(P, C), params['conv1'], params['conv2'],
                    compute_dtype, TP, Pp)

    if num_repeat == 0:
        rff = r[:P].astype(jnp.float32)
        r_final = (rff * jax.nn.sigmoid(rff)).astype(compute_dtype)
    else:
        # residual chain in a row/col zero-padded, width-rounded layout
        TH = min(row_tile, H)
        nb = _cdiv(H, TH)
        Wp = _round_up(W + 2, 8)
        Hp = nb * TH + 3                                   # 1 top + >=2 bottom pad rows

        r0 = r[:P].reshape(N, H, W, Ch)
        rp = jnp.pad(r0, ((0, 0), (1, Hp - 1 - H), (1, Wp - 1 - W), (0, 0)))
        rp = rp.reshape(N, Hp * Wp, Ch)
        band_mask = _make_band_mask(H, W, Wp, TH, nb)

        rb = None
        for i in range(num_repeat):
            rb = residual_step(rp, band_mask, params['res'][i],
                               N=N, Wp=Wp, TH=TH, nb=nb, Ch=Ch,
                               compute_dtype=compute_dtype,
                               out_act=(i == num_repeat - 1))
            if i + 1 < num_repeat:
                # output pixel (i,j) sits at flat i*Wp+j -> shift by Wp+1 re-creates
                # the padded layout ((i+1)*Wp + (j+1)) for the next repeat.
                rp = jnp.pad(rb, ((0, 0), (Wp + 1, 2 * Wp - 1), (0, 0)))

        r_final = rb.reshape(N, nb * TH, Wp, Ch)[:, :H, :W, :].reshape(P, Ch)

    r_final = jnp.pad(r_final, ((0, Pp - P), (0, 0)))

    # merge: fused concat + conv3 (split weights, two accumulated matmuls)
    out = csp_merge(l, r_final, params['conv3'], compute_dtype, TP)
    out = out[:P].reshape(N, H, W, Cout)
    return jnp.transpose(out, (0, 3, 1, 2))                # NHWC -> NCHW


# ----------------------------------------------------------------------------
# Deterministic parameter construction (shapes per module __init__)
# ----------------------------------------------------------------------------
def make_cnn_params(key, cin, cout, k):
    ks = jax.random.split(key, 6)
    if k == 1:
        w = 0.2 * jax.random.normal(ks[0], (cin, cout), jnp.float32)
    else:
        w = 0.2 * jax.random.normal(ks[0], (3, 3, cin, cout), jnp.float32)
    b = 0.05 * jax.random.normal(ks[1], (cout,), jnp.float32)
    gamma = 1.0 + 0.1 * jax.random.normal(ks[2], (cout,), jnp.float32)
    beta = 0.05 * jax.random.normal(ks[3], (cout,), jnp.float32)
    mean = 0.05 * jax.random.normal(ks[4], (cout,), jnp.float32)
    var = 0.9 + 0.1 * jnp.abs(jax.random.normal(ks[5], (cout,), jnp.float32))
    return (w, b, gamma, beta, mean, var)


def make_csp_params(key, cin, cout, num_repeat):
    half = cout // 2
    keys = jax.random.split(key, 3 + 2 * num_repeat)
    params = {
        'conv1': make_cnn_params(keys[0], cin, half, 1),
        'conv2': make_cnn_params(keys[1], cin, half, 1),
        'conv3': make_cnn_params(keys[2], cout, cout, 1),
        'res': [],
    }
    for i in range(num_repeat):
        params['res'].append({
            'c1': make_cnn_params(keys[3 + 2 * i], half, half // 2, 1),
            'c2': make_cnn_params(keys[4 + 2 * i], half // 2, half, 3),
        })
    return params


# ----------------------------------------------------------------------------
# Pure-JAX reference (mirrors the PyTorch module) for a correctness check
# ----------------------------------------------------------------------------
def _ref_cnnblock(x_nchw, w, b, gamma, beta, mean, var):
    if w.ndim == 2:                                        # 1x1 conv, weight (Cin, Cout)
        wt = jnp.transpose(w, (1, 0)).reshape(w.shape[1], w.shape[0], 1, 1)
        pad = 0
    else:                                                  # 3x3 conv, weight (3,3,Cin,Cout)
        wt = jnp.transpose(w, (3, 2, 0, 1))
        pad = 1
    y = lax.conv_general_dilated(x_nchw, wt, (1, 1), [(pad, pad), (pad, pad)],
                                 dimension_numbers=('NCHW', 'OIHW', 'NCHW'))
    y = y + b[None, :, None, None]
    scale = (gamma / jnp.sqrt(var + EPS))[None, :, None, None]
    y = scale * (y - mean[None, :, None, None]) + beta[None, :, None, None]
    return y * jax.nn.sigmoid(y)


def ref_csp(x_nchw, params, num_repeat=1):
    sw = lambda t: t * jax.nn.sigmoid(t)
    l = sw(_ref_cnnblock(x_nchw, *params['conv1']))
    r = _ref_cnnblock(x_nchw, *params['conv2'])
    for i in range(num_repeat):
        mid = _ref_cnnblock(r, *params['res'][i]['c1'])
        r = r + _ref_cnnblock(mid, *params['res'][i]['c2'])
    r = sw(r)
    cat = jnp.concatenate([l, r], axis=1)
    return _ref_cnnblock(cat, *params['conv3'])


# ----------------------------------------------------------------------------
if __name__ == "__main__":
    key = jax.random.PRNGKey(0)
    k_x, k_p = jax.random.split(key)

    N, C, H, W = 2, 16, 16, 16
    num_repeat = 2

    x = jax.random.normal(k_x, (N, C, H, W), jnp.float32)
    params = make_csp_params(k_p, C, C, num_repeat)
    ref = ref_csp(x, params, num_repeat=num_repeat)

    # fp32 path: strict check of the fused-kernel semantics (multi-band, 2 repeats)
    out32 = jax.block_until_ready(
        csp_block_pallas(x, params, num_repeat=num_repeat,
                         compute_dtype=jnp.float32))
    assert out32.shape == (N, C, H, W), out32.shape
    err32 = float(jnp.max(jnp.abs(out32 - ref)))
    if err32 > 2e-3:
        raise AssertionError(f"fp32 Pallas CSPBlock mismatch vs reference: {err32}")

    # bf16 MXU/DMA path (fp32 accumulate + fp32 elementwise): loose tolerance
    out16 = jax.block_until_ready(
        csp_block_pallas(x, params, num_repeat=num_repeat,
                         compute_dtype=jnp.bfloat16))
    err16 = float(jnp.max(jnp.abs(out16 - ref)))
    if err16 > 1.5e-1:
        raise AssertionError(f"bf16 Pallas CSPBlock mismatch vs reference: {err16}")

    print("KERNEL_OK")
</pallas_src>

<mosaic_0001>
module attributes {stable_mosaic.version = 11 : i64} {
  func.func @_stem_kernel(%arg0: i32, %arg1: memref<512x16xf32, #tpu.memory_space<vmem>>, %arg2: memref<16x8xf32, #tpu.memory_space<vmem>>, %arg3: memref<1x8xf32, #tpu.memory_space<vmem>>, %arg4: memref<1x8xf32, #tpu.memory_space<vmem>>, %arg5: memref<16x8xf32, #tpu.memory_space<vmem>>, %arg6: memref<1x8xf32, #tpu.memory_space<vmem>>, %arg7: memref<1x8xf32, #tpu.memory_space<vmem>>, %arg8: memref<512x8xf32, #tpu.memory_space<vmem>>, %arg9: memref<512x8xf32, #tpu.memory_space<vmem>>) attributes {dimension_semantics = [#tpu.dimension_semantics<parallel>], iteration_bounds = array<i64: 1>, scalar_prefetch = 0 : i64, scratch_operands = 0 : i64, tpu.core_type = #tpu.core_type<tc>, window_params = [{transform_indices = @transform_0, window_bounds = array<i64: 512, 16>}, {pipeline_mode = #tpu.pipeline_mode<synchronous>, transform_indices = @transform_1, window_bounds = array<i64: 16, 8>}, {pipeline_mode = #tpu.pipeline_mode<synchronous>, transform_indices = @transform_2, window_bounds = array<i64: 1, 8>}, {pipeline_mode = #tpu.pipeline_mode<synchronous>, transform_indices = @transform_3, window_bounds = array<i64: 1, 8>}, {pipeline_mode = #tpu.pipeline_mode<synchronous>, transform_indices = @transform_4, window_bounds = array<i64: 16, 8>}, {pipeline_mode = #tpu.pipeline_mode<synchronous>, transform_indices = @transform_5, window_bounds = array<i64: 1, 8>}, {pipeline_mode = #tpu.pipeline_mode<synchronous>, transform_indices = @transform_6, window_bounds = array<i64: 1, 8>}, {transform_indices = @transform_7, window_bounds = array<i64: 512, 8>}, {transform_indices = @transform_8, window_bounds = array<i64: 512, 8>}]} {
    %c0 = arith.constant 0 : index
    %c0_0 = arith.constant 0 : index
    %0 = vector.load %arg1[%c0, %c0_0] : memref<512x16xf32, #tpu.memory_space<vmem>>, vector<512x16xf32>
    %c0_1 = arith.constant 0 : index
    %c0_2 = arith.constant 0 : index
    %1 = vector.load %arg2[%c0_1, %c0_2] : memref<16x8xf32, #tpu.memory_space<vmem>>, vector<16x8xf32>
    %cst = arith.constant dense<0.000000e+00> : vector<512x8xf32>
    %2 = tpu.matmul %0, %1, %cst {dimension_numbers = #tpu.dot_dimension_numbers<[1], [0], [0], [1], [0, 0, 1, 1], [], []>} : vector<512x16xf32>, vector<16x8xf32>, vector<512x8xf32> -> vector<512x8xf32>
    %c0_3 = arith.constant 0 : index
    %c0_4 = arith.constant 0 : index
    %3 = vector.load %arg3[%c0_3, %c0_4] : memref<1x8xf32, #tpu.memory_space<vmem>>, vector<1x8xf32>
    %4 = vector.broadcast %3 : vector<1x8xf32> to vector<512x8xf32>
    %5 = arith.mulf %2, %4 : vector<512x8xf32>
    %c0_5 = arith.constant 0 : index
    %c0_6 = arith.constant 0 : index
    %6 = vector.load %arg4[%c0_5, %c0_6] : memref<1x8xf32, #tpu.memory_space<vmem>>, vector<1x8xf32>
    %7 = vector.broadcast %6 : vector<1x8xf32> to vector<512x8xf32>
    %8 = arith.addf %5, %7 : vector<512x8xf32>
    %9 = arith.negf %8 : vector<512x8xf32>
    %10 = math.exp %9 : vector<512x8xf32>
    %cst_7 = arith.constant 1.000000e+00 : f32
    %11 = vector.broadcast %cst_7 : f32 to vector<512x8xf32>
    %12 = arith.addf %11, %10 : vector<512x8xf32>
    %13 = arith.divf %11, %12 : vector<512x8xf32>
    %14 = arith.mulf %8, %13 : vector<512x8xf32>
    %15 = arith.negf %14 : vector<512x8xf32>
    %16 = math.exp %15 : vector<512x8xf32>
    %cst_8 = arith.constant 1.000000e+00 : f32
    %17 = vector.broadcast %cst_8 : f32 to vector<512x8xf32>
    %18 = arith.addf %17, %16 : vector<512x8xf32>
    %19 = arith.divf %17, %18 : vector<512x8xf32>
    %20 = arith.mulf %14, %19 : vector<512x8xf32>
    %c0_9 = arith.constant 0 : index
    %c0_10 = arith.constant 0 : index
    %21 = vector.load %arg8[%c0_9, %c0_10] : memref<512x8xf32, #tpu.memory_space<vmem>>, vector<512x8xf32>
    tpu.vector_store %arg8[%c0_9, %c0_10], %20 {strides = array<i32>} : memref<512x8xf32, #tpu.memory_space<vmem>>, vector<512x8xf32>,
    %c0_11 = arith.constant 0 : index
    %c0_12 = arith.constant 0 : index
    %22 = vector.load %arg5[%c0_11, %c0_12] : memref<16x8xf32, #tpu.memory_space<vmem>>, vector<16x8xf32>
    %cst_13 = arith.constant dense<0.000000e+00> : vector<512x8xf32>
    %23 = tpu.matmul %0, %22, %cst_13 {dimension_numbers = #tpu.dot_dimension_numbers<[1], [0], [0], [1], [0, 0, 1, 1], [], []>} : vector<512x16xf32>, vector<16x8xf32>, vector<512x8xf32> -> vector<512x8xf32>
    %c0_14 = arith.constant 0 : index
    %c0_15 = arith.constant 0 : index
    %24 = vector.load %arg6[%c0_14, %c0_15] : memref<1x8xf32, #tpu.memory_space<vmem>>, vector<1x8xf32>
    %25 = vector.broadcast %24 : vector<1x8xf32> to vector<512x8xf32>
    %26 = arith.mulf %23, %25 : vector<512x8xf32>
    %c0_16 = arith.constant 0 : index
    %c0_17 = arith.constant 0 : index
    %27 = vector.load %arg7[%c0_16, %c0_17] : memref<1x8xf32, #tpu.memory_space<vmem>>, vector<1x8xf32>
    %28 = vector.broadcast %27 : vector<1x8xf32> to vector<512x8xf32>
    %29 = arith.addf %26, %28 : vector<512x8xf32>
    %30 = arith.negf %29 : vector<512x8xf32>
    %31 = math.exp %30 : vector<512x8xf32>
    %cst_18 = arith.constant 1.000000e+00 : f32
    %32 = vector.broadcast %cst_18 : f32 to vector<512x8xf32>
    %33 = arith.addf %32, %31 : vector<512x8xf32>
    %34 = arith.divf %32, %33 : vector<512x8xf32>
    %35 = arith.mulf %29, %34 : vector<512x8xf32>
    %c0_19 = arith.constant 0 : index
    %c0_20 = arith.constant 0 : index
    %36 = vector.load %arg9[%c0_19, %c0_20] : memref<512x8xf32, #tpu.memory_space<vmem>>, vector<512x8xf32>
    tpu.vector_store %arg9[%c0_19, %c0_20], %35 {strides = array<i32>} : memref<512x8xf32, #tpu.memory_space<vmem>>, vector<512x8xf32>,
    return
  }
  func.func @transform_0(%arg0: i32) -> (i32, i32) {
    %c0_i32 = arith.constant 0 : i32
    %c0_i32_0 = arith.constant 0 : i32
    return %arg0, %c0_i32 : i32, i32
  }
  func.func @transform_1(%arg0: i32) -> (i32, i32) {
    %c0_i32 = arith.constant 0 : i32
    %c0_i32_0 = arith.constant 0 : i32
    %c0_i32_1 = arith.constant 0 : i32
    return %c0_i32, %c0_i32_0 : i32, i32
  }
  func.func @transform_2(%arg0: i32) -> (i32, i32) {
    %c0_i32 = arith.constant 0 : i32
    %c0_i32_0 = arith.constant 0 : i32
    %c0_i32_1 = arith.constant 0 : i32
    return %c0_i32, %c0_i32_0 : i32, i32
  }
  func.func @transform_3(%arg0: i32) -> (i32, i32) {
    %c0_i32 = arith.constant 0 : i32
    %c0_i32_0 = arith.constant 0 : i32
    %c0_i32_1 = arith.constant 0 : i32
    return %c0_i32, %c0_i32_0 : i32, i32
  }
  func.func @transform_4(%arg0: i32) -> (i32, i32) {
    %c0_i32 = arith.constant 0 : i32
    %c0_i32_0 = arith.constant 0 : i32
    %c0_i32_1 = arith.constant 0 : i32
    return %c0_i32, %c0_i32_0 : i32, i32
  }
  func.func @transform_5(%arg0: i32) -> (i32, i32) {
    %c0_i32 = arith.constant 0 : i32
    %c0_i32_0 = arith.constant 0 : i32
    %c0_i32_1 = arith.constant 0 : i32
    return %c0_i32, %c0_i32_0 : i32, i32
  }
  func.func @transform_6(%arg0: i32) -> (i32, i32) {
    %c0_i32 = arith.constant 0 : i32
    %c0_i32_0 = arith.constant 0 : i32
    %c0_i32_1 = arith.constant 0 : i32
    return %c0_i32, %c0_i32_0 : i32, i32
  }
  func.func @transform_7(%arg0: i32) -> (i32, i32) {
    %c0_i32 = arith.constant 0 : i32
    %c0_i32_0 = arith.constant 0 : i32
    return %arg0, %c0_i32 : i32, i32
  }
  func.func @transform_8(%arg0: i32) -> (i32, i32) {
    %c0_i32 = arith.constant 0 : i32
    %c0_i32_0 = arith.constant 0 : i32
    return %arg0, %c0_i32 : i32, i32
  }
}

</mosaic_0001>

<llo_original>
// kernel: tpu_custom_call.1
$region0: #{tpu_custom_call.1}
  #allocation0 [shape = 'u32[]', space=smem, size = 0x4, offset = 0x4, fixed_abs, tag = 'smem constant byte address 0x4 - core index']
  #allocation1 [shape = 'u32[72,128]{1,0:T(1,128)}', space=vmem, size = 0x9000, scoped, tag = 'internal scratch']
  %s0 = inlined_call_operand.vmem [shape: f32[512,16], index: 0, kind: input, shape index: {}]
  %s1 = inlined_call_operand.vmem [shape: f32[16,8], index: 1, kind: input, shape index: {}]
  %s2 = inlined_call_operand.vmem [shape: f32[1,8], index: 2, kind: input, shape index: {}]
  %s3 = inlined_call_operand.vmem [shape: f32[1,8], index: 3, kind: input, shape index: {}]
  %s4 = inlined_call_operand.vmem [shape: f32[16,8], index: 4, kind: input, shape index: {}]
  %s5 = inlined_call_operand.vmem [shape: f32[1,8], index: 5, kind: input, shape index: {}]
  %s6 = inlined_call_operand.vmem [shape: f32[1,8], index: 6, kind: input, shape index: {}]
  %s7 = inlined_call_operand.vmem [shape: f32[512,8], index: 7, kind: output, shape index: {0}]
  %s8 = inlined_call_operand.vmem [shape: f32[512,8], index: 8, kind: output, shape index: {1}]
  %9 = xla_tuple %s7, %s8
  %s10 = sld [smem:[#allocation0]]
  $region46: #{tpu_custom_call.1} parent=0
    _
  %s12 = ssub.s32 1, %s10
  %s13 = scalar_select 0, %s12, %s10
  // Predicated region
  $region2: #{tpu_custom_call.1} parent=0 // pred_check
    _
  $region3: #{tpu_custom_call.1} parent=0 // pred_check_branch
    %15 = sbr.rel (0) target = $region5
  $region4: #{tpu_custom_call.1} parent=0 // pred_region
    _
  $region5: #{tpu_custom_call.1} parent=0 // pred_fallthru
    _
  // Predicated region
  $region6: #{tpu_custom_call.1} parent=0 // pred_check
    _
  $region7: #{tpu_custom_call.1} parent=0 // pred_check_branch
    %17 = sbr.rel (0) target = $region9
  $region8: #{tpu_custom_call.1} parent=0 // pred_region
    _
  $region9: #{tpu_custom_call.1} parent=0 // pred_fallthru
    _
  // Predicated region
  $region10: #{tpu_custom_call.1} parent=0 // pred_check
    _
  $region11: #{tpu_custom_call.1} parent=0 // pred_check_branch
    %19 = sbr.rel (0) target = $region13
  $region12: #{tpu_custom_call.1} parent=0 // pred_region
    _
  $region13: #{tpu_custom_call.1} parent=0 // pred_fallthru
    _
  // Predicated region
  $region14: #{tpu_custom_call.1} parent=0 // pred_check
    _
  $region15: #{tpu_custom_call.1} parent=0 // pred_check_branch
    %21 = sbr.rel (0) target = $region17
  $region16: #{tpu_custom_call.1} parent=0 // pred_region
    _
  $region17: #{tpu_custom_call.1} parent=0 // pred_fallthru
    _
  // Predicated region
  $region18: #{tpu_custom_call.1} parent=0 // pred_check
    _
  $region19: #{tpu_custom_call.1} parent=0 // pred_check_branch
    %23 = sbr.rel (0) target = $region21
  $region20: #{tpu_custom_call.1} parent=0 // pred_region
    _
  $region21: #{tpu_custom_call.1} parent=0 // pred_fallthru
    _
  // Predicated region
  $region22: #{tpu_custom_call.1} parent=0 // pred_check
    _
  $region23: #{tpu_custom_call.1} parent=0 // pred_check_branch
    %25 = sbr.rel (0) target = $region25
  $region24: #{tpu_custom_call.1} parent=0 // pred_region
    _
  $region25: #{tpu_custom_call.1} parent=0 // pred_fallthru
    _
  // Predicated region
  $region26: #{tpu_custom_call.1} parent=0 // pred_check
    _
  $region27: #{tpu_custom_call.1} parent=0 // pred_check_branch
    %27 = sbr.rel (0) target = $region29
  $region28: #{tpu_custom_call.1} parent=0 // pred_region
    _
  $region29: #{tpu_custom_call.1} parent=0 // pred_fallthru
    _
  %v28 = vld [vmem:[%s0] sm:$0xff]
  %v29 = vld [vmem:[%s0 + $0x8] sm:$0xff]
  %v30 = vld [vmem:[%s0 + $0x10] sm:$0xff]
  %v31 = vld [vmem:[%s0 + $0x18] sm:$0xff]
  %v32 = vld [vmem:[%s0 + $0x20] sm:$0xff]
  %v33 = vld [vmem:[%s0 + $0x28] sm:$0xff]
  %v34 = vld [vmem:[%s0 + $0x30] sm:$0xff]
  %v35 = vld [vmem:[%s0 + $0x38] sm:$0xff]
  %v36 = vld [vmem:[%s0 + $0x40] sm:$0xff]
  %v37 = vld [vmem:[%s0 + $0x48] sm:$0xff]
  %v38 = vld [vmem:[%s0 + $0x50] sm:$0xff]
  %v39 = vld [vmem:[%s0 + $0x58] sm:$0xff]
  %v40 = vld [vmem:[%s0 + $0x60] sm:$0xff]
  %v41 = vld [vmem:[%s0 + $0x68] sm:$0xff]
  %v42 = vld [vmem:[%s0 + $0x70] sm:$0xff]
  %v43 = vld [vmem:[%s0 + $0x78] sm:$0xff]
  %v44 = vld [vmem:[%s0 + $0x80] sm:$0xff]
  %v45 = vld [vmem:[%s0 + $0x88] sm:$0xff]
  %v46 = vld [vmem:[%s0 + $0x90] sm:$0xff]
  %v47 = vld [vmem:[%s0 + $0x98] sm:$0xff]
  %v48 = vld [vmem:[%s0 + $0xa0] sm:$0xff]
  %v49 = vld [vmem:[%s0 + $0xa8] sm:$0xff]
  %v50 = vld [vmem:[%s0 + $0xb0] sm:$0xff]
  %v51 = vld [vmem:[%s0 + $0xb8] sm:$0xff]
  %v52 = vld [vmem:[%s0 + $0xc0] sm:$0xff]
  %v53 = vld [vmem:[%s0 + $0xc8] sm:$0xff]
  %v54 = vld [vmem:[%s0 + $0xd0] sm:$0xff]
  %v55 = vld [vmem:[%s0 + $0xd8] sm:$0xff]
  %v56 = vld [vmem:[%s0 + $0xe0] sm:$0xff]
  %v57 = vld [vmem:[%s0 + $0xe8] sm:$0xff]
  %v58 = vld [vmem:[%s0 + $0xf0] sm:$0xff]
  %v59 = vld [vmem:[%s0 + $0xf8] sm:$0xff]
  %v60 = vld [vmem:[%s0 + $0x100] sm:$0xff]
  %v61 = vld [vmem:[%s0 + $0x108] sm:$0xff]
  %v62 = vld [vmem:[%s0 + $0x110] sm:$0xff]
  %v63 = vld [vmem:[%s0 + $0x118] sm:$0xff]
  %v64 = vld [vmem:[%s0 + $0x120] sm:$0xff]
  %v65 = vld [vmem:[%s0 + $0x128] sm:$0xff]
  %v66 = vld [vmem:[%s0 + $0x130] sm:$0xff]
  %v67 = vld [vmem:[%s0 + $0x138] sm:$0xff]
  %v68 = vld [vmem:[%s0 + $0x140] sm:$0xff]
  %v69 = vld [vmem:[%s0 + $0x148] sm:$0xff]
  %v70 = vld [vmem:[%s0 + $0x150] sm:$0xff]
  %v71 = vld [vmem:[%s0 + $0x158] sm:$0xff]
  %v72 = vld [vmem:[%s0 + $0x160] sm:$0xff]
  %v73 = vld [vmem:[%s0 + $0x168] sm:$0xff]
  %v74 = vld [vmem:[%s0 + $0x170] sm:$0xff]
  %v75 = vld [vmem:[%s0 + $0x178] sm:$0xff]
  %v76 = vld [vmem:[%s0 + $0x180] sm:$0xff]
  %v77 = vld [vmem:[%s0 + $0x188] sm:$0xff]
  %v78 = vld [vmem:[%s0 + $0x190] sm:$0xff]
  %v79 = vld [vmem:[%s0 + $0x198] sm:$0xff]
  %v80 = vld [vmem:[%s0 + $0x1a0] sm:$0xff]
  %v81 = vld [vmem:[%s0 + $0x1a8] sm:$0xff]
  %v82 = vld [vmem:[%s0 + $0x1b0] sm:$0xff]
  %v83 = vld [vmem:[%s0 + $0x1b8] sm:$0xff]
  %v84 = vld [vmem:[%s0 + $0x1c0] sm:$0xff]
  %v85 = vld [vmem:[%s0 + $0x1c8] sm:$0xff]
  %v86 = vld [vmem:[%s0 + $0x1d0] sm:$0xff]
  %v87 = vld [vmem:[%s0 + $0x1d8] sm:$0xff]
  %v88 = vld [vmem:[%s0 + $0x1e0] sm:$0xff]
  %v89 = vld [vmem:[%s0 + $0x1e8] sm:$0xff]
  %v90 = vld [vmem:[%s0 + $0x1f0] sm:$0xff]
  %v91 = vld [vmem:[%s0 + $0x1f8] sm:$0xff]
  %v92 = vld [vmem:[%s1] sm:$0xff]
  %v93 = vld [vmem:[%s1 + $0x8] sm:$0xff]
  %vm94 = vcmask 130048
  %v96 = vsel %vm94, %v28, 0
  %v99 = vsel %vm94, %v29, 0
  %v102 = vsel %vm94, %v30, 0
  %v105 = vsel %vm94, %v31, 0
  %v108 = vsel %vm94, %v32, 0
  %v111 = vsel %vm94, %v33, 0
  %v114 = vsel %vm94, %v34, 0
  %v117 = vsel %vm94, %v35, 0
  %v120 = vsel %vm94, %v36, 0
  %v123 = vsel %vm94, %v37, 0
  %v126 = vsel %vm94, %v38, 0
  %v129 = vsel %vm94, %v39, 0
  %v132 = vsel %vm94, %v40, 0
  %v135 = vsel %vm94, %v41, 0
  %v138 = vsel %vm94, %v42, 0
  %v141 = vsel %vm94, %v43, 0
  %v144 = vsel %vm94, %v44, 0
  %v147 = vsel %vm94, %v45, 0
  %v150 = vsel %vm94, %v46, 0
  %v153 = vsel %vm94, %v47, 0
  %v156 = vsel %vm94, %v48, 0
  %v159 = vsel %vm94, %v49, 0
  %v162 = vsel %vm94, %v50, 0
  %v165 = vsel %vm94, %v51, 0
  %v168 = vsel %vm94, %v52, 0
  %v171 = vsel %vm94, %v53, 0
  %v174 = vsel %vm94, %v54, 0
  %v177 = vsel %vm94, %v55, 0
  %v180 = vsel %vm94, %v56, 0
  %v183 = vsel %vm94, %v57, 0
  %v186 = vsel %vm94, %v58, 0
  %v189 = vsel %vm94, %v59, 0
  %v192 = vsel %vm94, %v60, 0
  %v195 = vsel %vm94, %v61, 0
  %v198 = vsel %vm94, %v62, 0
  %v201 = vsel %vm94, %v63, 0
  %v204 = vsel %vm94, %v64, 0
  %v207 = vsel %vm94, %v65, 0
  %v210 = vsel %vm94, %v66, 0
  %v213 = vsel %vm94, %v67, 0
  %v216 = vsel %vm94, %v68, 0
  %v219 = vsel %vm94, %v69, 0
  %v222 = vsel %vm94, %v70, 0
  %v225 = vsel %vm94, %v71, 0
  %v228 = vsel %vm94, %v72, 0
  %v231 = vsel %vm94, %v73, 0
  %v234 = vsel %vm94, %v74, 0
  %v237 = vsel %vm94, %v75, 0
  %v240 = vsel %vm94, %v76, 0
  %v243 = vsel %vm94, %v77, 0
  %v246 = vsel %vm94, %v78, 0
  %v249 = vsel %vm94, %v79, 0
  %v252 = vsel %vm94, %v80, 0
  %v255 = vsel %vm94, %v81, 0
  %v258 = vsel %vm94, %v82, 0
  %v261 = vsel %vm94, %v83, 0
  %v264 = vsel %vm94, %v84, 0
  %v267 = vsel %vm94, %v85, 0
  %v270 = vsel %vm94, %v86, 0
  %v273 = vsel %vm94, %v87, 0
  %v276 = vsel %vm94, %v88, 0
  %v279 = vsel %vm94, %v89, 0
  %v282 = vsel %vm94, %v90, 0
  %v285 = vsel %vm94, %v91, 0
  %287 = vmatpush.msra.mxu0 0.0
  %288 = vmatpush.msra.mxu0 0.0
  %289 = vmatpush.msra.mxu0 0.0
  %290 = vmatpush.msra.mxu0 0.0
  %291 = vmatpush.msra.mxu0 0.0
  %292 = vmatpush.msra.mxu0 0.0
  %293 = vmatpush.msra.mxu0 0.0
  %294 = vmatpush.msra.mxu0 0.0
  %295 = vmatpush.msra.mxu0 0.0
  %296 = vmatpush.msra.mxu0 0.0
  %297 = vmatpush.msra.mxu0 0.0
  %298 = vmatpush.msra.mxu0 0.0
  %299 = vmatpush.msra.mxu0 0.0
  %300 = vmatpush.msra.mxu0 0.0
  %301 = vmatpush.msra.mxu0 %v93
  %302 = vmatpush.msra.mxu0 %v92
  %303 = vmatmul.f32.gmra.mxu0 %v96
  %v304 = vpop.f32.mrf.mxu0
  %v305 = vadd.f32 0.0, %v304
  %306 = vmatmul.f32.gmra.mxu0 %v99
  %v307 = vpop.f32.mrf.mxu0
  %v308 = vadd.f32 0.0, %v307
  %309 = vmatmul.f32.gmra.mxu0 %v102
  %v310 = vpop.f32.mrf.mxu0
  %v311 = vadd.f32 0.0, %v310
  %312 = vmatmul.f32.gmra.mxu0 %v105
  %v313 = vpop.f32.mrf.mxu0
  %v314 = vadd.f32 0.0, %v313
  %315 = vmatmul.f32.gmra.mxu0 %v108
  %v316 = vpop.f32.mrf.mxu0
  %v317 = vadd.f32 0.0, %v316
  %318 = vmatmul.f32.gmra.mxu0 %v111
  %v319 = vpop.f32.mrf.mxu0
  %v320 = vadd.f32 0.0, %v319
  %321 = vmatmul.f32.gmra.mxu0 %v114
  %v322 = vpop.f32.mrf.mxu0
  %v323 = vadd.f32 0.0, %v322
  %324 = vmatmul.f32.gmra.mxu0 %v117
  %v325 = vpop.f32.mrf.mxu0
  %v326 = vadd.f32 0.0, %v325
  %327 = vmatmul.f32.gmra.mxu0 %v120
  %v328 = vpop.f32.mrf.mxu0
  %v329 = vadd.f32 0.0, %v328
  %330 = vmatmul.f32.gmra.mxu0 %v123
  %v331 = vpop.f32.mrf.mxu0
  %v332 = vadd.f32 0.0, %v331
  %333 = vmatmul.f32.gmra.mxu0 %v126
  %v334 = vpop.f32.mrf.mxu0
  %v335 = vadd.f32 0.0, %v334
  %336 = vmatmul.f32.gmra.mxu0 %v129
  %v337 = vpop.f32.mrf.mxu0
  %v338 = vadd.f32 0.0, %v337
  %339 = vmatmul.f32.gmra.mxu0 %v132
  %v340 = vpop.f32.mrf.mxu0
  %v341 = vadd.f32 0.0, %v340
  %342 = vmatmul.f32.gmra.mxu0 %v135
  %v343 = vpop.f32.mrf.mxu0
  %v344 = vadd.f32 0.0, %v343
  %345 = vmatmul.f32.gmra.mxu0 %v138
  %v346 = vpop.f32.mrf.mxu0
  %v347 = vadd.f32 0.0, %v346
  %348 = vmatmul.f32.gmra.mxu0 %v141
  %v349 = vpop.f32.mrf.mxu0
  %v350 = vadd.f32 0.0, %v349
  %351 = vmatmul.f32.gmra.mxu0 %v144
  %v352 = vpop.f32.mrf.mxu0
  %v353 = vadd.f32 0.0, %v352
  %354 = vmatmul.f32.gmra.mxu0 %v147
  %v355 = vpop.f32.mrf.mxu0
  %v356 = vadd.f32 0.0, %v355
  %357 = vmatmul.f32.gmra.mxu0 %v150
  %v358 = vpop.f32.mrf.mxu0
  %v359 = vadd.f32 0.0, %v358
  %360 = vmatmul.f32.gmra.mxu0 %v153
  %v361 = vpop.f32.mrf.mxu0
  %v362 = vadd.f32 0.0, %v361
  %363 = vmatmul.f32.gmra.mxu0 %v156
  %v364 = vpop.f32.mrf.mxu0
  %v365 = vadd.f32 0.0, %v364
  %366 = vmatmul.f32.gmra.mxu0 %v159
  %v367 = vpop.f32.mrf.mxu0
  %v368 = vadd.f32 0.0, %v367
  %369 = vmatmul.f32.gmra.mxu0 %v162
  %v370 = vpop.f32.mrf.mxu0
  %v371 = vadd.f32 0.0, %v370
  %372 = vmatmul.f32.gmra.mxu0 %v165
  %v373 = vpop.f32.mrf.mxu0
  %v374 = vadd.f32 0.0, %v373
  %375 = vmatmul.f32.gmra.mxu0 %v168
  %v376 = vpop.f32.mrf.mxu0
  %v377 = vadd.f32 0.0, %v376
  %378 = vmatmul.f32.gmra.mxu0 %v171
  %v379 = vpop.f32.mrf.mxu0
  %v380 = vadd.f32 0.0, %v379
  %381 = vmatmul.f32.gmra.mxu0 %v174
  %v382 = vpop.f32.mrf.mxu0
  %v383 = vadd.f32 0.0, %v382
  %384 = vmatmul.f32.gmra.mxu0 %v177
  %v385 = vpop.f32.mrf.mxu0
  %v386 = vadd.f32 0.0, %v385
  %387 = vmatmul.f32.gmra.mxu0 %v180
  %v388 = vpop.f32.mrf.mxu0
  %v389 = vadd.f32 0.0, %v388
  %390 = vmatmul.f32.gmra.mxu0 %v183
  %v391 = vpop.f32.mrf.mxu0
  %v392 = vadd.f32 0.0, %v391
  %393 = vmatmul.f32.gmra.mxu0 %v186
  %v394 = vpop.f32.mrf.mxu0
  %v395 = vadd.f32 0.0, %v394
  %396 = vmatmul.f32.gmra.mxu0 %v189
  %v397 = vpop.f32.mrf.mxu0
  %v398 = vadd.f32 0.0, %v397
  %399 = vmatmul.f32.gmra.mxu0 %v192
  %v400 = vpop.f32.mrf.mxu0
  %v401 = vadd.f32 0.0, %v400
  %402 = vmatmul.f32.gmra.mxu0 %v195
  %v403 = vpop.f32.mrf.mxu0
  %v404 = vadd.f32 0.0, %v403
  %405 = vmatmul.f32.gmra.mxu0 %v198
  %v406 = vpop.f32.mrf.mxu0
  %v407 = vadd.f32 0.0, %v406
  %408 = vmatmul.f32.gmra.mxu0 %v201
  %v409 = vpop.f32.mrf.mxu0
  %v410 = vadd.f32 0.0, %v409
  %411 = vmatmul.f32.gmra.mxu0 %v204
  %v412 = vpop.f32.mrf.mxu0
  %v413 = vadd.f32 0.0, %v412
  %414 = vmatmul.f32.gmra.mxu0 %v207
  %v415 = vpop.f32.mrf.mxu0
  %v416 = vadd.f32 0.0, %v415
  %417 = vmatmul.f32.gmra.mxu0 %v210
  %v418 = vpop.f32.mrf.mxu0
  %v419 = vadd.f32 0.0, %v418
  %420 = vmatmul.f32.gmra.mxu0 %v213
  %v421 = vpop.f32.mrf.mxu0
  %v422 = vadd.f32 0.0, %v421
  %423 = vmatmul.f32.gmra.mxu0 %v216
  %v424 = vpop.f32.mrf.mxu0
  %v425 = vadd.f32 0.0, %v424
  %426 = vmatmul.f32.gmra.mxu0 %v219
  %v427 = vpop.f32.mrf.mxu0
  %v428 = vadd.f32 0.0, %v427
  %429 = vmatmul.f32.gmra.mxu0 %v222
  %v430 = vpop.f32.mrf.mxu0
  %v431 = vadd.f32 0.0, %v430
  %432 = vmatmul.f32.gmra.mxu0 %v225
  %v433 = vpop.f32.mrf.mxu0
  %v434 = vadd.f32 0.0, %v433
  %435 = vmatmul.f32.gmra.mxu0 %v228
  %v436 = vpop.f32.mrf.mxu0
  %v437 = vadd.f32 0.0, %v436
  %438 = vmatmul.f32.gmra.mxu0 %v231
  %v439 = vpop.f32.mrf.mxu0
  %v440 = vadd.f32 0.0, %v439
  %441 = vmatmul.f32.gmra.mxu0 %v234
  %v442 = vpop.f32.mrf.mxu0
  %v443 = vadd.f32 0.0, %v442
  %444 = vmatmul.f32.gmra.mxu0 %v237
  %v445 = vpop.f32.mrf.mxu0
  %v446 = vadd.f32 0.0, %v445
  %447 = vmatmul.f32.gmra.mxu0 %v240
  %v448 = vpop.f32.mrf.mxu0
  %v449 = vadd.f32 0.0, %v448
  %450 = vmatmul.f32.gmra.mxu0 %v243
  %v451 = vpop.f32.mrf.mxu0
  %v452 = vadd.f32 0.0, %v451
  %453 = vmatmul.f32.gmra.mxu0 %v246
  %v454 = vpop.f32.mrf.mxu0
  %v455 = vadd.f32 0.0, %v454
  %456 = vmatmul.f32.gmra.mxu0 %v249
  %v457 = vpop.f32.mrf.mxu0
  %v458 = vadd.f32 0.0, %v457
  %459 = vmatmul.f32.gmra.mxu0 %v252
  %v460 = vpop.f32.mrf.mxu0
  %v461 = vadd.f32 0.0, %v460
  %462 = vmatmul.f32.gmra.mxu0 %v255
  %v463 = vpop.f32.mrf.mxu0
  %v464 = vadd.f32 0.0, %v463
  %465 = vmatmul.f32.gmra.mxu0 %v258
  %v466 = vpop.f32.mrf.mxu0
  %v467 = vadd.f32 0.0, %v466
  %468 = vmatmul.f32.gmra.mxu0 %v261
  %v469 = vpop.f32.mrf.mxu0
  %v470 = vadd.f32 0.0, %v469
  %471 = vmatmul.f32.gmra.mxu0 %v264
  %v472 = vpop.f32.mrf.mxu0
  %v473 = vadd.f32 0.0, %v472
  %474 = vmatmul.f32.gmra.mxu0 %v267
  %v475 = vpop.f32.mrf.mxu0
  %v476 = vadd.f32 0.0, %v475
  %477 = vmatmul.f32.gmra.mxu0 %v270
  %v478 = vpop.f32.mrf.mxu0
  %v479 = vadd.f32 0.0, %v478
  %480 = vmatmul.f32.gmra.mxu0 %v273
  %v481 = vpop.f32.mrf.mxu0
  %v482 = vadd.f32 0.0, %v481
  %483 = vmatmul.f32.gmra.mxu0 %v276
  %v484 = vpop.f32.mrf.mxu0
  %v485 = vadd.f32 0.0, %v484
  %486 = vmatmul.f32.gmra.mxu0 %v279
  %v487 = vpop.f32.mrf.mxu0
  %v488 = vadd.f32 0.0, %v487
  %489 = vmatmul.f32.gmra.mxu0 %v282
  %v490 = vpop.f32.mrf.mxu0
  %v491 = vadd.f32 0.0, %v490
  %492 = vmatmul.f32.gmra.mxu0 %v285
  %v493 = vpop.f32.mrf.mxu0
  %v494 = vadd.f32 0.0, %v493
  %495 = vdwg.mxu0
  %v496 = vld [vmem:[%s2] sm:$0x1]
  %v498 = vperm.slane %v496, 0
  %v500 = vmul.f32 %v305, %v498
  %v501 = vmul.f32 %v308, %v498
  %v502 = vmul.f32 %v311, %v498
  %v503 = vmul.f32 %v314, %v498
  %v504 = vmul.f32 %v317, %v498
  %v505 = vmul.f32 %v320, %v498
  %v506 = vmul.f32 %v323, %v498
  %v507 = vmul.f32 %v326, %v498
  %v508 = vmul.f32 %v329, %v498
  %v509 = vmul.f32 %v332, %v498
  %v510 = vmul.f32 %v335, %v498
  %v511 = vmul.f32 %v338, %v498
  %v512 = vmul.f32 %v341, %v498
  %v513 = vmul.f32 %v344, %v498
  %v514 = vmul.f32 %v347, %v498
  %v515 = vmul.f32 %v350, %v498
  %v516 = vmul.f32 %v353, %v498
  %v517 = vmul.f32 %v356, %v498
  %v518 = vmul.f32 %v359, %v498
  %v519 = vmul.f32 %v362, %v498
  %v520 = vmul.f32 %v365, %v498
  %v521 = vmul.f32 %v368, %v498
  %v522 = vmul.f32 %v371, %v498
  %v523 = vmul.f32 %v374, %v498
  %v524 = vmul.f32 %v377, %v498
  %v525 = vmul.f32 %v380, %v498
  %v526 = vmul.f32 %v383, %v498
  %v527 = vmul.f32 %v386, %v498
  %v528 = vmul.f32 %v389, %v498
  %v529 = vmul.f32 %v392, %v498
  %v530 = vmul.f32 %v395, %v498
  %v531 = vmul.f32 %v398, %v498
  %v532 = vmul.f32 %v401, %v498
  %v533 = vmul.f32 %v404, %v498
  %v534 = vmul.f32 %v407, %v498
  %v535 = vmul.f32 %v410, %v498
  %v536 = vmul.f32 %v413, %v498
  %v537 = vmul.f32 %v416, %v498
  %v538 = vmul.f32 %v419, %v498
  %v539 = vmul.f32 %v422, %v498
  %v540 = vmul.f32 %v425, %v498
  %v541 = vmul.f32 %v428, %v498
  %v542 = vmul.f32 %v431, %v498
  %v543 = vmul.f32 %v434, %v498
  %v544 = vmul.f32 %v437, %v498
  %v545 = vmul.f32 %v440, %v498
  %v546 = vmul.f32 %v443, %v498
  %v547 = vmul.f32 %v446, %v498
  %v548 = vmul.f32 %v449, %v498
  %v549 = vmul.f32 %v452, %v498
  %v550 = vmul.f32 %v455, %v498
  %v551 = vmul.f32 %v458, %v498
  %v552 = vmul.f32 %v461, %v498
  %v553 = vmul.f32 %v464, %v498
  %v554 = vmul.f32 %v467, %v498
  %v555 = vmul.f32 %v470, %v498
  %v556 = vmul.f32 %v473, %v498
  %v557 = vmul.f32 %v476, %v498
  %v558 = vmul.f32 %v479, %v498
  %v559 = vmul.f32 %v482, %v498
  %v560 = vmul.f32 %v485, %v498
  %v561 = vmul.f32 %v488, %v498
  %v562 = vmul.f32 %v491, %v498
  %v563 = vmul.f32 %v494, %v498
  %v564 = vld [vmem:[%s3] sm:$0x1]
  %v566 = vperm.slane %v564, 0
  %v568 = vadd.f32 %v500, %v566
  %v569 = vadd.f32 %v501, %v566
  %v570 = vadd.f32 %v502, %v566
  %v571 = vadd.f32 %v503, %v566
  %v572 = vadd.f32 %v504, %v566
  %v573 = vadd.f32 %v505, %v566
  %v574 = vadd.f32 %v506, %v566
  %v575 = vadd.f32 %v507, %v566
  %v576 = vadd.f32 %v508, %v566
  %v577 = vadd.f32 %v509, %v566
  %v578 = vadd.f32 %v510, %v566
  %v579 = vadd.f32 %v511, %v566
  %v580 = vadd.f32 %v512, %v566
  %v581 = vadd.f32 %v513, %v566
  %v582 = vadd.f32 %v514, %v566
  %v583 = vadd.f32 %v515, %v566
  %v584 = vadd.f32 %v516, %v566
  %v585 = vadd.f32 %v517, %v566
  %v586 = vadd.f32 %v518, %v566
  %v587 = vadd.f32 %v519, %v566
  %v588 = vadd.f32 %v520, %v566
  %v589 = vadd.f32 %v521, %v566
  %v590 = vadd.f32 %v522, %v566
  %v591 = vadd.f32 %v523, %v566
  %v592 = vadd.f32 %v524, %v566
  %v593 = vadd.f32 %v525, %v566
  %v594 = vadd.f32 %v526, %v566
  %v595 = vadd.f32 %v527, %v566
  %v596 = vadd.f32 %v528, %v566
  %v597 = vadd.f32 %v529, %v566
  %v598 = vadd.f32 %v530, %v566
  %v599 = vadd.f32 %v531, %v566
  %v600 = vadd.f32 %v532, %v566
  %v601 = vadd.f32 %v533, %v566
  %v602 = vadd.f32 %v534, %v566
  %v603 = vadd.f32 %v535, %v566
  %v604 = vadd.f32 %v536, %v566
  %v605 = vadd.f32 %v537, %v566
  %v606 = vadd.f32 %v538, %v566
  %v607 = vadd.f32 %v539, %v566
  %v608 = vadd.f32 %v540, %v566
  %v609 = vadd.f32 %v541, %v566
  %v610 = vadd.f32 %v542, %v566
  %v611 = vadd.f32 %v543, %v566
  %v612 = vadd.f32 %v544, %v566
  %v613 = vadd.f32 %v545, %v566
  %v614 = vadd.f32 %v546, %v566
  %v615 = vadd.f32 %v547, %v566
  %v616 = vadd.f32 %v548, %v566
  %v617 = vadd.f32 %v549, %v566
  %v618 = vadd.f32 %v550, %v566
  %v619 = vadd.f32 %v551, %v566
  %v620 = vadd.f32 %v552, %v566
  %v621 = vadd.f32 %v553, %v566
  %v622 = vadd.f32 %v554, %v566
  %v623 = vadd.f32 %v555, %v566
  %v624 = vadd.f32 %v556, %v566
  %v625 = vadd.f32 %v557, %v566
  %v626 = vadd.f32 %v558, %v566
  %v627 = vadd.f32 %v559, %v566
  %v628 = vadd.f32 %v560, %v566
  %v629 = vadd.f32 %v561, %v566
  %v630 = vadd.f32 %v562, %v566
  %v631 = vadd.f32 %v563, %v566
  %v632 = vxor.u32 %v568, 2147483648
  %v633 = vxor.u32 %v569, 2147483648
  %v634 = vxor.u32 %v570, 2147483648
  %v635 = vxor.u32 %v571, 2147483648
  %v636 = vxor.u32 %v572, 2147483648
  %v637 = vxor.u32 %v573, 2147483648
  %v638 = vxor.u32 %v574, 2147483648
  %v639 = vxor.u32 %v575, 2147483648
  %v640 = vxor.u32 %v576, 2147483648
  %v641 = vxor.u32 %v577, 2147483648
  %v642 = vxor.u32 %v578, 2147483648
  %v643 = vxor.u32 %v579, 2147483648
  %v644 = vxor.u32 %v580, 2147483648
  %v645 = vxor.u32 %v581, 2147483648
  %v646 = vxor.u32 %v582, 2147483648
  %v647 = vxor.u32 %v583, 2147483648
  %v648 = vxor.u32 %v584, 2147483648
  %v649 = vxor.u32 %v585, 2147483648
  %v650 = vxor.u32 %v586, 2147483648
  %v651 = vxor.u32 %v587, 2147483648
  %v652 = vxor.u32 %v588, 2147483648
  %v653 = vxor.u32 %v589, 2147483648
  %v654 = vxor.u32 %v590, 2147483648
  %v655 = vxor.u32 %v591, 2147483648
  %v656 = vxor.u32 %v592, 2147483648
  %v657 = vxor.u32 %v593, 2147483648
  %v658 = vxor.u32 %v594, 2147483648
  %v659 = vxor.u32 %v595, 2147483648
  %v660 = vxor.u32 %v596, 2147483648
  %v661 = vxor.u32 %v597, 2147483648
  %v662 = vxor.u32 %v598, 2147483648
  %v663 = vxor.u32 %v599, 2147483648
  %v664 = vxor.u32 %v600, 2147483648
  %v665 = vxor.u32 %v601, 2147483648
  %v666 = vxor.u32 %v602, 2147483648
  %v667 = vxor.u32 %v603, 2147483648
  %v668 = vxor.u32 %v604, 2147483648
  %v669 = vxor.u32 %v605, 2147483648
  %v670 = vxor.u32 %v606, 2147483648
  %v671 = vxor.u32 %v607, 2147483648
  %v672 = vxor.u32 %v608, 2147483648
  %v673 = vxor.u32 %v609, 2147483648
  %v674 = vxor.u32 %v610, 2147483648
  %v675 = vxor.u32 %v611, 2147483648
  %v676 = vxor.u32 %v612, 2147483648
  %v677 = vxor.u32 %v613, 2147483648
  %v678 = vxor.u32 %v614, 2147483648
  %v679 = vxor.u32 %v615, 2147483648
  %v680 = vxor.u32 %v616, 2147483648
  %v681 = vxor.u32 %v617, 2147483648
  %v682 = vxor.u32 %v618, 2147483648
  %v683 = vxor.u32 %v619, 2147483648
  %v684 = vxor.u32 %v620, 2147483648
  %v685 = vxor.u32 %v621, 2147483648
  %v686 = vxor.u32 %v622, 2147483648
  %v687 = vxor.u32 %v623, 2147483648
  %v688 = vxor.u32 %v624, 2147483648
  %v689 = vxor.u32 %v625, 2147483648
  %v690 = vxor.u32 %v626, 2147483648
  %v691 = vxor.u32 %v627, 2147483648
  %v692 = vxor.u32 %v628, 2147483648
  %v693 = vxor.u32 %v629, 2147483648
  %v694 = vxor.u32 %v630, 2147483648
  %v695 = vxor.u32 %v631, 2147483648
  %v696 = vmul.f32 %v632, 1.442695
  %v697 = vpow.pop %v696
  %v698 = vmul.f32 %v633, 1.442695
  %v699 = vpow.pop %v698
  %v700 = vmul.f32 %v634, 1.442695
  %v701 = vpow.pop %v700
  %v702 = vmul.f32 %v635, 1.442695
  %v703 = vpow.pop %v702
  %v704 = vmul.f32 %v636, 1.442695
  %v705 = vpow.pop %v704
  %v706 = vmul.f32 %v637, 1.442695
  %v707 = vpow.pop %v706
  %v708 = vmul.f32 %v638, 1.442695
  %v709 = vpow.pop %v708
  %v710 = vmul.f32 %v639, 1.442695
  %v711 = vpow.pop %v710
  %v712 = vmul.f32 %v640, 1.442695
  %v713 = vpow.pop %v712
  %v714 = vmul.f32 %v641, 1.442695
  %v715 = vpow.pop %v714
  %v716 = vmul.f32 %v642, 1.442695
  %v717 = vpow.pop %v716
  %v718 = vmul.f32 %v643, 1.442695
  %v719 = vpow.pop %v718
  %v720 = vmul.f32 %v644, 1.442695
  %v721 = vpow.pop %v720
  %v722 = vmul.f32 %v645, 1.442695
  %v723 = vpow.pop %v722
  %v724 = vmul.f32 %v646, 1.442695
  %v725 = vpow.pop %v724
  %v726 = vmul.f32 %v647, 1.442695
  %v727 = vpow.pop %v726
  %v728 = vmul.f32 %v648, 1.442695
  %v729 = vpow.pop %v728
  %v730 = vmul.f32 %v649, 1.442695
  %v731 = vpow.pop %v730
  %v732 = vmul.f32 %v650, 1.442695
  %v733 = vpow.pop %v732
  %v734 = vmul.f32 %v651, 1.442695
  %v735 = vpow.pop %v734
  %v736 = vmul.f32 %v652, 1.442695
  %v737 = vpow.pop %v736
  %v738 = vmul.f32 %v653, 1.442695
  %v739 = vpow.pop %v738
  %v740 = vmul.f32 %v654, 1.442695
  %v741 = vpow.pop %v740
  %v742 = vmul.f32 %v655, 1.442695
  %v743 = vpow.pop %v742
  %v744 = vmul.f32 %v656, 1.442695
  %v745 = vpow.pop %v744
  %v746 = vmul.f32 %v657, 1.442695
  %v747 = vpow.pop %v746
  %v748 = vmul.f32 %v658, 1.442695
  %v749 = vpow.pop %v748
  %v750 = vmul.f32 %v659, 1.442695
  %v751 = vpow.pop %v750
  %v752 = vmul.f32 %v660, 1.442695
  %v753 = vpow.pop %v752
  %v754 = vmul.f32 %v661, 1.442695
  %v755 = vpow.pop %v754
  %v756 = vmul.f32 %v662, 1.442695
  %v757 = vpow.pop %v756
  %v758 = vmul.f32 %v663, 1.442695
  %v759 = vpow.pop %v758
  %v760 = vmul.f32 %v664, 1.442695
  %v761 = vpow.pop %v760
  %v762 = vmul.f32 %v665, 1.442695
  %v763 = vpow.pop %v762
  %v764 = vmul.f32 %v666, 1.442695
  %v765 = vpow.pop %v764
  %v766 = vmul.f32 %v667, 1.442695
  %v767 = vpow.pop %v766
  %v768 = vmul.f32 %v668, 1.442695
  %v769 = vpow.pop %v768
  %v770 = vmul.f32 %v669, 1.442695
  %v771 = vpow.pop %v770
  %v772 = vmul.f32 %v670, 1.442695
  %v773 = vpow.pop %v772
  %v774 = vmul.f32 %v671, 1.442695
  %v775 = vpow.pop %v774
  %v776 = vmul.f32 %v672, 1.442695
  %v777 = vpow.pop %v776
  %v778 = vmul.f32 %v673, 1.442695
  %v779 = vpow.pop %v778
  %v780 = vmul.f32 %v674, 1.442695
  %v781 = vpow.pop %v780
  %v782 = vmul.f32 %v675, 1.442695
  %v783 = vpow.pop %v782
  %v784 = vmul.f32 %v676, 1.442695
  %v785 = vpow.pop %v784
  %v786 = vmul.f32 %v677, 1.442695
  %v787 = vpow.pop %v786
  %v788 = vmul.f32 %v678, 1.442695
  %v789 = vpow.pop %v788
  %v790 = vmul.f32 %v679, 1.442695
  %v791 = vpow.pop %v790
  %v792 = vmul.f32 %v680, 1.442695
  %v793 = vpow.pop %v792
  %v794 = vmul.f32 %v681, 1.442695
  %v795 = vpow.pop %v794
  %v796 = vmul.f32 %v682, 1.442695
  %v797 = vpow.pop %v796
  %v798 = vmul.f32 %v683, 1.442695
  %v799 = vpow.pop %v798
  %v800 = vmul.f32 %v684, 1.442695
  %v801 = vpow.pop %v800
  %v802 = vmul.f32 %v685, 1.442695
  %v803 = vpow.pop %v802
  %v804 = vmul.f32 %v686, 1.442695
  %v805 = vpow.pop %v804
  %v806 = vmul.f32 %v687, 1.442695
  %v807 = vpow.pop %v806
  %v808 = vmul.f32 %v688, 1.442695
  %v809 = vpow.pop %v808
  %v810 = vmul.f32 %v689, 1.442695
  %v811 = vpow.pop %v810
  %v812 = vmul.f32 %v690, 1.442695
  %v813 = vpow.pop %v812
  %v814 = vmul.f32 %v691, 1.442695
  %v815 = vpow.pop %v814
  %v816 = vmul.f32 %v692, 1.442695
  %v817 = vpow.pop %v816
  %v818 = vmul.f32 %v693, 1.442695
  %v819 = vpow.pop %v818
  %v820 = vmul.f32 %v694, 1.442695
  %v821 = vpow.pop %v820
  %v822 = vmul.f32 %v695, 1.442695
  %v823 = vpow.pop %v822
  %v824 = vadd.f32 %v697, 1.0
  %v825 = vadd.f32 %v699, 1.0
  %v826 = vadd.f32 %v701, 1.0
  %v827 = vadd.f32 %v703, 1.0
  %v828 = vadd.f32 %v705, 1.0
  %v829 = vadd.f32 %v707, 1.0
  %v830 = vadd.f32 %v709, 1.0
  %v831 = vadd.f32 %v711, 1.0
  %v832 = vadd.f32 %v713, 1.0
  %v833 = vadd.f32 %v715, 1.0
  %v834 = vadd.f32 %v717, 1.0
  %v835 = vadd.f32 %v719, 1.0
  %v836 = vadd.f32 %v721, 1.0
  %v837 = vadd.f32 %v723, 1.0
  %v838 = vadd.f32 %v725, 1.0
  %v839 = vadd.f32 %v727, 1.0
  %v840 = vadd.f32 %v729, 1.0
  %v841 = vadd.f32 %v731, 1.0
  %v842 = vadd.f32 %v733, 1.0
  %v843 = vadd.f32 %v735, 1.0
  %v844 = vadd.f32 %v737, 1.0
  %v845 = vadd.f32 %v739, 1.0
  %v846 = vadd.f32 %v741, 1.0
  %v847 = vadd.f32 %v743, 1.0
  %v848 = vadd.f32 %v745, 1.0
  %v849 = vadd.f32 %v747, 1.0
  %v850 = vadd.f32 %v749, 1.0
  %v851 = vadd.f32 %v751, 1.0
  %v852 = vadd.f32 %v753, 1.0
  %v853 = vadd.f32 %v755, 1.0
  %v854 = vadd.f32 %v757, 1.0
  %v855 = vadd.f32 %v759, 1.0
  %v856 = vadd.f32 %v761, 1.0
  %v857 = vadd.f32 %v763, 1.0
  %v858 = vadd.f32 %v765, 1.0
  %v859 = vadd.f32 %v767, 1.0
  %v860 = vadd.f32 %v769, 1.0
  %v861 = vadd.f32 %v771, 1.0
  %v862 = vadd.f32 %v773, 1.0
  %v863 = vadd.f32 %v775, 1.0
  %v864 = vadd.f32 %v777, 1.0
  %v865 = vadd.f32 %v779, 1.0
  %v866 = vadd.f32 %v781, 1.0
  %v867 = vadd.f32 %v783, 1.0
  %v868 = vadd.f32 %v785, 1.0
  %v869 = vadd.f32 %v787, 1.0
  %v870 = vadd.f32 %v789, 1.0
  %v871 = vadd.f32 %v791, 1.0
  %v872 = vadd.f32 %v793, 1.0
  %v873 = vadd.f32 %v795, 1.0
  %v874 = vadd.f32 %v797, 1.0
  %v875 = vadd.f32 %v799, 1.0
  %v876 = vadd.f32 %v801, 1.0
  %v877 = vadd.f32 %v803, 1.0
  %v878 = vadd.f32 %v805, 1.0
  %v879 = vadd.f32 %v807, 1.0
  %v880 = vadd.f32 %v809, 1.0
  %v881 = vadd.f32 %v811, 1.0
  %v882 = vadd.f32 %v813, 1.0
  %v883 = vadd.f32 %v815, 1.0
  %v884 = vadd.f32 %v817, 1.0
  %v885 = vadd.f32 %v819, 1.0
  %v886 = vadd.f32 %v821, 1.0
  %v887 = vadd.f32 %v823, 1.0
  %v888 = vrcp.pop %v824
  %v889 = vmul.f32 %v824, %v888
  %v890 = vsub.f32 1.0, %v889
  %v891 = vmul.f32 %v888, %v890
  %v892 = vadd.f32 %v888, %v891
  %vm893 = vweird.f32 %v824
  %vm894 = vweird.f32 %v888
  %vm895 = vmor %vm893, %vm894
  %v896 = vsel %vm895, %v888, %v892
  %v897 = vand.u32 2147483647, %v824
  %vm898 = vcmp.eq.f32.partialorder %v897, 8.507059e+37
  %v899 = vand.u32 %v824, 2147483648
  %v900 = vor.u32 1.1754944e-38, %v899
  %v901 = vsel %vm898, %v900, %v896
  %v902 = vmul.f32 1.0, %v901
  %v903 = vrcp.pop %v825
  %v904 = vmul.f32 %v825, %v903
  %v905 = vsub.f32 1.0, %v904
  %v906 = vmul.f32 %v903, %v905
  %v907 = vadd.f32 %v903, %v906
  %vm908 = vweird.f32 %v825
  %vm909 = vweird.f32 %v903
  %vm910 = vmor %vm908, %vm909
  %v911 = vsel %vm910, %v903, %v907
  %v912 = vand.u32 2147483647, %v825
  %vm913 = vcmp.eq.f32.partialorder %v912, 8.507059e+37
  %v914 = vand.u32 %v825, 2147483648
  %v915 = vor.u32 1.1754944e-38, %v914
  %v916 = vsel %vm913, %v915, %v911
  %v917 = vmul.f32 1.0, %v916
  %v918 = vrcp.pop %v826
  %v919 = vmul.f32 %v826, %v918
  %v920 = vsub.f32 1.0, %v919
  %v921 = vmul.f32 %v918, %v920
  %v922 = vadd.f32 %v918, %v921
  %vm923 = vweird.f32 %v826
  %vm924 = vweird.f32 %v918
  %vm925 = vmor %vm923, %vm924
  %v926 = vsel %vm925, %v918, %v922
  %v927 = vand.u32 2147483647, %v826
  %vm928 = vcmp.eq.f32.partialorder %v927, 8.507059e+37
  %v929 = vand.u32 %v826, 2147483648
  %v930 = vor.u32 1.1754944e-38, %v929
  %v931 = vsel %vm928, %v930, %v926
  %v932 = vmul.f32 1.0, %v931
  %v933 = vrcp.pop %v827
  %v934 = vmul.f32 %v827, %v933
  %v935 = vsub.f32 1.0, %v934
  %v936 = vmul.f32 %v933, %v935
  %v937 = vadd.f32 %v933, %v936
  %vm938 = vweird.f32 %v827
  %vm939 = vweird.f32 %v933
  %vm940 = vmor %vm938, %vm939
  %v941 = vsel %vm940, %v933, %v937
  %v942 = vand.u32 2147483647, %v827
  %vm943 = vcmp.eq.f32.partialorder %v942, 8.507059e+37
  %v944 = vand.u32 %v827, 2147483648
  %v945 = vor.u32 1.1754944e-38, %v944
  %v946 = vsel %vm943, %v945, %v941
  %v947 = vmul.f32 1.0, %v946
  %v948 = vrcp.pop %v828
  %v949 = vmul.f32 %v828, %v948
  %v950 = vsub.f32 1.0, %v949
  %v951 = vmul.f32 %v948, %v950
  %v952 = vadd.f32 %v948, %v951
  %vm953 = vweird.f32 %v828
  %vm954 = vweird.f32 %v948
  %vm955 = vmor %vm953, %vm954
  %v956 = vsel %vm955, %v948, %v952
  %v957 = vand.u32 2147483647, %v828
  %vm958 = vcmp.eq.f32.partialorder %v957, 8.507059e+37
  %v959 = vand.u32 %v828, 2147483648
  %v960 = vor.u32 1.1754944e-38, %v959
  %v961 = vsel %vm958, %v960, %v956
  %v962 = vmul.f32 1.0, %v961
  %v963 = vrcp.pop %v829
  %v964 = vmul.f32 %v829, %v963
  %v965 = vsub.f32 1.0, %v964
  %v966 = vmul.f32 %v963, %v965
  %v967 = vadd.f32 %v963, %v966
  %vm968 = vweird.f32 %v829
  %vm969 = vweird.f32 %v963
  %vm970 = vmor %vm968, %vm969
  %v971 = vsel %vm970, %v963, %v967
  %v972 = vand.u32 2147483647, %v829
  %vm973 = vcmp.eq.f32.partialorder %v972, 8.507059e+37
  %v974 = vand.u32 %v829, 2147483648
  %v975 = vor.u32 1.1754944e-38, %v974
  %v976 = vsel %vm973, %v975, %v971
  %v977 = vmul.f32 1.0, %v976
  %v978 = vrcp.pop %v830
  %v979 = vmul.f32 %v830, %v978
  %v980 = vsub.f32 1.0, %v979
  %v981 = vmul.f32 %v978, %v980
  %v982 = vadd.f32 %v978, %v981
  %vm983 = vweird.f32 %v830
  %vm984 = vweird.f32 %v978
  %vm985 = vmor %vm983, %vm984
  %v986 = vsel %vm985, %v978, %v982
  %v987 = vand.u32 2147483647, %v830
  %vm988 = vcmp.eq.f32.partialorder %v987, 8.507059e+37
  %v989 = vand.u32 %v830, 2147483648
  %v990 = vor.u32 1.1754944e-38, %v989
  %v991 = vsel %vm988, %v990, %v986
  %v992 = vmul.f32 1.0, %v991
  %v993 = vrcp.pop %v831
  %v994 = vmul.f32 %v831, %v993
  %v995 = vsub.f32 1.0, %v994
  %v996 = vmul.f32 %v993, %v995
  %v997 = vadd.f32 %v993, %v996
  %vm998 = vweird.f32 %v831
  %vm999 = vweird.f32 %v993
  %vm1000 = vmor %vm998, %vm999
  %v1001 = vsel %vm1000, %v993, %v997
  %v1002 = vand.u32 2147483647, %v831
  %vm1003 = vcmp.eq.f32.partialorder %v1002, 8.507059e+37
  %v1004 = vand.u32 %v831, 2147483648
  %v1005 = vor.u32 1.1754944e-38, %v1004
  %v1006 = vsel %vm1003, %v1005, %v1001
  %v1007 = vmul.f32 1.0, %v1006
  %v1008 = vrcp.pop %v832
  %v1009 = vmul.f32 %v832, %v1008
  %v1010 = vsub.f32 1.0, %v1009
  %v1011 = vmul.f32 %v1008, %v1010
  %v1012 = vadd.f32 %v1008, %v1011
  %vm1013 = vweird.f32 %v832
  %vm1014 = vweird.f32 %v1008
  %vm1015 = vmor %vm1013, %vm1014
  %v1016 = vsel %vm1015, %v1008, %v1012
  %v1017 = vand.u32 2147483647, %v832
  %vm1018 = vcmp.eq.f32.partialorder %v1017, 8.507059e+37
  %v1019 = vand.u32 %v832, 2147483648
  %v1020 = vor.u32 1.1754944e-38, %v1019
  %v1021 = vsel %vm1018, %v1020, %v1016
  %v1022 = vmul.f32 1.0, %v1021
  %v1023 = vrcp.pop %v833
  %v1024 = vmul.f32 %v833, %v1023
  %v1025 = vsub.f32 1.0, %v1024
  %v1026 = vmul.f32 %v1023, %v1025
  %v1027 = vadd.f32 %v1023, %v1026
  %vm1028 = vweird.f32 %v833
  %vm1029 = vweird.f32 %v1023
  %vm1030 = vmor %vm1028, %vm1029
  %v1031 = vsel %vm1030, %v1023, %v1027
  %v1032 = vand.u32 2147483647, %v833
  %vm1033 = vcmp.eq.f32.partialorder %v1032, 8.507059e+37
  %v1034 = vand.u32 %v833, 2147483648
  %v1035 = vor.u32 1.1754944e-38, %v1034
  %v1036 = vsel %vm1033, %v1035, %v1031
  %v1037 = vmul.f32 1.0, %v1036
  %v1038 = vrcp.pop %v834
  %v1039 = vmul.f32 %v834, %v1038
  %v1040 = vsub.f32 1.0, %v1039
  %v1041 = vmul.f32 %v1038, %v1040
  %v1042 = vadd.f32 %v1038, %v1041
  %vm1043 = vweird.f32 %v834
  %vm1044 = vweird.f32 %v1038
  %vm1045 = vmor %vm1043, %vm1044
  %v1046 = vsel %vm1045, %v1038, %v1042
  %v1047 = vand.u32 2147483647, %v834
  %vm1048 = vcmp.eq.f32.partialorder %v1047, 8.507059e+37
  %v1049 = vand.u32 %v834, 2147483648
  %v1050 = vor.u32 1.1754944e-38, %v1049
  %v1051 = vsel %vm1048, %v1050, %v1046
  %v1052 = vmul.f32 1.0, %v1051
  %v1053 = vrcp.pop %v835
  %v1054 = vmul.f32 %v835, %v1053
  %v1055 = vsub.f32 1.0, %v1054
  %v1056 = vmul.f32 %v1053, %v1055
  %v1057 = vadd.f32 %v1053, %v1056
  %vm1058 = vweird.f32 %v835
  %vm1059 = vweird.f32 %v1053
  %vm1060 = vmor %vm1058, %vm1059
  %v1061 = vsel %vm1060, %v1053, %v1057
  %v1062 = vand.u32 2147483647, %v835
  %vm1063 = vcmp.eq.f32.partialorder %v1062, 8.507059e+37
  %v1064 = vand.u32 %v835, 2147483648
  %v1065 = vor.u32 1.1754944e-38, %v1064
  %v1066 = vsel %vm1063, %v1065, %v1061
  %v1067 = vmul.f32 1.0, %v1066
  %v1068 = vrcp.pop %v836
  %v1069 = vmul.f32 %v836, %v1068
  %v1070 = vsub.f32 1.0, %v1069
  %v1071 = vmul.f32 %v1068, %v1070
  %v1072 = vadd.f32 %v1068, %v1071
  %vm1073 = vweird.f32 %v836
  %vm1074 = vweird.f32 %v1068
  %vm1075 = vmor %vm1073, %vm1074
  %v1076 = vsel %vm1075, %v1068, %v1072
  %v1077 = vand.u32 2147483647, %v836
  %vm1078 = vcmp.eq.f32.partialorder %v1077, 8.507059e+37
  %v1079 = vand.u32 %v836, 2147483648
  %v1080 = vor.u32 1.1754944e-38, %v1079
  %v1081 = vsel %vm1078, %v1080, %v1076
  %v1082 = vmul.f32 1.0, %v1081
  %v1083 = vrcp.pop %v837
  %v1084 = vmul.f32 %v837, %v1083
  %v1085 = vsub.f32 1.0, %v1084
  %v1086 = vmul.f32 %v1083, %v1085
  %v1087 = vadd.f32 %v1083, %v1086
  %vm1088 = vweird.f32 %v837
  %vm1089 = vweird.f32 %v1083
  %vm1090 = vmor %vm1088, %vm1089
  %v1091 = vsel %vm1090, %v1083, %v1087
  %v1092 = vand.u32 2147483647, %v837
  %vm1093 = vcmp.eq.f32.partialorder %v1092, 8.507059e+37
  %v1094 = vand.u32 %v837, 2147483648
  %v1095 = vor.u32 1.1754944e-38, %v1094
  %v1096 = vsel %vm1093, %v1095, %v1091
  %v1097 = vmul.f32 1.0, %v1096
  %v1098 = vrcp.pop %v838
  %v1099 = vmul.f32 %v838, %v1098
  %v1100 = vsub.f32 1.0, %v1099
  %v1101 = vmul.f32 %v1098, %v1100
  %v1102 = vadd.f32 %v1098, %v1101
  %vm1103 = vweird.f32 %v838
  %vm1104 = vweird.f32 %v1098
  %vm1105 = vmor %vm1103, %vm1104
  %v1106 = vsel %vm1105, %v1098, %v1102
  %v1107 = vand.u32 2147483647, %v838
  %vm1108 = vcmp.eq.f32.partialorder %v1107, 8.507059e+37
  %v1109 = vand.u32 %v838, 2147483648
  %v1110 = vor.u32 1.1754944e-38, %v1109
  %v1111 = vsel %vm1108, %v1110, %v1106
  %v1112 = vmul.f32 1.0, %v1111
  %v1113 = vrcp.pop %v839
  %v1114 = vmul.f32 %v839, %v1113
  %v1115 = vsub.f32 1.0, %v1114
  %v1116 = vmul.f32 %v1113, %v1115
  %v1117 = vadd.f32 %v1113, %v1116
  %vm1118 = vweird.f32 %v839
  %vm1119 = vweird.f32 %v1113
  %vm1120 = vmor %vm1118, %vm1119
  %v1121 = vsel %vm1120, %v1113, %v1117
  %v1122 = vand.u32 2147483647, %v839
  %vm1123 = vcmp.eq.f32.partialorder %v1122, 8.507059e+37
  %v1124 = vand.u32 %v839, 2147483648
  %v1125 = vor.u32 1.1754944e-38, %v1124
  %v1126 = vsel %vm1123, %v1125, %v1121
  %v1127 = vmul.f32 1.0, %v1126
  %v1128 = vrcp.pop %v840
  %v1129 = vmul.f32 %v840, %v1128
  %v1130 = vsub.f32 1.0, %v1129
  %v1131 = vmul.f32 %v1128, %v1130
  %v1132 = vadd.f32 %v1128, %v1131
  %vm1133 = vweird.f32 %v840
  %vm1134 = vweird.f32 %v1128
  %vm1135 = vmor %vm1133, %vm1134
  %v1136 = vsel %vm1135, %v1128, %v1132
  %v1137 = vand.u32 2147483647, %v840
  %vm1138 = vcmp.eq.f32.partialorder %v1137, 8.507059e+37
  %v1139 = vand.u32 %v840, 2147483648
  %v1140 = vor.u32 1.1754944e-38, %v1139
  %v1141 = vsel %vm1138, %v1140, %v1136
  %v1142 = vmul.f32 1.0, %v1141
  %v1143 = vrcp.pop %v841
  %v1144 = vmul.f32 %v841, %v1143
  %v1145 = vsub.f32 1.0, %v1144
  %v1146 = vmul.f32 %v1143, %v1145
  %v1147 = vadd.f32 %v1143, %v1146
  %vm1148 = vweird.f32 %v841
  %vm1149 = vweird.f32 %v1143
  %vm1150 = vmor %vm1148, %vm1149
  %v1151 = vsel %vm1150, %v1143, %v1147
  %v1152 = vand.u32 2147483647, %v841
  %vm1153 = vcmp.eq.f32.partialorder %v1152, 8.507059e+37
  %v1154 = vand.u32 %v841, 2147483648
  %v1155 = vor.u32 1.1754944e-38, %v1154
  %v1156 = vsel %vm1153, %v1155, %v1151
  %v1157 = vmul.f32 1.0, %v1156
  %v1158 = vrcp.pop %v842
  %v1159 = vmul.f32 %v842, %v1158
  %v1160 = vsub.f32 1.0, %v1159
  %v1161 = vmul.f32 %v1158, %v1160
  %v1162 = vadd.f32 %v1158, %v1161
  %vm1163 = vweird.f32 %v842
  %vm1164 = vweird.f32 %v1158
  %vm1165 = vmor %vm1163, %vm1164
  %v1166 = vsel %vm1165, %v1158, %v1162
  %v1167 = vand.u32 2147483647, %v842
  %vm1168 = vcmp.eq.f32.partialorder %v1167, 8.507059e+37
  %v1169 = vand.u32 %v842, 2147483648
  %v1170 = vor.u32 1.1754944e-38, %v1169
  %v1171 = vsel %vm1168, %v1170, %v1166
  %v1172 = vmul.f32 1.0, %v1171
  %v1173 = vrcp.pop %v843
  %v1174 = vmul.f32 %v843, %v1173
  %v1175 = vsub.f32 1.0, %v1174
  %v1176 = vmul.f32 %v1173, %v1175
  %v1177 = vadd.f32 %v1173, %v1176
  %vm1178 = vweird.f32 %v843
  %vm1179 = vweird.f32 %v1173
  %vm1180 = vmor %vm1178, %vm1179
  %v1181 = vsel %vm1180, %v1173, %v1177
  %v1182 = vand.u32 2147483647, %v843
  %vm1183 = vcmp.eq.f32.partialorder %v1182, 8.507059e+37
  %v1184 = vand.u32 %v843, 2147483648
  %v1185 = vor.u32 1.1754944e-38, %v1184
  %v1186 = vsel %vm1183, %v1185, %v1181
  %v1187 = vmul.f32 1.0, %v1186
  %v1188 = vrcp.pop %v844
  %v1189 = vmul.f32 %v844, %v1188
  %v1190 = vsub.f32 1.0, %v1189
  %v1191 = vmul.f32 %v1188, %v1190
  %v1192 = vadd.f32 %v1188, %v1191
  %vm1193 = vweird.f32 %v844
  %vm1194 = vweird.f32 %v1188
  %vm1195 = vmor %vm1193, %vm1194
  %v1196 = vsel %vm1195, %v1188, %v1192
  %v1197 = vand.u32 2147483647, %v844
  %vm1198 = vcmp.eq.f32.partialorder %v1197, 8.507059e+37
  %v1199 = vand.u32 %v844, 2147483648
  %v1200 = vor.u32 1.1754944e-38, %v1199
  %v1201 = vsel %vm1198, %v1200, %v1196
  %v1202 = vmul.f32 1.0, %v1201
  %v1203 = vrcp.pop %v845
  %v1204 = vmul.f32 %v845, %v1203
  %v1205 = vsub.f32 1.0, %v1204
  %v1206 = vmul.f32 %v1203, %v1205
  %v1207 = vadd.f32 %v1203, %v1206
  %vm1208 = vweird.f32 %v845
  %vm1209 = vweird.f32 %v1203
  %vm1210 = vmor %vm1208, %vm1209
  %v1211 = vsel %vm1210, %v1203, %v1207
  %v1212 = vand.u32 2147483647, %v845
  %vm1213 = vcmp.eq.f32.partialorder %v1212, 8.507059e+37
  %v1214 = vand.u32 %v845, 2147483648
  %v1215 = vor.u32 1.1754944e-38, %v1214
  %v1216 = vsel %vm1213, %v1215, %v1211
  %v1217 = vmul.f32 1.0, %v1216
  %v1218 = vrcp.pop %v846
  %v1219 = vmul.f32 %v846, %v1218
  %v1220 = vsub.f32 1.0, %v1219
  %v1221 = vmul.f32 %v1218, %v1220
  %v1222 = vadd.f32 %v1218, %v1221
  %vm1223 = vweird.f32 %v846
  %vm1224 = vweird.f32 %v1218
  %vm1225 = vmor %vm1223, %vm1224
  %v1226 = vsel %vm1225, %v1218, %v1222
  %v1227 = vand.u32 2147483647, %v846
  %vm1228 = vcmp.eq.f32.partialorder %v1227, 8.507059e+37
  %v1229 = vand.u32 %v846, 2147483648
  %v1230 = vor.u32 1.1754944e-38, %v1229
  %v1231 = vsel %vm1228, %v1230, %v1226
  %v1232 = vmul.f32 1.0, %v1231
  %v1233 = vrcp.pop %v847
  %v1234 = vmul.f32 %v847, %v1233
  %v1235 = vsub.f32 1.0, %v1234
  %v1236 = vmul.f32 %v1233, %v1235
  %v1237 = vadd.f32 %v1233, %v1236
  %vm1238 = vweird.f32 %v847
  %vm1239 = vweird.f32 %v1233
  %vm1240 = vmor %vm1238, %vm1239
  %v1241 = vsel %vm1240, %v1233, %v1237
  %v1242 = vand.u32 2147483647, %v847
  %vm1243 = vcmp.eq.f32.partialorder %v1242, 8.507059e+37
  %v1244 = vand.u32 %v847, 2147483648
  %v1245 = vor.u32 1.1754944e-38, %v1244
  %v1246 = vsel %vm1243, %v1245, %v1241
  %v1247 = vmul.f32 1.0, %v1246
  %v1248 = vrcp.pop %v848
  %v1249 = vmul.f32 %v848, %v1248
  %v1250 = vsub.f32 1.0, %v1249
  %v1251 = vmul.f32 %v1248, %v1250
  %v1252 = vadd.f32 %v1248, %v1251
  %vm1253 = vweird.f32 %v848
  %vm1254 = vweird.f32 %v1248
  %vm1255 = vmor %vm1253, %vm1254
  %v1256 = vsel %vm1255, %v1248, %v1252
  %v1257 = vand.u32 2147483647, %v848
  %vm1258 = vcmp.eq.f32.partialorder %v1257, 8.507059e+37
  %v1259 = vand.u32 %v848, 2147483648
  %v1260 = vor.u32 1.1754944e-38, %v1259
  %v1261 = vsel %vm1258, %v1260, %v1256
  %v1262 = vmul.f32 1.0, %v1261
  %v1263 = vrcp.pop %v849
  %v1264 = vmul.f32 %v849, %v1263
  %v1265 = vsub.f32 1.0, %v1264
  %v1266 = vmul.f32 %v1263, %v1265
  %v1267 = vadd.f32 %v1263, %v1266
  %vm1268 = vweird.f32 %v849
  %vm1269 = vweird.f32 %v1263
  %vm1270 = vmor %vm1268, %vm1269
  %v1271 = vsel %vm1270, %v1263, %v1267
  %v1272 = vand.u32 2147483647, %v849
  %vm1273 = vcmp.eq.f32.partialorder %v1272, 8.507059e+37
  %v1274 = vand.u32 %v849, 2147483648
  %v1275 = vor.u32 1.1754944e-38, %v1274
  %v1276 = vsel %vm1273, %v1275, %v1271
  %v1277 = vmul.f32 1.0, %v1276
  %v1278 = vrcp.pop %v850
  %v1279 = vmul.f32 %v850, %v1278
  %v1280 = vsub.f32 1.0, %v1279
  %v1281 = vmul.f32 %v1278, %v1280
  %v1282 = vadd.f32 %v1278, %v1281
  %vm1283 = vweird.f32 %v850
  %vm1284 = vweird.f32 %v1278
  %vm1285 = vmor %vm1283, %vm1284
  %v1286 = vsel %vm1285, %v1278, %v1282
  %v1287 = vand.u32 2147483647, %v850
  %vm1288 = vcmp.eq.f32.partialorder %v1287, 8.507059e+37
  %v1289 = vand.u32 %v850, 2147483648
  %v1290 = vor.u32 1.1754944e-38, %v1289
  %v1291 = vsel %vm1288, %v1290, %v1286
  %v1292 = vmul.f32 1.0, %v1291
  %v1293 = vrcp.pop %v851
  %v1294 = vmul.f32 %v851, %v1293
  %v1295 = vsub.f32 1.0, %v1294
  %v1296 = vmul.f32 %v1293, %v1295
  %v1297 = vadd.f32 %v1293, %v1296
  %vm1298 = vweird.f32 %v851
  %vm1299 = vweird.f32 %v1293
  %vm1300 = vmor %vm1298, %vm1299
  %v1301 = vsel %vm1300, %v1293, %v1297
  %v1302 = vand.u32 2147483647, %v851
  %vm1303 = vcmp.eq.f32.partialorder %v1302, 8.507059e+37
  %v1304 = vand.u32 %v851, 2147483648
  %v1305 = vor.u32 1.1754944e-38, %v1304
  %v1306 = vsel %vm1303, %v1305, %v1301
  %v1307 = vmul.f32 1.0, %v1306
  %v1308 = vrcp.pop %v852
  %v1309 = vmul.f32 %v852, %v1308
  %v1310 = vsub.f32 1.0, %v1309
  %v1311 = vmul.f32 %v1308, %v1310
  %v1312 = vadd.f32 %v1308, %v1311
  %vm1313 = vweird.f32 %v852
  %vm1314 = vweird.f32 %v1308
  %vm1315 = vmor %vm1313, %vm1314
  %v1316 = vsel %vm1315, %v1308, %v1312
  %v1317 = vand.u32 2147483647, %v852
  %vm1318 = vcmp.eq.f32.partialorder %v1317, 8.507059e+37
  %v1319 = vand.u32 %v852, 2147483648
  %v1320 = vor.u32 1.1754944e-38, %v1319
  %v1321 = vsel %vm1318, %v1320, %v1316
  %v1322 = vmul.f32 1.0, %v1321
  %v1323 = vrcp.pop %v853
  %v1324 = vmul.f32 %v853, %v1323
  %v1325 = vsub.f32 1.0, %v1324
  %v1326 = vmul.f32 %v1323, %v1325
  %v1327 = vadd.f32 %v1323, %v1326
  %vm1328 = vweird.f32 %v853
  %vm1329 = vweird.f32 %v1323
  %vm1330 = vmor %vm1328, %vm1329
  %v1331 = vsel %vm1330, %v1323, %v1327
  %v1332 = vand.u32 2147483647, %v853
  %vm1333 = vcmp.eq.f32.partialorder %v1332, 8.507059e+37
  %v1334 = vand.u32 %v853, 2147483648
  %v1335 = vor.u32 1.1754944e-38, %v1334
  %v1336 = vsel %vm1333, %v1335, %v1331
  %v1337 = vmul.f32 1.0, %v1336
  %v1338 = vrcp.pop %v854
  %v1339 = vmul.f32 %v854, %v1338
  %v1340 = vsub.f32 1.0, %v1339
  %v1341 = vmul.f32 %v1338, %v1340
  %v1342 = vadd.f32 %v1338, %v1341
  %vm1343 = vweird.f32 %v854
  %vm1344 = vweird.f32 %v1338
  %vm1345 = vmor %vm1343, %vm1344
  %v1346 = vsel %vm1345, %v1338, %v1342
  %v1347 = vand.u32 2147483647, %v854
  %vm1348 = vcmp.eq.f32.partialorder %v1347, 8.507059e+37
  %v1349 = vand.u32 %v854, 2147483648
  %v1350 = vor.u32 1.1754944e-38, %v1349
  %v1351 = vsel %vm1348, %v1350, %v1346
  %v1352 = vmul.f32 1.0, %v1351
  %v1353 = vrcp.pop %v855
  %v1354 = vmul.f32 %v855, %v1353
  %v1355 = vsub.f32 1.0, %v1354
  %v1356 = vmul.f32 %v1353, %v1355
  %v1357 = vadd.f32 %v1353, %v1356
  %vm1358 = vweird.f32 %v855
  %vm1359 = vweird.f32 %v1353
  %vm1360 = vmor %vm1358, %vm1359
  %v1361 = vsel %vm1360, %v1353, %v1357
  %v1362 = vand.u32 2147483647, %v855
  %vm1363 = vcmp.eq.f32.partialorder %v1362, 8.507059e+37
  %v1364 = vand.u32 %v855, 2147483648
  %v1365 = vor.u32 1.1754944e-38, %v1364
  %v1366 = vsel %vm1363, %v1365, %v1361
  %v1367 = vmul.f32 1.0, %v1366
  %v1368 = vrcp.pop %v856
  %v1369 = vmul.f32 %v856, %v1368
  %v1370 = vsub.f32 1.0, %v1369
  %v1371 = vmul.f32 %v1368, %v1370
  %v1372 = vadd.f32 %v1368, %v1371
  %vm1373 = vweird.f32 %v856
  %vm1374 = vweird.f32 %v1368
  %vm1375 = vmor %vm1373, %vm1374
  %v1376 = vsel %vm1375, %v1368, %v1372
  %v1377 = vand.u32 2147483647, %v856
  %vm1378 = vcmp.eq.f32.partialorder %v1377, 8.507059e+37
  %v1379 = vand.u32 %v856, 2147483648
  %v1380 = vor.u32 1.1754944e-38, %v1379
  %v1381 = vsel %vm1378, %v1380, %v1376
  %v1382 = vmul.f32 1.0, %v1381
  %v1383 = vrcp.pop %v857
  %v1384 = vmul.f32 %v857, %v1383
  %v1385 = vsub.f32 1.0, %v1384
  %v1386 = vmul.f32 %v1383, %v1385
  %v1387 = vadd.f32 %v1383, %v1386
  %vm1388 = vweird.f32 %v857
  %vm1389 = vweird.f32 %v1383
  %vm1390 = vmor %vm1388, %vm1389
  %v1391 = vsel %vm1390, %v1383, %v1387
  %v1392 = vand.u32 2147483647, %v857
  %vm1393 = vcmp.eq.f32.partialorder %v1392, 8.507059e+37
  %v1394 = vand.u32 %v857, 2147483648
  %v1395 = vor.u32 1.1754944e-38, %v1394
  %v1396 = vsel %vm1393, %v1395, %v1391
  %v1397 = vmul.f32 1.0, %v1396
  %v1398 = vrcp.pop %v858
  %v1399 = vmul.f32 %v858, %v1398
  %v1400 = vsub.f32 1.0, %v1399
  %v1401 = vmul.f32 %v1398, %v1400
  %v1402 = vadd.f32 %v1398, %v1401
  %vm1403 = vweird.f32 %v858
  %vm1404 = vweird.f32 %v1398
  %vm1405 = vmor %vm1403, %vm1404
  %v1406 = vsel %vm1405, %v1398, %v1402
  %v1407 = vand.u32 2147483647, %v858
  %vm1408 = vcmp.eq.f32.partialorder %v1407, 8.507059e+37
  %v1409 = vand.u32 %v858, 2147483648
  %v1410 = vor.u32 1.1754944e-38, %v1409
  %v1411 = vsel %vm1408, %v1410, %v1406
  %v1412 = vmul.f32 1.0, %v1411
  %v1413 = vrcp.pop %v859
  %v1414 = vmul.f32 %v859, %v1413
  %v1415 = vsub.f32 1.0, %v1414
  %v1416 = vmul.f32 %v1413, %v1415
  %v1417 = vadd.f32 %v1413, %v1416
  %vm1418 = vweird.f32 %v859
  %vm1419 = vweird.f32 %v1413
  %vm1420 = vmor %vm1418, %vm1419
  %v1421 = vsel %vm1420, %v1413, %v1417
  %v1422 = vand.u32 2147483647, %v859
  %vm1423 = vcmp.eq.f32.partialorder %v1422, 8.507059e+37
  %v1424 = vand.u32 %v859, 2147483648
  %v1425 = vor.u32 1.1754944e-38, %v1424
  %v1426 = vsel %vm1423, %v1425, %v1421
  %v1427 = vmul.f32 1.0, %v1426
  %v1428 = vrcp.pop %v860
  %v1429 = vmul.f32 %v860, %v1428
  %v1430 = vsub.f32 1.0, %v1429
  %v1431 = vmul.f32 %v1428, %v1430
  %v1432 = vadd.f32 %v1428, %v1431
  %vm1433 = vweird.f32 %v860
  %vm1434 = vweird.f32 %v1428
  %vm1435 = vmor %vm1433, %vm1434
  %v1436 = vsel %vm1435, %v1428, %v1432
  %v1437 = vand.u32 2147483647, %v860
  %vm1438 = vcmp.eq.f32.partialorder %v1437, 8.507059e+37
  %v1439 = vand.u32 %v860, 2147483648
  %v1440 = vor.u32 1.1754944e-38, %v1439
  %v1441 = vsel %vm1438, %v1440, %v1436
  %v1442 = vmul.f32 1.0, %v1441
  %v1443 = vrcp.pop %v861
  %v1444 = vmul.f32 %v861, %v1443
  %v1445 = vsub.f32 1.0, %v1444
  %v1446 = vmul.f32 %v1443, %v1445
  %v1447 = vadd.f32 %v1443, %v1446
  %vm1448 = vweird.f32 %v861
  %vm1449 = vweird.f32 %v1443
  %vm1450 = vmor %vm1448, %vm1449
  %v1451 = vsel %vm1450, %v1443, %v1447
  %v1452 = vand.u32 2147483647, %v861
  %vm1453 = vcmp.eq.f32.partialorder %v1452, 8.507059e+37
  %v1454 = vand.u32 %v861, 2147483648
  %v1455 = vor.u32 1.1754944e-38, %v1454
  %v1456 = vsel %vm1453, %v1455, %v1451
  %v1457 = vmul.f32 1.0, %v1456
  %v1458 = vrcp.pop %v862
  %v1459 = vmul.f32 %v862, %v1458
  %v1460 = vsub.f32 1.0, %v1459
  %v1461 = vmul.f32 %v1458, %v1460
  %v1462 = vadd.f32 %v1458, %v1461
  %vm1463 = vweird.f32 %v862
  %vm1464 = vweird.f32 %v1458
  %vm1465 = vmor %vm1463, %vm1464
  %v1466 = vsel %vm1465, %v1458, %v1462
  %v1467 = vand.u32 2147483647, %v862
  %vm1468 = vcmp.eq.f32.partialorder %v1467, 8.507059e+37
  %v1469 = vand.u32 %v862, 2147483648
  %v1470 = vor.u32 1.1754944e-38, %v1469
  %v1471 = vsel %vm1468, %v1470, %v1466
  %v1472 = vmul.f32 1.0, %v1471
  %v1473 = vrcp.pop %v863
  %v1474 = vmul.f32 %v863, %v1473
  %v1475 = vsub.f32 1.0, %v1474
  %v1476 = vmul.f32 %v1473, %v1475
  %v1477 = vadd.f32 %v1473, %v1476
  %vm1478 = vweird.f32 %v863
  %vm1479 = vweird.f32 %v1473
  %vm1480 = vmor %vm1478, %vm1479
  %v1481 = vsel %vm1480, %v1473, %v1477
  %v1482 = vand.u32 2147483647, %v863
  %vm1483 = vcmp.eq.f32.partialorder %v1482, 8.507059e+37
  %v1484 = vand.u32 %v863, 2147483648
  %v1485 = vor.u32 1.1754944e-38, %v1484
  %v1486 = vsel %vm1483, %v1485, %v1481
  %v1487 = vmul.f32 1.0, %v1486
  %v1488 = vrcp.pop %v864
  %v1489 = vmul.f32 %v864, %v1488
  %v1490 = vsub.f32 1.0, %v1489
  %v1491 = vmul.f32 %v1488, %v1490
  %v1492 = vadd.f32 %v1488, %v1491
  %vm1493 = vweird.f32 %v864
  %vm1494 = vweird.f32 %v1488
  %vm1495 = vmor %vm1493, %vm1494
  %v1496 = vsel %vm1495, %v1488, %v1492
  %v1497 = vand.u32 2147483647, %v864
  %vm1498 = vcmp.eq.f32.partialorder %v1497, 8.507059e+37
  %v1499 = vand.u32 %v864, 2147483648
  %v1500 = vor.u32 1.1754944e-38, %v1499
  %v1501 = vsel %vm1498, %v1500, %v1496
  %v1502 = vmul.f32 1.0, %v1501
  %v1503 = vrcp.pop %v865
  %v1504 = vmul.f32 %v865, %v1503
  %v1505 = vsub.f32 1.0, %v1504
  %v1506 = vmul.f32 %v1503, %v1505
  %v1507 = vadd.f32 %v1503, %v1506
  %vm1508 = vweird.f32 %v865
  %vm1509 = vweird.f32 %v1503
  %vm1510 = vmor %vm1508, %vm1509
  %v1511 = vsel %vm1510, %v1503, %v1507
  %v1512 = vand.u32 2147483647, %v865
  %vm1513 = vcmp.eq.f32.partialorder %v1512, 8.507059e+37
  %v1514 = vand.u32 %v865, 2147483648
  %v1515 = vor.u32 1.1754944e-38, %v1514
  %v1516 = vsel %vm1513, %v1515, %v1511
  %v1517 = vmul.f32 1.0, %v1516
  %v1518 = vrcp.pop %v866
  %v1519 = vmul.f32 %v866, %v1518
  %v1520 = vsub.f32 1.0, %v1519
  %v1521 = vmul.f32 %v1518, %v1520
  %v1522 = vadd.f32 %v1518, %v1521
  %vm1523 = vweird.f32 %v866
  %vm1524 = vweird.f32 %v1518
  %vm1525 = vmor %vm1523, %vm1524
  %v1526 = vsel %vm1525, %v1518, %v1522
  %v1527 = vand.u32 2147483647, %v866
  %vm1528 = vcmp.eq.f32.partialorder %v1527, 8.507059e+37
  %v1529 = vand.u32 %v866, 2147483648
  %v1530 = vor.u32 1.1754944e-38, %v1529
  %v1531 = vsel %vm1528, %v1530, %v1526
  %v1532 = vmul.f32 1.0, %v1531
  %v1533 = vrcp.pop %v867
  %v1534 = vmul.f32 %v867, %v1533
  %v1535 = vsub.f32 1.0, %v1534
  %v1536 = vmul.f32 %v1533, %v1535
  %v1537 = vadd.f32 %v1533, %v1536
  %vm1538 = vweird.f32 %v867
  %vm1539 = vweird.f32 %v1533
  %vm1540 = vmor %vm1538, %vm1539
  %v1541 = vsel %vm1540, %v1533, %v1537
  %v1542 = vand.u32 2147483647, %v867
  %vm1543 = vcmp.eq.f32.partialorder %v1542, 8.507059e+37
  %v1544 = vand.u32 %v867, 2147483648
  %v1545 = vor.u32 1.1754944e-38, %v1544
  %v1546 = vsel %vm1543, %v1545, %v1541
  %v1547 = vmul.f32 1.0, %v1546
  %v1548 = vrcp.pop %v868
  %v1549 = vmul.f32 %v868, %v1548
  %v1550 = vsub.f32 1.0, %v1549
  %v1551 = vmul.f32 %v1548, %v1550
  %v1552 = vadd.f32 %v1548, %v1551
  %vm1553 = vweird.f32 %v868
  %vm1554 = vweird.f32 %v1548
  %vm1555 = vmor %vm1553, %vm1554
  %v1556 = vsel %vm1555, %v1548, %v1552
  %v1557 = vand.u32 2147483647, %v868
  %vm1558 = vcmp.eq.f32.partialorder %v1557, 8.507059e+37
  %v1559 = vand.u32 %v868, 2147483648
  %v1560 = vor.u32 1.1754944e-38, %v1559
  %v1561 = vsel %vm1558, %v1560, %v1556
  %v1562 = vmul.f32 1.0, %v1561
  %v1563 = vrcp.pop %v869
  %v1564 = vmul.f32 %v869, %v1563
  %v1565 = vsub.f32 1.0, %v1564
  %v1566 = vmul.f32 %v1563, %v1565
  %v1567 = vadd.f32 %v1563, %v1566
  %vm1568 = vweird.f32 %v869
  %vm1569 = vweird.f32 %v1563
  %vm1570 = vmor %vm1568, %vm1569
  %v1571 = vsel %vm1570, %v1563, %v1567
  %v1572 = vand.u32 2147483647, %v869
  %vm1573 = vcmp.eq.f32.partialorder %v1572, 8.507059e+37
  %v1574 = vand.u32 %v869, 2147483648
  %v1575 = vor.u32 1.1754944e-38, %v1574
  %v1576 = vsel %vm1573, %v1575, %v1571
  %v1577 = vmul.f32 1.0, %v1576
  %v1578 = vrcp.pop %v870
  %v1579 = vmul.f32 %v870, %v1578
  %v1580 = vsub.f32 1.0, %v1579
  %v1581 = vmul.f32 %v1578, %v1580
  %v1582 = vadd.f32 %v1578, %v1581
  %vm1583 = vweird.f32 %v870
  %vm1584 = vweird.f32 %v1578
  %vm1585 = vmor %vm1583, %vm1584
  %v1586 = vsel %vm1585, %v1578, %v1582
  %v1587 = vand.u32 2147483647, %v870
  %vm1588 = vcmp.eq.f32.partialorder %v1587, 8.507059e+37
  %v1589 = vand.u32 %v870, 2147483648
  %v1590 = vor.u32 1.1754944e-38, %v1589
  %v1591 = vsel %vm1588, %v1590, %v1586
  %v1592 = vmul.f32 1.0, %v1591
  %v1593 = vrcp.pop %v871
  %v1594 = vmul.f32 %v871, %v1593
  %v1595 = vsub.f32 1.0, %v1594
  %v1596 = vmul.f32 %v1593, %v1595
  %v1597 = vadd.f32 %v1593, %v1596
  %vm1598 = vweird.f32 %v871
  %vm1599 = vweird.f32 %v1593
  %vm1600 = vmor %vm1598, %vm1599
  %v1601 = vsel %vm1600, %v1593, %v1597
  %v1602 = vand.u32 2147483647, %v871
  %vm1603 = vcmp.eq.f32.partialorder %v1602, 8.507059e+37
  %v1604 = vand.u32 %v871, 2147483648
  %v1605 = vor.u32 1.1754944e-38, %v1604
  %v1606 = vsel %vm1603, %v1605, %v1601
  %v1607 = vmul.f32 1.0, %v1606
  %v1608 = vrcp.pop %v872
  %v1609 = vmul.f32 %v872, %v1608
  %v1610 = vsub.f32 1.0, %v1609
  %v1611 = vmul.f32 %v1608, %v1610
  %v1612 = vadd.f32 %v1608, %v1611
  %vm1613 = vweird.f32 %v872
  %vm1614 = vweird.f32 %v1608
  %vm1615 = vmor %vm1613, %vm1614
  %v1616 = vsel %vm1615, %v1608, %v1612
  %v1617 = vand.u32 2147483647, %v872
  %vm1618 = vcmp.eq.f32.partialorder %v1617, 8.507059e+37
  %v1619 = vand.u32 %v872, 2147483648
  %v1620 = vor.u32 1.1754944e-38, %v1619
  %v1621 = vsel %vm1618, %v1620, %v1616
  %v1622 = vmul.f32 1.0, %v1621
  %v1623 = vrcp.pop %v873
  %v1624 = vmul.f32 %v873, %v1623
  %v1625 = vsub.f32 1.0, %v1624
  %v1626 = vmul.f32 %v1623, %v1625
  %v1627 = vadd.f32 %v1623, %v1626
  %vm1628 = vweird.f32 %v873
  %vm1629 = vweird.f32 %v1623
  %vm1630 = vmor %vm1628, %vm1629
  %v1631 = vsel %vm1630, %v1623, %v1627
  %v1632 = vand.u32 2147483647, %v873
  %vm1633 = vcmp.eq.f32.partialorder %v1632, 8.507059e+37
  %v1634 = vand.u32 %v873, 2147483648
  %v1635 = vor.u32 1.1754944e-38, %v1634
  %v1636 = vsel %vm1633, %v1635, %v1631
  %v1637 = vmul.f32 1.0, %v1636
  %v1638 = vrcp.pop %v874
  %v1639 = vmul.f32 %v874, %v1638
  %v1640 = vsub.f32 1.0, %v1639
  %v1641 = vmul.f32 %v1638, %v1640
  %v1642 = vadd.f32 %v1638, %v1641
  %vm1643 = vweird.f32 %v874
  %vm1644 = vweird.f32 %v1638
  %vm1645 = vmor %vm1643, %vm1644
  %v1646 = vsel %vm1645, %v1638, %v1642
  %v1647 = vand.u32 2147483647, %v874
  %vm1648 = vcmp.eq.f32.partialorder %v1647, 8.507059e+37
  %v1649 = vand.u32 %v874, 2147483648
  %v1650 = vor.u32 1.1754944e-38, %v1649
  %v1651 = vsel %vm1648, %v1650, %v1646
  %v1652 = vmul.f32 1.0, %v1651
  %v1653 = vrcp.pop %v875
  %v1654 = vmul.f32 %v875, %v1653
  %v1655 = vsub.f32 1.0, %v1654
  %v1656 = vmul.f32 %v1653, %v1655
  %v1657 = vadd.f32 %v1653, %v1656
  %vm1658 = vweird.f32 %v875
  %vm1659 = vweird.f32 %v1653
  %vm1660 = vmor %vm1658, %vm1659
  %v1661 = vsel %vm1660, %v1653, %v1657
  %v1662 = vand.u32 2147483647, %v875
  %vm1663 = vcmp.eq.f32.partialorder %v1662, 8.507059e+37
  %v1664 = vand.u32 %v875, 2147483648
  %v1665 = vor.u32 1.1754944e-38, %v1664
  %v1666 = vsel %vm1663, %v1665, %v1661
  %v1667 = vmul.f32 1.0, %v1666
  %v1668 = vrcp.pop %v876
  %v1669 = vmul.f32 %v876, %v1668
  %v1670 = vsub.f32 1.0, %v1669
  %v1671 = vmul.f32 %v1668, %v1670
  %v1672 = vadd.f32 %v1668, %v1671
  %vm1673 = vweird.f32 %v876
  %vm1674 = vweird.f32 %v1668
  %vm1675 = vmor %vm1673, %vm1674
  %v1676 = vsel %vm1675, %v1668, %v1672
  %v1677 = vand.u32 2147483647, %v876
  %vm1678 = vcmp.eq.f32.partialorder %v1677, 8.507059e+37
  %v1679 = vand.u32 %v876, 2147483648
  %v1680 = vor.u32 1.1754944e-38, %v1679
  %v1681 = vsel %vm1678, %v1680, %v1676
  %v1682 = vmul.f32 1.0, %v1681
  %v1683 = vrcp.pop %v877
  %v1684 = vmul.f32 %v877, %v1683
  %v1685 = vsub.f32 1.0, %v1684
  %v1686 = vmul.f32 %v1683, %v1685
  %v1687 = vadd.f32 %v1683, %v1686
  %vm1688 = vweird.f32 %v877
  %vm1689 = vweird.f32 %v1683
  %vm1690 = vmor %vm1688, %vm1689
  %v1691 = vsel %vm1690, %v1683, %v1687
  %v1692 = vand.u32 2147483647, %v877
  %vm1693 = vcmp.eq.f32.partialorder %v1692, 8.507059e+37
  %v1694 = vand.u32 %v877, 2147483648
  %v1695 = vor.u32 1.1754944e-38, %v1694
  %v1696 = vsel %vm1693, %v1695, %v1691
  %v1697 = vmul.f32 1.0, %v1696
  %v1698 = vrcp.pop %v878
  %v1699 = vmul.f32 %v878, %v1698
  %v1700 = vsub.f32 1.0, %v1699
  %v1701 = vmul.f32 %v1698, %v1700
  %v1702 = vadd.f32 %v1698, %v1701
  %vm1703 = vweird.f32 %v878
  %vm1704 = vweird.f32 %v1698
  %vm1705 = vmor %vm1703, %vm1704
  %v1706 = vsel %vm1705, %v1698, %v1702
  %v1707 = vand.u32 2147483647, %v878
  %vm1708 = vcmp.eq.f32.partialorder %v1707, 8.507059e+37
  %v1709 = vand.u32 %v878, 2147483648
  %v1710 = vor.u32 1.1754944e-38, %v1709
  %v1711 = vsel %vm1708, %v1710, %v1706
  %v1712 = vmul.f32 1.0, %v1711
  %v1713 = vrcp.pop %v879
  %v1714 = vmul.f32 %v879, %v1713
  %v1715 = vsub.f32 1.0, %v1714
  %v1716 = vmul.f32 %v1713, %v1715
  %v1717 = vadd.f32 %v1713, %v1716
  %vm1718 = vweird.f32 %v879
  %vm1719 = vweird.f32 %v1713
  %vm1720 = vmor %vm1718, %vm1719
  %v1721 = vsel %vm1720, %v1713, %v1717
  %v1722 = vand.u32 2147483647, %v879
  %vm1723 = vcmp.eq.f32.partialorder %v1722, 8.507059e+37
  %v1724 = vand.u32 %v879, 2147483648
  %v1725 = vor.u32 1.1754944e-38, %v1724
  %v1726 = vsel %vm1723, %v1725, %v1721
  %v1727 = vmul.f32 1.0, %v1726
  %v1728 = vrcp.pop %v880
  %v1729 = vmul.f32 %v880, %v1728
  %v1730 = vsub.f32 1.0, %v1729
  %v1731 = vmul.f32 %v1728, %v1730
  %v1732 = vadd.f32 %v1728, %v1731
  %vm1733 = vweird.f32 %v880
  %vm1734 = vweird.f32 %v1728
  %vm1735 = vmor %vm1733, %vm1734
  %v1736 = vsel %vm1735, %v1728, %v1732
  %v1737 = vand.u32 2147483647, %v880
  %vm1738 = vcmp.eq.f32.partialorder %v1737, 8.507059e+37
  %v1739 = vand.u32 %v880, 2147483648
  %v1740 = vor.u32 1.1754944e-38, %v1739
  %v1741 = vsel %vm1738, %v1740, %v1736
  %v1742 = vmul.f32 1.0, %v1741
  %v1743 = vrcp.pop %v881
  %v1744 = vmul.f32 %v881, %v1743
  %v1745 = vsub.f32 1.0, %v1744
  %v1746 = vmul.f32 %v1743, %v1745
  %v1747 = vadd.f32 %v1743, %v1746
  %vm1748 = vweird.f32 %v881
  %vm1749 = vweird.f32 %v1743
  %vm1750 = vmor %vm1748, %vm1749
  %v1751 = vsel %vm1750, %v1743, %v1747
  %v1752 = vand.u32 2147483647, %v881
  %vm1753 = vcmp.eq.f32.partialorder %v1752, 8.507059e+37
  %v1754 = vand.u32 %v881, 2147483648
  %v1755 = vor.u32 1.1754944e-38, %v1754
  %v1756 = vsel %vm1753, %v1755, %v1751
  %v1757 = vmul.f32 1.0, %v1756
  %v1758 = vrcp.pop %v882
  %v1759 = vmul.f32 %v882, %v1758
  %v1760 = vsub.f32 1.0, %v1759
  %v1761 = vmul.f32 %v1758, %v1760
  %v1762 = vadd.f32 %v1758, %v1761
  %vm1763 = vweird.f32 %v882
  %vm1764 = vweird.f32 %v1758
  %vm1765 = vmor %vm1763, %vm1764
  %v1766 = vsel %vm1765, %v1758, %v1762
  %v1767 = vand.u32 2147483647, %v882
  %vm1768 = vcmp.eq.f32.partialorder %v1767, 8.507059e+37
  %v1769 = vand.u32 %v882, 2147483648
  %v1770 = vor.u32 1.1754944e-38, %v1769
  %v1771 = vsel %vm1768, %v1770, %v1766
  %v1772 = vmul.f32 1.0, %v1771
  %v1773 = vrcp.pop %v883
  %v1774 = vmul.f32 %v883, %v1773
  %v1775 = vsub.f32 1.0, %v1774
  %v1776 = vmul.f32 %v1773, %v1775
  %v1777 = vadd.f32 %v1773, %v1776
  %vm1778 = vweird.f32 %v883
  %vm1779 = vweird.f32 %v1773
  %vm1780 = vmor %vm1778, %vm1779
  %v1781 = vsel %vm1780, %v1773, %v1777
  %v1782 = vand.u32 2147483647, %v883
  %vm1783 = vcmp.eq.f32.partialorder %v1782, 8.507059e+37
  %v1784 = vand.u32 %v883, 2147483648
  %v1785 = vor.u32 1.1754944e-38, %v1784
  %v1786 = vsel %vm1783, %v1785, %v1781
  %v1787 = vmul.f32 1.0, %v1786
  %v1788 = vrcp.pop %v884
  %v1789 = vmul.f32 %v884, %v1788
  %v1790 = vsub.f32 1.0, %v1789
  %v1791 = vmul.f32 %v1788, %v1790
  %v1792 = vadd.f32 %v1788, %v1791
  %vm1793 = vweird.f32 %v884
  %vm1794 = vweird.f32 %v1788
  %vm1795 = vmor %vm1793, %vm1794
  %v1796 = vsel %vm1795, %v1788, %v1792
  %v1797 = vand.u32 2147483647, %v884
  %vm1798 = vcmp.eq.f32.partialorder %v1797, 8.507059e+37
  %v1799 = vand.u32 %v884, 2147483648
  %v1800 = vor.u32 1.1754944e-38, %v1799
  %v1801 = vsel %vm1798, %v1800, %v1796
  %v1802 = vmul.f32 1.0, %v1801
  %v1803 = vrcp.pop %v885
  %v1804 = vmul.f32 %v885, %v1803
  %v1805 = vsub.f32 1.0, %v1804
  %v1806 = vmul.f32 %v1803, %v1805
  %v1807 = vadd.f32 %v1803, %v1806
  %vm1808 = vweird.f32 %v885
  %vm1809 = vweird.f32 %v1803
  %vm1810 = vmor %vm1808, %vm1809
  %v1811 = vsel %vm1810, %v1803, %v1807
  %v1812 = vand.u32 2147483647, %v885
  %vm1813 = vcmp.eq.f32.partialorder %v1812, 8.507059e+37
  %v1814 = vand.u32 %v885, 2147483648
  %v1815 = vor.u32 1.1754944e-38, %v1814
  %v1816 = vsel %vm1813, %v1815, %v1811
  %v1817 = vmul.f32 1.0, %v1816
  %v1818 = vrcp.pop %v886
  %v1819 = vmul.f32 %v886, %v1818
  %v1820 = vsub.f32 1.0, %v1819
  %v1821 = vmul.f32 %v1818, %v1820
  %v1822 = vadd.f32 %v1818, %v1821
  %vm1823 = vweird.f32 %v886
  %vm1824 = vweird.f32 %v1818
  %vm1825 = vmor %vm1823, %vm1824
  %v1826 = vsel %vm1825, %v1818, %v1822
  %v1827 = vand.u32 2147483647, %v886
  %vm1828 = vcmp.eq.f32.partialorder %v1827, 8.507059e+37
  %v1829 = vand.u32 %v886, 2147483648
  %v1830 = vor.u32 1.1754944e-38, %v1829
  %v1831 = vsel %vm1828, %v1830, %v1826
  %v1832 = vmul.f32 1.0, %v1831
  %v1833 = vrcp.pop %v887
  %v1834 = vmul.f32 %v887, %v1833
  %v1835 = vsub.f32 1.0, %v1834
  %v1836 = vmul.f32 %v1833, %v1835
  %v1837 = vadd.f32 %v1833, %v1836
  %vm1838 = vweird.f32 %v887
  %vm1839 = vweird.f32 %v1833
  %vm1840 = vmor %vm1838, %vm1839
  %v1841 = vsel %vm1840, %v1833, %v1837
  %v1842 = vand.u32 2147483647, %v887
  %vm1843 = vcmp.eq.f32.partialorder %v1842, 8.507059e+37
  %v1844 = vand.u32 %v887, 2147483648
  %v1845 = vor.u32 1.1754944e-38, %v1844
  %v1846 = vsel %vm1843, %v1845, %v1841
  %v1847 = vmul.f32 1.0, %v1846
  %v1848 = vmul.f32 %v568, %v902
  %v1849 = vmul.f32 %v569, %v917
  %v1850 = vmul.f32 %v570, %v932
  %v1851 = vmul.f32 %v571, %v947
  %v1852 = vmul.f32 %v572, %v962
  %v1853 = vmul.f32 %v573, %v977
  %v1854 = vmul.f32 %v574, %v992
  %v1855 = vmul.f32 %v575, %v1007
  %v1856 = vmul.f32 %v576, %v1022
  %v1857 = vmul.f32 %v577, %v1037
  %v1858 = vmul.f32 %v578, %v1052
  %v1859 = vmul.f32 %v579, %v1067
  %v1860 = vmul.f32 %v580, %v1082
  %v1861 = vmul.f32 %v581, %v1097
  %v1862 = vmul.f32 %v582, %v1112
  %v1863 = vmul.f32 %v583, %v1127
  %v1864 = vmul.f32 %v584, %v1142
  %v1865 = vmul.f32 %v585, %v1157
  %v1866 = vmul.f32 %v586, %v1172
  %v1867 = vmul.f32 %v587, %v1187
  %v1868 = vmul.f32 %v588, %v1202
  %v1869 = vmul.f32 %v589, %v1217
  %v1870 = vmul.f32 %v590, %v1232
  %v1871 = vmul.f32 %v591, %v1247
  %v1872 = vmul.f32 %v592, %v1262
  %v1873 = vmul.f32 %v593, %v1277
  %v1874 = vmul.f32 %v594, %v1292
  %v1875 = vmul.f32 %v595, %v1307
  %v1876 = vmul.f32 %v596, %v1322
  %v1877 = vmul.f32 %v597, %v1337
  %v1878 = vmul.f32 %v598, %v1352
  %v1879 = vmul.f32 %v599, %v1367
  %v1880 = vmul.f32 %v600, %v1382
  %v1881 = vmul.f32 %v601, %v1397
  %v1882 = vmul.f32 %v602, %v1412
  %v1883 = vmul.f32 %v603, %v1427
  %v1884 = vmul.f32 %v604, %v1442
  %v1885 = vmul.f32 %v605, %v1457
  %v1886 = vmul.f32 %v606, %v1472
  %v1887 = vmul.f32 %v607, %v1487
  %v1888 = vmul.f32 %v608, %v1502
  %v1889 = vmul.f32 %v609, %v1517
  %v1890 = vmul.f32 %v610, %v1532
  %v1891 = vmul.f32 %v611, %v1547
  %v1892 = vmul.f32 %v612, %v1562
  %v1893 = vmul.f32 %v613, %v1577
  %v1894 = vmul.f32 %v614, %v1592
  %v1895 = vmul.f32 %v615, %v1607
  %v1896 = vmul.f32 %v616, %v1622
  %v1897 = vmul.f32 %v617, %v1637
  %v1898 = vmul.f32 %v618, %v1652
  %v1899 = vmul.f32 %v619, %v1667
  %v1900 = vmul.f32 %v620, %v1682
  %v1901 = vmul.f32 %v621, %v1697
  %v1902 = vmul.f32 %v622, %v1712
  %v1903 = vmul.f32 %v623, %v1727
  %v1904 = vmul.f32 %v624, %v1742
  %v1905 = vmul.f32 %v625, %v1757
  %v1906 = vmul.f32 %v626, %v1772
  %v1907 = vmul.f32 %v627, %v1787
  %v1908 = vmul.f32 %v628, %v1802
  %v1909 = vmul.f32 %v629, %v1817
  %v1910 = vmul.f32 %v630, %v1832
  %v1911 = vmul.f32 %v631, %v1847
  %v1912 = vxor.u32 %v1848, 2147483648
  %v1913 = vxor.u32 %v1849, 2147483648
  %v1914 = vxor.u32 %v1850, 2147483648
  %v1915 = vxor.u32 %v1851, 2147483648
  %v1916 = vxor.u32 %v1852, 2147483648
  %v1917 = vxor.u32 %v1853, 2147483648
  %v1918 = vxor.u32 %v1854, 2147483648
  %v1919 = vxor.u32 %v1855, 2147483648
  %v1920 = vxor.u32 %v1856, 2147483648
  %v1921 = vxor.u32 %v1857, 2147483648
  %v1922 = vxor.u32 %v1858, 2147483648
  %v1923 = vxor.u32 %v1859, 2147483648
  %v1924 = vxor.u32 %v1860, 2147483648
  %v1925 = vxor.u32 %v1861, 2147483648
  %v1926 = vxor.u32 %v1862, 2147483648
  %v1927 = vxor.u32 %v1863, 2147483648
  %v1928 = vxor.u32 %v1864, 2147483648
  %v1929 = vxor.u32 %v1865, 2147483648
  %v1930 = vxor.u32 %v1866, 2147483648
  %v1931 = vxor.u32 %v1867, 2147483648
  %v1932 = vxor.u32 %v1868, 2147483648
  %v1933 = vxor.u32 %v1869, 2147483648
  %v1934 = vxor.u32 %v1870, 2147483648
  %v1935 = vxor.u32 %v1871, 2147483648
  %v1936 = vxor.u32 %v1872, 2147483648
  %v1937 = vxor.u32 %v1873, 2147483648
  %v1938 = vxor.u32 %v1874, 2147483648
  %v1939 = vxor.u32 %v1875, 2147483648
  %v1940 = vxor.u32 %v1876, 2147483648
  %v1941 = vxor.u32 %v1877, 2147483648
  %v1942 = vxor.u32 %v1878, 2147483648
  %v1943 = vxor.u32 %v1879, 2147483648
  %v1944 = vxor.u32 %v1880, 2147483648
  %v1945 = vxor.u32 %v1881, 2147483648
  %v1946 = vxor.u32 %v1882, 2147483648
  %v1947 = vxor.u32 %v1883, 2147483648
  %v1948 = vxor.u32 %v1884, 2147483648
  %v1949 = vxor.u32 %v1885, 2147483648
  %v1950 = vxor.u32 %v1886, 2147483648
  %v1951 = vxor.u32 %v1887, 2147483648
  %v1952 = vxor.u32 %v1888, 2147483648
  %v1953 = vxor.u32 %v1889, 2147483648
  %v1954 = vxor.u32 %v1890, 2147483648
  %v1955 = vxor.u32 %v1891, 2147483648
  %v1956 = vxor.u32 %v1892, 2147483648
  %v1957 = vxor.u32 %v1893, 2147483648
  %v1958 = vxor.u32 %v1894, 2147483648
  %v1959 = vxor.u32 %v1895, 2147483648
  %v1960 = vxor.u32 %v1896, 2147483648
  %v1961 = vxor.u32 %v1897, 2147483648
  %v1962 = vxor.u32 %v1898, 2147483648
  %v1963 = vxor.u32 %v1899, 2147483648
  %v1964 = vxor.u32 %v1900, 2147483648
  %v1965 = vxor.u32 %v1901, 2147483648
  %v1966 = vxor.u32 %v1902, 2147483648
  %v1967 = vxor.u32 %v1903, 2147483648
  %v1968 = vxor.u32 %v1904, 2147483648
  %v1969 = vxor.u32 %v1905, 2147483648
  %v1970 = vxor.u32 %v1906, 2147483648
  %v1971 = vxor.u32 %v1907, 2147483648
  %v1972 = vxor.u32 %v1908, 2147483648
  %v1973 = vxor.u32 %v1909, 2147483648
  %v1974 = vxor.u32 %v1910, 2147483648
  %v1975 = vxor.u32 %v1911, 2147483648
  %v1976 = vmul.f32 %v1912, 1.442695
  %v1977 = vpow.pop %v1976
  %v1978 = vmul.f32 %v1913, 1.442695
  %v1979 = vpow.pop %v1978
  %v1980 = vmul.f32 %v1914, 1.442695
  %v1981 = vpow.pop %v1980
  %v1982 = vmul.f32 %v1915, 1.442695
  %v1983 = vpow.pop %v1982
  %v1984 = vmul.f32 %v1916, 1.442695
  %v1985 = vpow.pop %v1984
  %v1986 = vmul.f32 %v1917, 1.442695
  %v1987 = vpow.pop %v1986
  %v1988 = vmul.f32 %v1918, 1.442695
  %v1989 = vpow.pop %v1988
  %v1990 = vmul.f32 %v1919, 1.442695
  %v1991 = vpow.pop %v1990
  %v1992 = vmul.f32 %v1920, 1.442695
  %v1993 = vpow.pop %v1992
  %v1994 = vmul.f32 %v1921, 1.442695
  %v1995 = vpow.pop %v1994
  %v1996 = vmul.f32 %v1922, 1.442695
  %v1997 = vpow.pop %v1996
  %v1998 = vmul.f32 %v1923, 1.442695
  %v1999 = vpow.pop %v1998
  %v2000 = vmul.f32 %v1924, 1.442695
  %v2001 = vpow.pop %v2000
  %v2002 = vmul.f32 %v1925, 1.442695
  %v2003 = vpow.pop %v2002
  %v2004 = vmul.f32 %v1926, 1.442695
  %v2005 = vpow.pop %v2004
  %v2006 = vmul.f32 %v1927, 1.442695
  %v2007 = vpow.pop %v2006
  %v2008 = vmul.f32 %v1928, 1.442695
  %v2009 = vpow.pop %v2008
  %v2010 = vmul.f32 %v1929, 1.442695
  %v2011 = vpow.pop %v2010
  %v2012 = vmul.f32 %v1930, 1.442695
  %v2013 = vpow.pop %v2012
  %v2014 = vmul.f32 %v1931, 1.442695
  %v2015 = vpow.pop %v2014
  %v2016 = vmul.f32 %v1932, 1.442695
  %v2017 = vpow.pop %v2016
  %v2018 = vmul.f32 %v1933, 1.442695
  %v2019 = vpow.pop %v2018
  %v2020 = vmul.f32 %v1934, 1.442695
  %v2021 = vpow.pop %v2020
  %v2022 = vmul.f32 %v1935, 1.442695
  %v2023 = vpow.pop %v2022
  %v2024 = vmul.f32 %v1936, 1.442695
  %v2025 = vpow.pop %v2024
  %v2026 = vmul.f32 %v1937, 1.442695
  %v2027 = vpow.pop %v2026
  %v2028 = vmul.f32 %v1938, 1.442695
  %v2029 = vpow.pop %v2028
  %v2030 = vmul.f32 %v1939, 1.442695
  %v2031 = vpow.pop %v2030
  %v2032 = vmul.f32 %v1940, 1.442695
  %v2033 = vpow.pop %v2032
  %v2034 = vmul.f32 %v1941, 1.442695
  %v2035 = vpow.pop %v2034
  %v2036 = vmul.f32 %v1942, 1.442695
  %v2037 = vpow.pop %v2036
  %v2038 = vmul.f32 %v1943, 1.442695
  %v2039 = vpow.pop %v2038
  %v2040 = vmul.f32 %v1944, 1.442695
  %v2041 = vpow.pop %v2040
  %v2042 = vmul.f32 %v1945, 1.442695
  %v2043 = vpow.pop %v2042
  %v2044 = vmul.f32 %v1946, 1.442695
  %v2045 = vpow.pop %v2044
  %v2046 = vmul.f32 %v1947, 1.442695
  %v2047 = vpow.pop %v2046
  %v2048 = vmul.f32 %v1948, 1.442695
  %v2049 = vpow.pop %v2048
  %v2050 = vmul.f32 %v1949, 1.442695
  %v2051 = vpow.pop %v2050
  %v2052 = vmul.f32 %v1950, 1.442695
  %v2053 = vpow.pop %v2052
  %v2054 = vmul.f32 %v1951, 1.442695
  %v2055 = vpow.pop %v2054
  %v2056 = vmul.f32 %v1952, 1.442695
  %v2057 = vpow.pop %v2056
  %v2058 = vmul.f32 %v1953, 1.442695
  %v2059 = vpow.pop %v2058
  %v2060 = vmul.f32 %v1954, 1.442695
  %v2061 = vpow.pop %v2060
  %v2062 = vmul.f32 %v1955, 1.442695
  %v2063 = vpow.pop %v2062
  %v2064 = vmul.f32 %v1956, 1.442695
  %v2065 = vpow.pop %v2064
  %v2066 = vmul.f32 %v1957, 1.442695
  %v2067 = vpow.pop %v2066
  %v2068 = vmul.f32 %v1958, 1.442695
  %v2069 = vpow.pop %v2068
  %v2070 = vmul.f32 %v1959, 1.442695
  %v2071 = vpow.pop %v2070
  %v2072 = vmul.f32 %v1960, 1.442695
  %v2073 = vpow.pop %v2072
  %v2074 = vmul.f32 %v1961, 1.442695
  %v2075 = vpow.pop %v2074
  %v2076 = vmul.f32 %v1962, 1.442695
  %v2077 = vpow.pop %v2076
  %v2078 = vmul.f32 %v1963, 1.442695
  %v2079 = vpow.pop %v2078
  %v2080 = vmul.f32 %v1964, 1.442695
  %v2081 = vpow.pop %v2080
  %v2082 = vmul.f32 %v1965, 1.442695
  %v2083 = vpow.pop %v2082
  %v2084 = vmul.f32 %v1966, 1.442695
  %v2085 = vpow.pop %v2084
  %v2086 = vmul.f32 %v1967, 1.442695
  %v2087 = vpow.pop %v2086
  %v2088 = vmul.f32 %v1968, 1.442695
  %v2089 = vpow.pop %v2088
  %v2090 = vmul.f32 %v1969, 1.442695
  %v2091 = vpow.pop %v2090
  %v2092 = vmul.f32 %v1970, 1.442695
  %v2093 = vpow.pop %v2092
  %v2094 = vmul.f32 %v1971, 1.442695
  %v2095 = vpow.pop %v2094
  %v2096 = vmul.f32 %v1972, 1.442695
  %v2097 = vpow.pop %v2096
  %v2098 = vmul.f32 %v1973, 1.442695
  %v2099 = vpow.pop %v2098
  %v2100 = vmul.f32 %v1974, 1.442695
  %v2101 = vpow.pop %v2100
  %v2102 = vmul.f32 %v1975, 1.442695
  %v2103 = vpow.pop %v2102
  %v2104 = vadd.f32 %v1977, 1.0
  %v2105 = vadd.f32 %v1979, 1.0
  %v2106 = vadd.f32 %v1981, 1.0
  %v2107 = vadd.f32 %v1983, 1.0
  %v2108 = vadd.f32 %v1985, 1.0
  %v2109 = vadd.f32 %v1987, 1.0
  %v2110 = vadd.f32 %v1989, 1.0
  %v2111 = vadd.f32 %v1991, 1.0
  %v2112 = vadd.f32 %v1993, 1.0
  %v2113 = vadd.f32 %v1995, 1.0
  %v2114 = vadd.f32 %v1997, 1.0
  %v2115 = vadd.f32 %v1999, 1.0
  %v2116 = vadd.f32 %v2001, 1.0
  %v2117 = vadd.f32 %v2003, 1.0
  %v2118 = vadd.f32 %v2005, 1.0
  %v2119 = vadd.f32 %v2007, 1.0
  %v2120 = vadd.f32 %v2009, 1.0
  %v2121 = vadd.f32 %v2011, 1.0
  %v2122 = vadd.f32 %v2013, 1.0
  %v2123 = vadd.f32 %v2015, 1.0
  %v2124 = vadd.f32 %v2017, 1.0
  %v2125 = vadd.f32 %v2019, 1.0
  %v2126 = vadd.f32 %v2021, 1.0
  %v2127 = vadd.f32 %v2023, 1.0
  %v2128 = vadd.f32 %v2025, 1.0
  %v2129 = vadd.f32 %v2027, 1.0
  %v2130 = vadd.f32 %v2029, 1.0
  %v2131 = vadd.f32 %v2031, 1.0
  %v2132 = vadd.f32 %v2033, 1.0
  %v2133 = vadd.f32 %v2035, 1.0
  %v2134 = vadd.f32 %v2037, 1.0
  %v2135 = vadd.f32 %v2039, 1.0
  %v2136 = vadd.f32 %v2041, 1.0
  %v2137 = vadd.f32 %v2043, 1.0
  %v2138 = vadd.f32 %v2045, 1.0
  %v2139 = vadd.f32 %v2047, 1.0
  %v2140 = vadd.f32 %v2049, 1.0
  %v2141 = vadd.f32 %v2051, 1.0
  %v2142 = vadd.f32 %v2053, 1.0
  %v2143 = vadd.f32 %v2055, 1.0
  %v2144 = vadd.f32 %v2057, 1.0
  %v2145 = vadd.f32 %v2059, 1.0
  %v2146 = vadd.f32 %v2061, 1.0
  %v2147 = vadd.f32 %v2063, 1.0
  %v2148 = vadd.f32 %v2065, 1.0
  %v2149 = vadd.f32 %v2067, 1.0
  %v2150 = vadd.f32 %v2069, 1.0
  %v2151 = vadd.f32 %v2071, 1.0
  %v2152 = vadd.f32 %v2073, 1.0
  %v2153 = vadd.f32 %v2075, 1.0
  %v2154 = vadd.f32 %v2077, 1.0
  %v2155 = vadd.f32 %v2079, 1.0
  %v2156 = vadd.f32 %v2081, 1.0
  %v2157 = vadd.f32 %v2083, 1.0
  %v2158 = vadd.f32 %v2085, 1.0
  %v2159 = vadd.f32 %v2087, 1.0
  %v2160 = vadd.f32 %v2089, 1.0
  %v2161 = vadd.f32 %v2091, 1.0
  %v2162 = vadd.f32 %v2093, 1.0
  %v2163 = vadd.f32 %v2095, 1.0
  %v2164 = vadd.f32 %v2097, 1.0
  %v2165 = vadd.f32 %v2099, 1.0
  %v2166 = vadd.f32 %v2101, 1.0
  %v2167 = vadd.f32 %v2103, 1.0
  %v2168 = vrcp.pop %v2104
  %v2169 = vmul.f32 %v2104, %v2168
  %v2170 = vsub.f32 1.0, %v2169
  %v2171 = vmul.f32 %v2168, %v2170
  %v2172 = vadd.f32 %v2168, %v2171
  %vm2173 = vweird.f32 %v2104
  %vm2174 = vweird.f32 %v2168
  %vm2175 = vmor %vm2173, %vm2174
  %v2176 = vsel %vm2175, %v2168, %v2172
  %v2177 = vand.u32 2147483647, %v2104
  %vm2178 = vcmp.eq.f32.partialorder %v2177, 8.507059e+37
  %v2179 = vand.u32 %v2104, 2147483648
  %v2180 = vor.u32 1.1754944e-38, %v2179
  %v2181 = vsel %vm2178, %v2180, %v2176
  %v2182 = vmul.f32 1.0, %v2181
  %v2183 = vrcp.pop %v2105
  %v2184 = vmul.f32 %v2105, %v2183
  %v2185 = vsub.f32 1.0, %v2184
  %v2186 = vmul.f32 %v2183, %v2185
  %v2187 = vadd.f32 %v2183, %v2186
  %vm2188 = vweird.f32 %v2105
  %vm2189 = vweird.f32 %v2183
  %vm2190 = vmor %vm2188, %vm2189
  %v2191 = vsel %vm2190, %v2183, %v2187
  %v2192 = vand.u32 2147483647, %v2105
  %vm2193 = vcmp.eq.f32.partialorder %v2192, 8.507059e+37
  %v2194 = vand.u32 %v2105, 2147483648
  %v2195 = vor.u32 1.1754944e-38, %v2194
  %v2196 = vsel %vm2193, %v2195, %v2191
  %v2197 = vmul.f32 1.0, %v2196
  %v2198 = vrcp.pop %v2106
  %v2199 = vmul.f32 %v2106, %v2198
  %v2200 = vsub.f32 1.0, %v2199
  %v2201 = vmul.f32 %v2198, %v2200
  %v2202 = vadd.f32 %v2198, %v2201
  %vm2203 = vweird.f32 %v2106
  %vm2204 = vweird.f32 %v2198
  %vm2205 = vmor %vm2203, %vm2204
  %v2206 = vsel %vm2205, %v2198, %v2202
  %v2207 = vand.u32 2147483647, %v2106
  %vm2208 = vcmp.eq.f32.partialorder %v2207, 8.507059e+37
  %v2209 = vand.u32 %v2106, 2147483648
  %v2210 = vor.u32 1.1754944e-38, %v2209
  %v2211 = vsel %vm2208, %v2210, %v2206
  %v2212 = vmul.f32 1.0, %v2211
  %v2213 = vrcp.pop %v2107
  %v2214 = vmul.f32 %v2107, %v2213
  %v2215 = vsub.f32 1.0, %v2214
  %v2216 = vmul.f32 %v2213, %v2215
  %v2217 = vadd.f32 %v2213, %v2216
  %vm2218 = vweird.f32 %v2107
  %vm2219 = vweird.f32 %v2213
  %vm2220 = vmor %vm2218, %vm2219
  %v2221 = vsel %vm2220, %v2213, %v2217
  %v2222 = vand.u32 2147483647, %v2107
  %vm2223 = vcmp.eq.f32.partialorder %v2222, 8.507059e+37
  %v2224 = vand.u32 %v2107, 2147483648
  %v2225 = vor.u32 1.1754944e-38, %v2224
  %v2226 = vsel %vm2223, %v2225, %v2221
  %v2227 = vmul.f32 1.0, %v2226
  %v2228 = vrcp.pop %v2108
  %v2229 = vmul.f32 %v2108, %v2228
  %v2230 = vsub.f32 1.0, %v2229
  %v2231 = vmul.f32 %v2228, %v2230
  %v2232 = vadd.f32 %v2228, %v2231
  %vm2233 = vweird.f32 %v2108
  %vm2234 = vweird.f32 %v2228
  %vm2235 = vmor %vm2233, %vm2234
  %v2236 = vsel %vm2235, %v2228, %v2232
  %v2237 = vand.u32 2147483647, %v2108
  %vm2238 = vcmp.eq.f32.partialorder %v2237, 8.507059e+37
  %v2239 = vand.u32 %v2108, 2147483648
  %v2240 = vor.u32 1.1754944e-38, %v2239
  %v2241 = vsel %vm2238, %v2240, %v2236
  %v2242 = vmul.f32 1.0, %v2241
  %v2243 = vrcp.pop %v2109
  %v2244 = vmul.f32 %v2109, %v2243
  %v2245 = vsub.f32 1.0, %v2244
  %v2246 = vmul.f32 %v2243, %v2245
  %v2247 = vadd.f32 %v2243, %v2246
  %vm2248 = vweird.f32 %v2109
  %vm2249 = vweird.f32 %v2243
  %vm2250 = vmor %vm2248, %vm2249
  %v2251 = vsel %vm2250, %v2243, %v2247
  %v2252 = vand.u32 2147483647, %v2109
  %vm2253 = vcmp.eq.f32.partialorder %v2252, 8.507059e+37
  %v2254 = vand.u32 %v2109, 2147483648
  %v2255 = vor.u32 1.1754944e-38, %v2254
  %v2256 = vsel %vm2253, %v2255, %v2251
  %v2257 = vmul.f32 1.0, %v2256
  %v2258 = vrcp.pop %v2110
  %v2259 = vmul.f32 %v2110, %v2258
  %v2260 = vsub.f32 1.0, %v2259
  %v2261 = vmul.f32 %v2258, %v2260
  %v2262 = vadd.f32 %v2258, %v2261
  %vm2263 = vweird.f32 %v2110
  %vm2264 = vweird.f32 %v2258
  %vm2265 = vmor %vm2263, %vm2264
  %v2266 = vsel %vm2265, %v2258, %v2262
  %v2267 = vand.u32 2147483647, %v2110
  %vm2268 = vcmp.eq.f32.partialorder %v2267, 8.507059e+37
  %v2269 = vand.u32 %v2110, 2147483648
  %v2270 = vor.u32 1.1754944e-38, %v2269
  %v2271 = vsel %vm2268, %v2270, %v2266
  %v2272 = vmul.f32 1.0, %v2271
  %v2273 = vrcp.pop %v2111
  %v2274 = vmul.f32 %v2111, %v2273
  %v2275 = vsub.f32 1.0, %v2274
  %v2276 = vmul.f32 %v2273, %v2275
  %v2277 = vadd.f32 %v2273, %v2276
  %vm2278 = vweird.f32 %v2111
  %vm2279 = vweird.f32 %v2273
  %vm2280 = vmor %vm2278, %vm2279
  %v2281 = vsel %vm2280, %v2273, %v2277
  %v2282 = vand.u32 2147483647, %v2111
  %vm2283 = vcmp.eq.f32.partialorder %v2282, 8.507059e+37
  %v2284 = vand.u32 %v2111, 2147483648
  %v2285 = vor.u32 1.1754944e-38, %v2284
  %v2286 = vsel %vm2283, %v2285, %v2281
  %v2287 = vmul.f32 1.0, %v2286
  %v2288 = vrcp.pop %v2112
  %v2289 = vmul.f32 %v2112, %v2288
  %v2290 = vsub.f32 1.0, %v2289
  %v2291 = vmul.f32 %v2288, %v2290
  %v2292 = vadd.f32 %v2288, %v2291
  %vm2293 = vweird.f32 %v2112
  %vm2294 = vweird.f32 %v2288
  %vm2295 = vmor %vm2293, %vm2294
  %v2296 = vsel %vm2295, %v2288, %v2292
  %v2297 = vand.u32 2147483647, %v2112
  %vm2298 = vcmp.eq.f32.partialorder %v2297, 8.507059e+37
  %v2299 = vand.u32 %v2112, 2147483648
  %v2300 = vor.u32 1.1754944e-38, %v2299
  %v2301 = vsel %vm2298, %v2300, %v2296
  %v2302 = vmul.f32 1.0, %v2301
  %v2303 = vrcp.pop %v2113
  %v2304 = vmul.f32 %v2113, %v2303
  %v2305 = vsub.f32 1.0, %v2304
  %v2306 = vmul.f32 %v2303, %v2305
  %v2307 = vadd.f32 %v2303, %v2306
  %vm2308 = vweird.f32 %v2113
  %vm2309 = vweird.f32 %v2303
  %vm2310 = vmor %vm2308, %vm2309
  %v2311 = vsel %vm2310, %v2303, %v2307
  %v2312 = vand.u32 2147483647, %v2113
  %vm2313 = vcmp.eq.f32.partialorder %v2312, 8.507059e+37
  %v2314 = vand.u32 %v2113, 2147483648
  %v2315 = vor.u32 1.1754944e-38, %v2314
  %v2316 = vsel %vm2313, %v2315, %v2311
  %v2317 = vmul.f32 1.0, %v2316
  %v2318 = vrcp.pop %v2114
  %v2319 = vmul.f32 %v2114, %v2318
  %v2320 = vsub.f32 1.0, %v2319
  %v2321 = vmul.f32 %v2318, %v2320
  %v2322 = vadd.f32 %v2318, %v2321
  %vm2323 = vweird.f32 %v2114
  %vm2324 = vweird.f32 %v2318
  %vm2325 = vmor %vm2323, %vm2324
  %v2326 = vsel %vm2325, %v2318, %v2322
  %v2327 = vand.u32 2147483647, %v2114
  %vm2328 = vcmp.eq.f32.partialorder %v2327, 8.507059e+37
  %v2329 = vand.u32 %v2114, 2147483648
  %v2330 = vor.u32 1.1754944e-38, %v2329
  %v2331 = vsel %vm2328, %v2330, %v2326
  %v2332 = vmul.f32 1.0, %v2331
  %v2333 = vrcp.pop %v2115
  %v2334 = vmul.f32 %v2115, %v2333
  %v2335 = vsub.f32 1.0, %v2334
  %v2336 = vmul.f32 %v2333, %v2335
  %v2337 = vadd.f32 %v2333, %v2336
  %vm2338 = vweird.f32 %v2115
  %vm2339 = vweird.f32 %v2333
  %vm2340 = vmor %vm2338, %vm2339
  %v2341 = vsel %vm2340, %v2333, %v2337
  %v2342 = vand.u32 2147483647, %v2115
  %vm2343 = vcmp.eq.f32.partialorder %v2342, 8.507059e+37
  %v2344 = vand.u32 %v2115, 2147483648
  %v2345 = vor.u32 1.1754944e-38, %v2344
  %v2346 = vsel %vm2343, %v2345, %v2341
  %v2347 = vmul.f32 1.0, %v2346
  %v2348 = vrcp.pop %v2116
  %v2349 = vmul.f32 %v2116, %v2348
  %v2350 = vsub.f32 1.0, %v2349
  %v2351 = vmul.f32 %v2348, %v2350
  %v2352 = vadd.f32 %v2348, %v2351
  %vm2353 = vweird.f32 %v2116
  %vm2354 = vweird.f32 %v2348
  %vm2355 = vmor %vm2353, %vm2354
  %v2356 = vsel %vm2355, %v2348, %v2352
  %v2357 = vand.u32 2147483647, %v2116
  %vm2358 = vcmp.eq.f32.partialorder %v2357, 8.507059e+37
  %v2359 = vand.u32 %v2116, 2147483648
  %v2360 = vor.u32 1.1754944e-38, %v2359
  %v2361 = vsel %vm2358, %v2360, %v2356
  %v2362 = vmul.f32 1.0, %v2361
  %v2363 = vrcp.pop %v2117
  %v2364 = vmul.f32 %v2117, %v2363
  %v2365 = vsub.f32 1.0, %v2364
  %v2366 = vmul.f32 %v2363, %v2365
  %v2367 = vadd.f32 %v2363, %v2366
  %vm2368 = vweird.f32 %v2117
  %vm2369 = vweird.f32 %v2363
  %vm2370 = vmor %vm2368, %vm2369
  %v2371 = vsel %vm2370, %v2363, %v2367
  %v2372 = vand.u32 2147483647, %v2117
  %vm2373 = vcmp.eq.f32.partialorder %v2372, 8.507059e+37
  %v2374 = vand.u32 %v2117, 2147483648
  %v2375 = vor.u32 1.1754944e-38, %v2374
  %v2376 = vsel %vm2373, %v2375, %v2371
  %v2377 = vmul.f32 1.0, %v2376
  %v2378 = vrcp.pop %v2118
  %v2379 = vmul.f32 %v2118, %v2378
  %v2380 = vsub.f32 1.0, %v2379
  %v2381 = vmul.f32 %v2378, %v2380
  %v2382 = vadd.f32 %v2378, %v2381
  %vm2383 = vweird.f32 %v2118
  %vm2384 = vweird.f32 %v2378
  %vm2385 = vmor %vm2383, %vm2384
  %v2386 = vsel %vm2385, %v2378, %v2382
  %v2387 = vand.u32 2147483647, %v2118
  %vm2388 = vcmp.eq.f32.partialorder %v2387, 8.507059e+37
  %v2389 = vand.u32 %v2118, 2147483648
  %v2390 = vor.u32 1.1754944e-38, %v2389
  %v2391 = vsel %vm2388, %v2390, %v2386
  %v2392 = vmul.f32 1.0, %v2391
  %v2393 = vrcp.pop %v2119
  %v2394 = vmul.f32 %v2119, %v2393
  %v2395 = vsub.f32 1.0, %v2394
  %v2396 = vmul.f32 %v2393, %v2395
  %v2397 = vadd.f32 %v2393, %v2396
  %vm2398 = vweird.f32 %v2119
  %vm2399 = vweird.f32 %v2393
  %vm2400 = vmor %vm2398, %vm2399
  %v2401 = vsel %vm2400, %v2393, %v2397
  %v2402 = vand.u32 2147483647, %v2119
  %vm2403 = vcmp.eq.f32.partialorder %v2402, 8.507059e+37
  %v2404 = vand.u32 %v2119, 2147483648
  %v2405 = vor.u32 1.1754944e-38, %v2404
  %v2406 = vsel %vm2403, %v2405, %v2401
  %v2407 = vmul.f32 1.0, %v2406
  %v2408 = vrcp.pop %v2120
  %v2409 = vmul.f32 %v2120, %v2408
  %v2410 = vsub.f32 1.0, %v2409
  %v2411 = vmul.f32 %v2408, %v2410
  %v2412 = vadd.f32 %v2408, %v2411
  %vm2413 = vweird.f32 %v2120
  %vm2414 = vweird.f32 %v2408
  %vm2415 = vmor %vm2413, %vm2414
  %v2416 = vsel %vm2415, %v2408, %v2412
  %v2417 = vand.u32 2147483647, %v2120
  %vm2418 = vcmp.eq.f32.partialorder %v2417, 8.507059e+37
  %v2419 = vand.u32 %v2120, 2147483648
  %v2420 = vor.u32 1.1754944e-38, %v2419
  %v2421 = vsel %vm2418, %v2420, %v2416
  %v2422 = vmul.f32 1.0, %v2421
  %v2423 = vrcp.pop %v2121
  %v2424 = vmul.f32 %v2121, %v2423
  %v2425 = vsub.f32 1.0, %v2424
  %v2426 = vmul.f32 %v2423, %v2425
  %v2427 = vadd.f32 %v2423, %v2426
  %vm2428 = vweird.f32 %v2121
  %vm2429 = vweird.f32 %v2423
  %vm2430 = vmor %vm2428, %vm2429
  %v2431 = vsel %vm2430, %v2423, %v2427
  %v2432 = vand.u32 2147483647, %v2121
  %vm2433 = vcmp.eq.f32.partialorder %v2432, 8.507059e+37
  %v2434 = vand.u32 %v2121, 2147483648
  %v2435 = vor.u32 1.1754944e-38, %v2434
  %v2436 = vsel %vm2433, %v2435, %v2431
  %v2437 = vmul.f32 1.0, %v2436
  %v2438 = vrcp.pop %v2122
  %v2439 = vmul.f32 %v2122, %v2438
  %v2440 = vsub.f32 1.0, %v2439
  %v2441 = vmul.f32 %v2438, %v2440
  %v2442 = vadd.f32 %v2438, %v2441
  %vm2443 = vweird.f32 %v2122
  %vm2444 = vweird.f32 %v2438
  %vm2445 = vmor %vm2443, %vm2444
  %v2446 = vsel %vm2445, %v2438, %v2442
  %v2447 = vand.u32 2147483647, %v2122
  %vm2448 = vcmp.eq.f32.partialorder %v2447, 8.507059e+37
  %v2449 = vand.u32 %v2122, 2147483648
  %v2450 = vor.u32 1.1754944e-38, %v2449
  %v2451 = vsel %vm2448, %v2450, %v2446
  %v2452 = vmul.f32 1.0, %v2451
  %v2453 = vrcp.pop %v2123
  %v2454 = vmul.f32 %v2123, %v2453
  %v2455 = vsub.f32 1.0, %v2454
  %v2456 = vmul.f32 %v2453, %v2455
  %v2457 = vadd.f32 %v2453, %v2456
  %vm2458 = vweird.f32 %v2123
  %vm2459 = vweird.f32 %v2453
  %vm2460 = vmor %vm2458, %vm2459
  %v2461 = vsel %vm2460, %v2453, %v2457
  %v2462 = vand.u32 2147483647, %v2123
  %vm2463 = vcmp.eq.f32.partialorder %v2462, 8.507059e+37
  %v2464 = vand.u32 %v2123, 2147483648
  %v2465 = vor.u32 1.1754944e-38, %v2464
  %v2466 = vsel %vm2463, %v2465, %v2461
  %v2467 = vmul.f32 1.0, %v2466
  %v2468 = vrcp.pop %v2124
  %v2469 = vmul.f32 %v2124, %v2468
  %v2470 = vsub.f32 1.0, %v2469
  %v2471 = vmul.f32 %v2468, %v2470
  %v2472 = vadd.f32 %v2468, %v2471
  %vm2473 = vweird.f32 %v2124
  %vm2474 = vweird.f32 %v2468
  %vm2475 = vmor %vm2473, %vm2474
  %v2476 = vsel %vm2475, %v2468, %v2472
  %v2477 = vand.u32 2147483647, %v2124
  %vm2478 = vcmp.eq.f32.partialorder %v2477, 8.507059e+37
  %v2479 = vand.u32 %v2124, 2147483648
  %v2480 = vor.u32 1.1754944e-38, %v2479
  %v2481 = vsel %vm2478, %v2480, %v2476
  %v2482 = vmul.f32 1.0, %v2481
  %v2483 = vrcp.pop %v2125
  %v2484 = vmul.f32 %v2125, %v2483
  %v2485 = vsub.f32 1.0, %v2484
  %v2486 = vmul.f32 %v2483, %v2485
  %v2487 = vadd.f32 %v2483, %v2486
  %vm2488 = vweird.f32 %v2125
  %vm2489 = vweird.f32 %v2483
  %vm2490 = vmor %vm2488, %vm2489
  %v2491 = vsel %vm2490, %v2483, %v2487
  %v2492 = vand.u32 2147483647, %v2125
  %vm2493 = vcmp.eq.f32.partialorder %v2492, 8.507059e+37
  %v2494 = vand.u32 %v2125, 2147483648
  %v2495 = vor.u32 1.1754944e-38, %v2494
  %v2496 = vsel %vm2493, %v2495, %v2491
  %v2497 = vmul.f32 1.0, %v2496
  %v2498 = vrcp.pop %v2126
  %v2499 = vmul.f32 %v2126, %v2498
  %v2500 = vsub.f32 1.0, %v2499
  %v2501 = vmul.f32 %v2498, %v2500
  %v2502 = vadd.f32 %v2498, %v2501
  %vm2503 = vweird.f32 %v2126
  %vm2504 = vweird.f32 %v2498
  %vm2505 = vmor %vm2503, %vm2504
  %v2506 = vsel %vm2505, %v2498, %v2502
  %v2507 = vand.u32 2147483647, %v2126
  %vm2508 = vcmp.eq.f32.partialorder %v2507, 8.507059e+37
  %v2509 = vand.u32 %v2126, 2147483648
  %v2510 = vor.u32 1.1754944e-38, %v2509
  %v2511 = vsel %vm2508, %v2510, %v2506
  %v2512 = vmul.f32 1.0, %v2511
  %v2513 = vrcp.pop %v2127
  %v2514 = vmul.f32 %v2127, %v2513
  %v2515 = vsub.f32 1.0, %v2514
  %v2516 = vmul.f32 %v2513, %v2515
  %v2517 = vadd.f32 %v2513, %v2516
  %vm2518 = vweird.f32 %v2127
  %vm2519 = vweird.f32 %v2513
  %vm2520 = vmor %vm2518, %vm2519
  %v2521 = vsel %vm2520, %v2513, %v2517
  %v2522 = vand.u32 2147483647, %v2127
  %vm2523 = vcmp.eq.f32.partialorder %v2522, 8.507059e+37
  %v2524 = vand.u32 %v2127, 2147483648
  %v2525 = vor.u32 1.1754944e-38, %v2524
  %v2526 = vsel %vm2523, %v2525, %v2521
  %v2527 = vmul.f32 1.0, %v2526
  %v2528 = vrcp.pop %v2128
  %v2529 = vmul.f32 %v2128, %v2528
  %v2530 = vsub.f32 1.0, %v2529
  %v2531 = vmul.f32 %v2528, %v2530
  %v2532 = vadd.f32 %v2528, %v2531
  %vm2533 = vweird.f32 %v2128
  %vm2534 = vweird.f32 %v2528
  %vm2535 = vmor %vm2533, %vm2534
  %v2536 = vsel %vm2535, %v2528, %v2532
  %v2537 = vand.u32 2147483647, %v2128
  %vm2538 = vcmp.eq.f32.partialorder %v2537, 8.507059e+37
  %v2539 = vand.u32 %v2128, 2147483648
  %v2540 = vor.u32 1.1754944e-38, %v2539
  %v2541 = vsel %vm2538, %v2540, %v2536
  %v2542 = vmul.f32 1.0, %v2541
  %v2543 = vrcp.pop %v2129
  %v2544 = vmul.f32 %v2129, %v2543
  %v2545 = vsub.f32 1.0, %v2544
  %v2546 = vmul.f32 %v2543, %v2545
  %v2547 = vadd.f32 %v2543, %v2546
  %vm2548 = vweird.f32 %v2129
  %vm2549 = vweird.f32 %v2543
  %vm2550 = vmor %vm2548, %vm2549
  %v2551 = vsel %vm2550, %v2543, %v2547
  %v2552 = vand.u32 2147483647, %v2129
  %vm2553 = vcmp.eq.f32.partialorder %v2552, 8.507059e+37
  %v2554 = vand.u32 %v2129, 2147483648
  %v2555 = vor.u32 1.1754944e-38, %v2554
  %v2556 = vsel %vm2553, %v2555, %v2551
  %v2557 = vmul.f32 1.0, %v2556
  %v2558 = vrcp.pop %v2130
  %v2559 = vmul.f32 %v2130, %v2558
  %v2560 = vsub.f32 1.0, %v2559
  %v2561 = vmul.f32 %v2558, %v2560
  %v2562 = vadd.f32 %v2558, %v2561
  %vm2563 = vweird.f32 %v2130
  %vm2564 = vweird.f32 %v2558
  %vm2565 = vmor %vm2563, %vm2564
  %v2566 = vsel %vm2565, %v2558, %v2562
  %v2567 = vand.u32 2147483647, %v2130
  %vm2568 = vcmp.eq.f32.partialorder %v2567, 8.507059e+37
  %v2569 = vand.u32 %v2130, 2147483648
  %v2570 = vor.u32 1.1754944e-38, %v2569
  %v2571 = vsel %vm2568, %v2570, %v2566
  %v2572 = vmul.f32 1.0, %v2571
  %v2573 = vrcp.pop %v2131
  %v2574 = vmul.f32 %v2131, %v2573
  %v2575 = vsub.f32 1.0, %v2574
  %v2576 = vmul.f32 %v2573, %v2575
  %v2577 = vadd.f32 %v2573, %v2576
  %vm2578 = vweird.f32 %v2131
  %vm2579 = vweird.f32 %v2573
  %vm2580 = vmor %vm2578, %vm2579
  %v2581 = vsel %vm2580, %v2573, %v2577
  %v2582 = vand.u32 2147483647, %v2131
  %vm2583 = vcmp.eq.f32.partialorder %v2582, 8.507059e+37
  %v2584 = vand.u32 %v2131, 2147483648
  %v2585 = vor.u32 1.1754944e-38, %v2584
  %v2586 = vsel %vm2583, %v2585, %v2581
  %v2587 = vmul.f32 1.0, %v2586
  %v2588 = vrcp.pop %v2132
  %v2589 = vmul.f32 %v2132, %v2588
  %v2590 = vsub.f32 1.0, %v2589
  %v2591 = vmul.f32 %v2588, %v2590
  %v2592 = vadd.f32 %v2588, %v2591
  %vm2593 = vweird.f32 %v2132
  %vm2594 = vweird.f32 %v2588
  %vm2595 = vmor %vm2593, %vm2594
  %v2596 = vsel %vm2595, %v2588, %v2592
  %v2597 = vand.u32 2147483647, %v2132
  %vm2598 = vcmp.eq.f32.partialorder %v2597, 8.507059e+37
  %v2599 = vand.u32 %v2132, 2147483648
  %v2600 = vor.u32 1.1754944e-38, %v2599
  %v2601 = vsel %vm2598, %v2600, %v2596
  %v2602 = vmul.f32 1.0, %v2601
  %v2603 = vrcp.pop %v2133
  %v2604 = vmul.f32 %v2133, %v2603
  %v2605 = vsub.f32 1.0, %v2604
  %v2606 = vmul.f32 %v2603, %v2605
  %v2607 = vadd.f32 %v2603, %v2606
  %vm2608 = vweird.f32 %v2133
  %vm2609 = vweird.f32 %v2603
  %vm2610 = vmor %vm2608, %vm2609
  %v2611 = vsel %vm2610, %v2603, %v2607
  %v2612 = vand.u32 2147483647, %v2133
  %vm2613 = vcmp.eq.f32.partialorder %v2612, 8.507059e+37
  %v2614 = vand.u32 %v2133, 2147483648
  %v2615 = vor.u32 1.1754944e-38, %v2614
  %v2616 = vsel %vm2613, %v2615, %v2611
  %v2617 = vmul.f32 1.0, %v2616
  %v2618 = vrcp.pop %v2134
  %v2619 = vmul.f32 %v2134, %v2618
  %v2620 = vsub.f32 1.0, %v2619
  %v2621 = vmul.f32 %v2618, %v2620
  %v2622 = vadd.f32 %v2618, %v2621
  %vm2623 = vweird.f32 %v2134
  %vm2624 = vweird.f32 %v2618
  %vm2625 = vmor %vm2623, %vm2624
  %v2626 = vsel %vm2625, %v2618, %v2622
  %v2627 = vand.u32 2147483647, %v2134
  %vm2628 = vcmp.eq.f32.partialorder %v2627, 8.507059e+37
  %v2629 = vand.u32 %v2134, 2147483648
  %v2630 = vor.u32 1.1754944e-38, %v2629
  %v2631 = vsel %vm2628, %v2630, %v2626
  %v2632 = vmul.f32 1.0, %v2631
  %v2633 = vrcp.pop %v2135
  %v2634 = vmul.f32 %v2135, %v2633
  %v2635 = vsub.f32 1.0, %v2634
  %v2636 = vmul.f32 %v2633, %v2635
  %v2637 = vadd.f32 %v2633, %v2636
  %vm2638 = vweird.f32 %v2135
  %vm2639 = vweird.f32 %v2633
  %vm2640 = vmor %vm2638, %vm2639
  %v2641 = vsel %vm2640, %v2633, %v2637
  %v2642 = vand.u32 2147483647, %v2135
  %vm2643 = vcmp.eq.f32.partialorder %v2642, 8.507059e+37
  %v2644 = vand.u32 %v2135, 2147483648
  %v2645 = vor.u32 1.1754944e-38, %v2644
  %v2646 = vsel %vm2643, %v2645, %v2641
  %v2647 = vmul.f32 1.0, %v2646
  %v2648 = vrcp.pop %v2136
  %v2649 = vmul.f32 %v2136, %v2648
  %v2650 = vsub.f32 1.0, %v2649
  %v2651 = vmul.f32 %v2648, %v2650
  %v2652 = vadd.f32 %v2648, %v2651
  %vm2653 = vweird.f32 %v2136
  %vm2654 = vweird.f32 %v2648
  %vm2655 = vmor %vm2653, %vm2654
  %v2656 = vsel %vm2655, %v2648, %v2652
  %v2657 = vand.u32 2147483647, %v2136
  %vm2658 = vcmp.eq.f32.partialorder %v2657, 8.507059e+37
  %v2659 = vand.u32 %v2136, 2147483648
  %v2660 = vor.u32 1.1754944e-38, %v2659
  %v2661 = vsel %vm2658, %v2660, %v2656
  %v2662 = vmul.f32 1.0, %v2661
  %v2663 = vrcp.pop %v2137
  %v2664 = vmul.f32 %v2137, %v2663
  %v2665 = vsub.f32 1.0, %v2664
  %v2666 = vmul.f32 %v2663, %v2665
  %v2667 = vadd.f32 %v2663, %v2666
  %vm2668 = vweird.f32 %v2137
  %vm2669 = vweird.f32 %v2663
  %vm2670 = vmor %vm2668, %vm2669
  %v2671 = vsel %vm2670, %v2663, %v2667
  %v2672 = vand.u32 2147483647, %v2137
  %vm2673 = vcmp.eq.f32.partialorder %v2672, 8.507059e+37
  %v2674 = vand.u32 %v2137, 2147483648
  %v2675 = vor.u32 1.1754944e-38, %v2674
  %v2676 = vsel %vm2673, %v2675, %v2671
  %v2677 = vmul.f32 1.0, %v2676
  %v2678 = vrcp.pop %v2138
  %v2679 = vmul.f32 %v2138, %v2678
  %v2680 = vsub.f32 1.0, %v2679
  %v2681 = vmul.f32 %v2678, %v2680
  %v2682 = vadd.f32 %v2678, %v2681
  %vm2683 = vweird.f32 %v2138
  %vm2684 = vweird.f32 %v2678
  %vm2685 = vmor %vm2683, %vm2684
  %v2686 = vsel %vm2685, %v2678, %v2682
  %v2687 = vand.u32 2147483647, %v2138
  %vm2688 = vcmp.eq.f32.partialorder %v2687, 8.507059e+37
  %v2689 = vand.u32 %v2138, 2147483648
  %v2690 = vor.u32 1.1754944e-38, %v2689
  %v2691 = vsel %vm2688, %v2690, %v2686
  %v2692 = vmul.f32 1.0, %v2691
  %v2693 = vrcp.pop %v2139
  %v2694 = vmul.f32 %v2139, %v2693
  %v2695 = vsub.f32 1.0, %v2694
  %v2696 = vmul.f32 %v2693, %v2695
  %v2697 = vadd.f32 %v2693, %v2696
  %vm2698 = vweird.f32 %v2139
  %vm2699 = vweird.f32 %v2693
  %vm2700 = vmor %vm2698, %vm2699
  %v2701 = vsel %vm2700, %v2693, %v2697
  %v2702 = vand.u32 2147483647, %v2139
  %vm2703 = vcmp.eq.f32.partialorder %v2702, 8.507059e+37
  %v2704 = vand.u32 %v2139, 2147483648
  %v2705 = vor.u32 1.1754944e-38, %v2704
  %v2706 = vsel %vm2703, %v2705, %v2701
  %v2707 = vmul.f32 1.0, %v2706
  %v2708 = vrcp.pop %v2140
  %v2709 = vmul.f32 %v2140, %v2708
  %v2710 = vsub.f32 1.0, %v2709
  %v2711 = vmul.f32 %v2708, %v2710
  %v2712 = vadd.f32 %v2708, %v2711
  %vm2713 = vweird.f32 %v2140
  %vm2714 = vweird.f32 %v2708
  %vm2715 = vmor %vm2713, %vm2714
  %v2716 = vsel %vm2715, %v2708, %v2712
  %v2717 = vand.u32 2147483647, %v2140
  %vm2718 = vcmp.eq.f32.partialorder %v2717, 8.507059e+37
  %v2719 = vand.u32 %v2140, 2147483648
  %v2720 = vor.u32 1.1754944e-38, %v2719
  %v2721 = vsel %vm2718, %v2720, %v2716
  %v2722 = vmul.f32 1.0, %v2721
  %v2723 = vrcp.pop %v2141
  %v2724 = vmul.f32 %v2141, %v2723
  %v2725 = vsub.f32 1.0, %v2724
  %v2726 = vmul.f32 %v2723, %v2725
  %v2727 = vadd.f32 %v2723, %v2726
  %vm2728 = vweird.f32 %v2141
  %vm2729 = vweird.f32 %v2723
  %vm2730 = vmor %vm2728, %vm2729
  %v2731 = vsel %vm2730, %v2723, %v2727
  %v2732 = vand.u32 2147483647, %v2141
  %vm2733 = vcmp.eq.f32.partialorder %v2732, 8.507059e+37
  %v2734 = vand.u32 %v2141, 2147483648
  %v2735 = vor.u32 1.1754944e-38, %v2734
  %v2736 = vsel %vm2733, %v2735, %v2731
  %v2737 = vmul.f32 1.0, %v2736
  %v2738 = vrcp.pop %v2142
  %v2739 = vmul.f32 %v2142, %v2738
  %v2740 = vsub.f32 1.0, %v2739
  %v2741 = vmul.f32 %v2738, %v2740
  %v2742 = vadd.f32 %v2738, %v2741
  %vm2743 = vweird.f32 %v2142
  %vm2744 = vweird.f32 %v2738
  %vm2745 = vmor %vm2743, %vm2744
  %v2746 = vsel %vm2745, %v2738, %v2742
  %v2747 = vand.u32 2147483647, %v2142
  %vm2748 = vcmp.eq.f32.partialorder %v2747, 8.507059e+37
  %v2749 = vand.u32 %v2142, 2147483648
  %v2750 = vor.u32 1.1754944e-38, %v2749
  %v2751 = vsel %vm2748, %v2750, %v2746
  %v2752 = vmul.f32 1.0, %v2751
  %v2753 = vrcp.pop %v2143
  %v2754 = vmul.f32 %v2143, %v2753
  %v2755 = vsub.f32 1.0, %v2754
  %v2756 = vmul.f32 %v2753, %v2755
  %v2757 = vadd.f32 %v2753, %v2756
  %vm2758 = vweird.f32 %v2143
  %vm2759 = vweird.f32 %v2753
  %vm2760 = vmor %vm2758, %vm2759
  %v2761 = vsel %vm2760, %v2753, %v2757
  %v2762 = vand.u32 2147483647, %v2143
  %vm2763 = vcmp.eq.f32.partialorder %v2762, 8.507059e+37
  %v2764 = vand.u32 %v2143, 2147483648
  %v2765 = vor.u32 1.1754944e-38, %v2764
  %v2766 = vsel %vm2763, %v2765, %v2761
  %v2767 = vmul.f32 1.0, %v2766
  %v2768 = vrcp.pop %v2144
  %v2769 = vmul.f32 %v2144, %v2768
  %v2770 = vsub.f32 1.0, %v2769
  %v2771 = vmul.f32 %v2768, %v2770
  %v2772 = vadd.f32 %v2768, %v2771
  %vm2773 = vweird.f32 %v2144
  %vm2774 = vweird.f32 %v2768
  %vm2775 = vmor %vm2773, %vm2774
  %v2776 = vsel %vm2775, %v2768, %v2772
  %v2777 = vand.u32 2147483647, %v2144
  %vm2778 = vcmp.eq.f32.partialorder %v2777, 8.507059e+37
  %v2779 = vand.u32 %v2144, 2147483648
  %v2780 = vor.u32 1.1754944e-38, %v2779
  %v2781 = vsel %vm2778, %v2780, %v2776
  %v2782 = vmul.f32 1.0, %v2781
  %v2783 = vrcp.pop %v2145
  %v2784 = vmul.f32 %v2145, %v2783
  %v2785 = vsub.f32 1.0, %v2784
  %v2786 = vmul.f32 %v2783, %v2785
  %v2787 = vadd.f32 %v2783, %v2786
  %vm2788 = vweird.f32 %v2145
  %vm2789 = vweird.f32 %v2783
  %vm2790 = vmor %vm2788, %vm2789
  %v2791 = vsel %vm2790, %v2783, %v2787
  %v2792 = vand.u32 2147483647, %v2145
  %vm2793 = vcmp.eq.f32.partialorder %v2792, 8.507059e+37
  %v2794 = vand.u32 %v2145, 2147483648
  %v2795 = vor.u32 1.1754944e-38, %v2794
  %v2796 = vsel %vm2793, %v2795, %v2791
  %v2797 = vmul.f32 1.0, %v2796
  %v2798 = vrcp.pop %v2146
  %v2799 = vmul.f32 %v2146, %v2798
  %v2800 = vsub.f32 1.0, %v2799
  %v2801 = vmul.f32 %v2798, %v2800
  %v2802 = vadd.f32 %v2798, %v2801
  %vm2803 = vweird.f32 %v2146
  %vm2804 = vweird.f32 %v2798
  %vm2805 = vmor %vm2803, %vm2804
  %v2806 = vsel %vm2805, %v2798, %v2802
  %v2807 = vand.u32 2147483647, %v2146
  %vm2808 = vcmp.eq.f32.partialorder %v2807, 8.507059e+37
  %v2809 = vand.u32 %v2146, 2147483648
  %v2810 = vor.u32 1.1754944e-38, %v2809
  %v2811 = vsel %vm2808, %v2810, %v2806
  %v2812 = vmul.f32 1.0, %v2811
  %v2813 = vrcp.pop %v2147
  %v2814 = vmul.f32 %v2147, %v2813
  %v2815 = vsub.f32 1.0, %v2814
  %v2816 = vmul.f32 %v2813, %v2815
  %v2817 = vadd.f32 %v2813, %v2816
  %vm2818 = vweird.f32 %v2147
  %vm2819 = vweird.f32 %v2813
  %vm2820 = vmor %vm2818, %vm2819
  %v2821 = vsel %vm2820, %v2813, %v2817
  %v2822 = vand.u32 2147483647, %v2147
  %vm2823 = vcmp.eq.f32.partialorder %v2822, 8.507059e+37
  %v2824 = vand.u32 %v2147, 2147483648
  %v2825 = vor.u32 1.1754944e-38, %v2824
  %v2826 = vsel %vm2823, %v2825, %v2821
  %v2827 = vmul.f32 1.0, %v2826
  %v2828 = vrcp.pop %v2148
  %v2829 = vmul.f32 %v2148, %v2828
  %v2830 = vsub.f32 1.0, %v2829
  %v2831 = vmul.f32 %v2828, %v2830
  %v2832 = vadd.f32 %v2828, %v2831
  %vm2833 = vweird.f32 %v2148
  %vm2834 = vweird.f32 %v2828
  %vm2835 = vmor %vm2833, %vm2834
  %v2836 = vsel %vm2835, %v2828, %v2832
  %v2837 = vand.u32 2147483647, %v2148
  %vm2838 = vcmp.eq.f32.partialorder %v2837, 8.507059e+37
  %v2839 = vand.u32 %v2148, 2147483648
  %v2840 = vor.u32 1.1754944e-38, %v2839
  %v2841 = vsel %vm2838, %v2840, %v2836
  %v2842 = vmul.f32 1.0, %v2841
  %v2843 = vrcp.pop %v2149
  %v2844 = vmul.f32 %v2149, %v2843
  %v2845 = vsub.f32 1.0, %v2844
  %v2846 = vmul.f32 %v2843, %v2845
  %v2847 = vadd.f32 %v2843, %v2846
  %vm2848 = vweird.f32 %v2149
  %vm2849 = vweird.f32 %v2843
  %vm2850 = vmor %vm2848, %vm2849
  %v2851 = vsel %vm2850, %v2843, %v2847
  %v2852 = vand.u32 2147483647, %v2149
  %vm2853 = vcmp.eq.f32.partialorder %v2852, 8.507059e+37
  %v2854 = vand.u32 %v2149, 2147483648
  %v2855 = vor.u32 1.1754944e-38, %v2854
  %v2856 = vsel %vm2853, %v2855, %v2851
  %v2857 = vmul.f32 1.0, %v2856
  %v2858 = vrcp.pop %v2150
  %v2859 = vmul.f32 %v2150, %v2858
  %v2860 = vsub.f32 1.0, %v2859
  %v2861 = vmul.f32 %v2858, %v2860
  %v2862 = vadd.f32 %v2858, %v2861
  %vm2863 = vweird.f32 %v2150
  %vm2864 = vweird.f32 %v2858
  %vm2865 = vmor %vm2863, %vm2864
  %v2866 = vsel %vm2865, %v2858, %v2862
  %v2867 = vand.u32 2147483647, %v2150
  %vm2868 = vcmp.eq.f32.partialorder %v2867, 8.507059e+37
  %v2869 = vand.u32 %v2150, 2147483648
  %v2870 = vor.u32 1.1754944e-38, %v2869
  %v2871 = vsel %vm2868, %v2870, %v2866
  %v2872 = vmul.f32 1.0, %v2871
  %v2873 = vrcp.pop %v2151
  %v2874 = vmul.f32 %v2151, %v2873
  %v2875 = vsub.f32 1.0, %v2874
  %v2876 = vmul.f32 %v2873, %v2875
  %v2877 = vadd.f32 %v2873, %v2876
  %vm2878 = vweird.f32 %v2151
  %vm2879 = vweird.f32 %v2873
  %vm2880 = vmor %vm2878, %vm2879
  %v2881 = vsel %vm2880, %v2873, %v2877
  %v2882 = vand.u32 2147483647, %v2151
  %vm2883 = vcmp.eq.f32.partialorder %v2882, 8.507059e+37
  %v2884 = vand.u32 %v2151, 2147483648
  %v2885 = vor.u32 1.1754944e-38, %v2884
  %v2886 = vsel %vm2883, %v2885, %v2881
  %v2887 = vmul.f32 1.0, %v2886
  %v2888 = vrcp.pop %v2152
  %v2889 = vmul.f32 %v2152, %v2888
  %v2890 = vsub.f32 1.0, %v2889
  %v2891 = vmul.f32 %v2888, %v2890
  %v2892 = vadd.f32 %v2888, %v2891
  %vm2893 = vweird.f32 %v2152
  %vm2894 = vweird.f32 %v2888
  %vm2895 = vmor %vm2893, %vm2894
  %v2896 = vsel %vm2895, %v2888, %v2892
  %v2897 = vand.u32 2147483647, %v2152
  %vm2898 = vcmp.eq.f32.partialorder %v2897, 8.507059e+37
  %v2899 = vand.u32 %v2152, 2147483648
  %v2900 = vor.u32 1.1754944e-38, %v2899
  %v2901 = vsel %vm2898, %v2900, %v2896
  %v2902 = vmul.f32 1.0, %v2901
  %v2903 = vrcp.pop %v2153
  %v2904 = vmul.f32 %v2153, %v2903
  %v2905 = vsub.f32 1.0, %v2904
  %v2906 = vmul.f32 %v2903, %v2905
  %v2907 = vadd.f32 %v2903, %v2906
  %vm2908 = vweird.f32 %v2153
  %vm2909 = vweird.f32 %v2903
  %vm2910 = vmor %vm2908, %vm2909
  %v2911 = vsel %vm2910, %v2903, %v2907
  %v2912 = vand.u32 2147483647, %v2153
  %vm2913 = vcmp.eq.f32.partialorder %v2912, 8.507059e+37
  %v2914 = vand.u32 %v2153, 2147483648
  %v2915 = vor.u32 1.1754944e-38, %v2914
  %v2916 = vsel %vm2913, %v2915, %v2911
  %v2917 = vmul.f32 1.0, %v2916
  %v2918 = vrcp.pop %v2154
  %v2919 = vmul.f32 %v2154, %v2918
  %v2920 = vsub.f32 1.0, %v2919
  %v2921 = vmul.f32 %v2918, %v2920
  %v2922 = vadd.f32 %v2918, %v2921
  %vm2923 = vweird.f32 %v2154
  %vm2924 = vweird.f32 %v2918
  %vm2925 = vmor %vm2923, %vm2924
  %v2926 = vsel %vm2925, %v2918, %v2922
  %v2927 = vand.u32 2147483647, %v2154
  %vm2928 = vcmp.eq.f32.partialorder %v2927, 8.507059e+37
  %v2929 = vand.u32 %v2154, 2147483648
  %v2930 = vor.u32 1.1754944e-38, %v2929
  %v2931 = vsel %vm2928, %v2930, %v2926
  %v2932 = vmul.f32 1.0, %v2931
  %v2933 = vrcp.pop %v2155
  %v2934 = vmul.f32 %v2155, %v2933
  %v2935 = vsub.f32 1.0, %v2934
  %v2936 = vmul.f32 %v2933, %v2935
  %v2937 = vadd.f32 %v2933, %v2936
  %vm2938 = vweird.f32 %v2155
  %vm2939 = vweird.f32 %v2933
  %vm2940 = vmor %vm2938, %vm2939
  %v2941 = vsel %vm2940, %v2933, %v2937
  %v2942 = vand.u32 2147483647, %v2155
  %vm2943 = vcmp.eq.f32.partialorder %v2942, 8.507059e+37
  %v2944 = vand.u32 %v2155, 2147483648
  %v2945 = vor.u32 1.1754944e-38, %v2944
  %v2946 = vsel %vm2943, %v2945, %v2941
  %v2947 = vmul.f32 1.0, %v2946
  %v2948 = vrcp.pop %v2156
  %v2949 = vmul.f32 %v2156, %v2948
  %v2950 = vsub.f32 1.0, %v2949
  %v2951 = vmul.f32 %v2948, %v2950
  %v2952 = vadd.f32 %v2948, %v2951
  %vm2953 = vweird.f32 %v2156
  %vm2954 = vweird.f32 %v2948
  %vm2955 = vmor %vm2953, %vm2954
  %v2956 = vsel %vm2955, %v2948, %v2952
  %v2957 = vand.u32 2147483647, %v2156
  %vm2958 = vcmp.eq.f32.partialorder %v2957, 8.507059e+37
  %v2959 = vand.u32 %v2156, 2147483648
  %v2960 = vor.u32 1.1754944e-38, %v2959
  %v2961 = vsel %vm2958, %v2960, %v2956
  %v2962 = vmul.f32 1.0, %v2961
  %v2963 = vrcp.pop %v2157
  %v2964 = vmul.f32 %v2157, %v2963
  %v2965 = vsub.f32 1.0, %v2964
  %v2966 = vmul.f32 %v2963, %v2965
  %v2967 = vadd.f32 %v2963, %v2966
  %vm2968 = vweird.f32 %v2157
  %vm2969 = vweird.f32 %v2963
  %vm2970 = vmor %vm2968, %vm2969
  %v2971 = vsel %vm2970, %v2963, %v2967
  %v2972 = vand.u32 2147483647, %v2157
  %vm2973 = vcmp.eq.f32.partialorder %v2972, 8.507059e+37
  %v2974 = vand.u32 %v2157, 2147483648
  %v2975 = vor.u32 1.1754944e-38, %v2974
  %v2976 = vsel %vm2973, %v2975, %v2971
  %v2977 = vmul.f32 1.0, %v2976
  %v2978 = vrcp.pop %v2158
  %v2979 = vmul.f32 %v2158, %v2978
  %v2980 = vsub.f32 1.0, %v2979
  %v2981 = vmul.f32 %v2978, %v2980
  %v2982 = vadd.f32 %v2978, %v2981
  %vm2983 = vweird.f32 %v2158
  %vm2984 = vweird.f32 %v2978
  %vm2985 = vmor %vm2983, %vm2984
  %v2986 = vsel %vm2985, %v2978, %v2982
  %v2987 = vand.u32 2147483647, %v2158
  %vm2988 = vcmp.eq.f32.partialorder %v2987, 8.507059e+37
  %v2989 = vand.u32 %v2158, 2147483648
  %v2990 = vor.u32 1.1754944e-38, %v2989
  %v2991 = vsel %vm2988, %v2990, %v2986
  %v2992 = vmul.f32 1.0, %v2991
  %v2993 = vrcp.pop %v2159
  %v2994 = vmul.f32 %v2159, %v2993
  %v2995 = vsub.f32 1.0, %v2994
  %v2996 = vmul.f32 %v2993, %v2995
  %v2997 = vadd.f32 %v2993, %v2996
  %vm2998 = vweird.f32 %v2159
  %vm2999 = vweird.f32 %v2993
  %vm3000 = vmor %vm2998, %vm2999
  %v3001 = vsel %vm3000, %v2993, %v2997
  %v3002 = vand.u32 2147483647, %v2159
  %vm3003 = vcmp.eq.f32.partialorder %v3002, 8.507059e+37
  %v3004 = vand.u32 %v2159, 2147483648
  %v3005 = vor.u32 1.1754944e-38, %v3004
  %v3006 = vsel %vm3003, %v3005, %v3001
  %v3007 = vmul.f32 1.0, %v3006
  %v3008 = vrcp.pop %v2160
  %v3009 = vmul.f32 %v2160, %v3008
  %v3010 = vsub.f32 1.0, %v3009
  %v3011 = vmul.f32 %v3008, %v3010
  %v3012 = vadd.f32 %v3008, %v3011
  %vm3013 = vweird.f32 %v2160
  %vm3014 = vweird.f32 %v3008
  %vm3015 = vmor %vm3013, %vm3014
  %v3016 = vsel %vm3015, %v3008, %v3012
  %v3017 = vand.u32 2147483647, %v2160
  %vm3018 = vcmp.eq.f32.partialorder %v3017, 8.507059e+37
  %v3019 = vand.u32 %v2160, 2147483648
  %v3020 = vor.u32 1.1754944e-38, %v3019
  %v3021 = vsel %vm3018, %v3020, %v3016
  %v3022 = vmul.f32 1.0, %v3021
  %v3023 = vrcp.pop %v2161
  %v3024 = vmul.f32 %v2161, %v3023
  %v3025 = vsub.f32 1.0, %v3024
  %v3026 = vmul.f32 %v3023, %v3025
  %v3027 = vadd.f32 %v3023, %v3026
  %vm3028 = vweird.f32 %v2161
  %vm3029 = vweird.f32 %v3023
  %vm3030 = vmor %vm3028, %vm3029
  %v3031 = vsel %vm3030, %v3023, %v3027
  %v3032 = vand.u32 2147483647, %v2161
  %vm3033 = vcmp.eq.f32.partialorder %v3032, 8.507059e+37
  %v3034 = vand.u32 %v2161, 2147483648
  %v3035 = vor.u32 1.1754944e-38, %v3034
  %v3036 = vsel %vm3033, %v3035, %v3031
  %v3037 = vmul.f32 1.0, %v3036
  %v3038 = vrcp.pop %v2162
  %v3039 = vmul.f32 %v2162, %v3038
  %v3040 = vsub.f32 1.0, %v3039
  %v3041 = vmul.f32 %v3038, %v3040
  %v3042 = vadd.f32 %v3038, %v3041
  %vm3043 = vweird.f32 %v2162
  %vm3044 = vweird.f32 %v3038
  %vm3045 = vmor %vm3043, %vm3044
  %v3046 = vsel %vm3045, %v3038, %v3042
  %v3047 = vand.u32 2147483647, %v2162
  %vm3048 = vcmp.eq.f32.partialorder %v3047, 8.507059e+37
  %v3049 = vand.u32 %v2162, 2147483648
  %v3050 = vor.u32 1.1754944e-38, %v3049
  %v3051 = vsel %vm3048, %v3050, %v3046
  %v3052 = vmul.f32 1.0, %v3051
  %v3053 = vrcp.pop %v2163
  %v3054 = vmul.f32 %v2163, %v3053
  %v3055 = vsub.f32 1.0, %v3054
  %v3056 = vmul.f32 %v3053, %v3055
  %v3057 = vadd.f32 %v3053, %v3056
  %vm3058 = vweird.f32 %v2163
  %vm3059 = vweird.f32 %v3053
  %vm3060 = vmor %vm3058, %vm3059
  %v3061 = vsel %vm3060, %v3053, %v3057
  %v3062 = vand.u32 2147483647, %v2163
  %vm3063 = vcmp.eq.f32.partialorder %v3062, 8.507059e+37
  %v3064 = vand.u32 %v2163, 2147483648
  %v3065 = vor.u32 1.1754944e-38, %v3064
  %v3066 = vsel %vm3063, %v3065, %v3061
  %v3067 = vmul.f32 1.0, %v3066
  %v3068 = vrcp.pop %v2164
  %v3069 = vmul.f32 %v2164, %v3068
  %v3070 = vsub.f32 1.0, %v3069
  %v3071 = vmul.f32 %v3068, %v3070
  %v3072 = vadd.f32 %v3068, %v3071
  %vm3073 = vweird.f32 %v2164
  %vm3074 = vweird.f32 %v3068
  %vm3075 = vmor %vm3073, %vm3074
  %v3076 = vsel %vm3075, %v3068, %v3072
  %v3077 = vand.u32 2147483647, %v2164
  %vm3078 = vcmp.eq.f32.partialorder %v3077, 8.507059e+37
  %v3079 = vand.u32 %v2164, 2147483648
  %v3080 = vor.u32 1.1754944e-38, %v3079
  %v3081 = vsel %vm3078, %v3080, %v3076
  %v3082 = vmul.f32 1.0, %v3081
  %v3083 = vrcp.pop %v2165
  %v3084 = vmul.f32 %v2165, %v3083
  %v3085 = vsub.f32 1.0, %v3084
  %v3086 = vmul.f32 %v3083, %v3085
  %v3087 = vadd.f32 %v3083, %v3086
  %vm3088 = vweird.f32 %v2165
  %vm3089 = vweird.f32 %v3083
  %vm3090 = vmor %vm3088, %vm3089
  %v3091 = vsel %vm3090, %v3083, %v3087
  %v3092 = vand.u32 2147483647, %v2165
  %vm3093 = vcmp.eq.f32.partialorder %v3092, 8.507059e+37
  %v3094 = vand.u32 %v2165, 2147483648
  %v3095 = vor.u32 1.1754944e-38, %v3094
  %v3096 = vsel %vm3093, %v3095, %v3091
  %v3097 = vmul.f32 1.0, %v3096
  %v3098 = vrcp.pop %v2166
  %v3099 = vmul.f32 %v2166, %v3098
  %v3100 = vsub.f32 1.0, %v3099
  %v3101 = vmul.f32 %v3098, %v3100
  %v3102 = vadd.f32 %v3098, %v3101
  %vm3103 = vweird.f32 %v2166
  %vm3104 = vweird.f32 %v3098
  %vm3105 = vmor %vm3103, %vm3104
  %v3106 = vsel %vm3105, %v3098, %v3102
  %v3107 = vand.u32 2147483647, %v2166
  %vm3108 = vcmp.eq.f32.partialorder %v3107, 8.507059e+37
  %v3109 = vand.u32 %v2166, 2147483648
  %v3110 = vor.u32 1.1754944e-38, %v3109
  %v3111 = vsel %vm3108, %v3110, %v3106
  %v3112 = vmul.f32 1.0, %v3111
  %v3113 = vrcp.pop %v2167
  %v3114 = vmul.f32 %v2167, %v3113
  %v3115 = vsub.f32 1.0, %v3114
  %v3116 = vmul.f32 %v3113, %v3115
  %v3117 = vadd.f32 %v3113, %v3116
  %vm3118 = vweird.f32 %v2167
  %vm3119 = vweird.f32 %v3113
  %vm3120 = vmor %vm3118, %vm3119
  %v3121 = vsel %vm3120, %v3113, %v3117
  %v3122 = vand.u32 2147483647, %v2167
  %vm3123 = vcmp.eq.f32.partialorder %v3122, 8.507059e+37
  %v3124 = vand.u32 %v2167, 2147483648
  %v3125 = vor.u32 1.1754944e-38, %v3124
  %v3126 = vsel %vm3123, %v3125, %v3121
  %v3127 = vmul.f32 1.0, %v3126
  %v3128 = vmul.f32 %v1848, %v2182
  %v3129 = vmul.f32 %v1849, %v2197
  %v3130 = vmul.f32 %v1850, %v2212
  %v3131 = vmul.f32 %v1851, %v2227
  %v3132 = vmul.f32 %v1852, %v2242
  %v3133 = vmul.f32 %v1853, %v2257
  %v3134 = vmul.f32 %v1854, %v2272
  %v3135 = vmul.f32 %v1855, %v2287
  %v3136 = vmul.f32 %v1856, %v2302
  %v3137 = vmul.f32 %v1857, %v2317
  %v3138 = vmul.f32 %v1858, %v2332
  %v3139 = vmul.f32 %v1859, %v2347
  %v3140 = vmul.f32 %v1860, %v2362
  %v3141 = vmul.f32 %v1861, %v2377
  %v3142 = vmul.f32 %v1862, %v2392
  %v3143 = vmul.f32 %v1863, %v2407
  %v3144 = vmul.f32 %v1864, %v2422
  %v3145 = vmul.f32 %v1865, %v2437
  %v3146 = vmul.f32 %v1866, %v2452
  %v3147 = vmul.f32 %v1867, %v2467
  %v3148 = vmul.f32 %v1868, %v2482
  %v3149 = vmul.f32 %v1869, %v2497
  %v3150 = vmul.f32 %v1870, %v2512
  %v3151 = vmul.f32 %v1871, %v2527
  %v3152 = vmul.f32 %v1872, %v2542
  %v3153 = vmul.f32 %v1873, %v2557
  %v3154 = vmul.f32 %v1874, %v2572
  %v3155 = vmul.f32 %v1875, %v2587
  %v3156 = vmul.f32 %v1876, %v2602
  %v3157 = vmul.f32 %v1877, %v2617
  %v3158 = vmul.f32 %v1878, %v2632
  %v3159 = vmul.f32 %v1879, %v2647
  %v3160 = vmul.f32 %v1880, %v2662
  %v3161 = vmul.f32 %v1881, %v2677
  %v3162 = vmul.f32 %v1882, %v2692
  %v3163 = vmul.f32 %v1883, %v2707
  %v3164 = vmul.f32 %v1884, %v2722
  %v3165 = vmul.f32 %v1885, %v2737
  %v3166 = vmul.f32 %v1886, %v2752
  %v3167 = vmul.f32 %v1887, %v2767
  %v3168 = vmul.f32 %v1888, %v2782
  %v3169 = vmul.f32 %v1889, %v2797
  %v3170 = vmul.f32 %v1890, %v2812
  %v3171 = vmul.f32 %v1891, %v2827
  %v3172 = vmul.f32 %v1892, %v2842
  %v3173 = vmul.f32 %v1893, %v2857
  %v3174 = vmul.f32 %v1894, %v2872
  %v3175 = vmul.f32 %v1895, %v2887
  %v3176 = vmul.f32 %v1896, %v2902
  %v3177 = vmul.f32 %v1897, %v2917
  %v3178 = vmul.f32 %v1898, %v2932
  %v3179 = vmul.f32 %v1899, %v2947
  %v3180 = vmul.f32 %v1900, %v2962
  %v3181 = vmul.f32 %v1901, %v2977
  %v3182 = vmul.f32 %v1902, %v2992
  %v3183 = vmul.f32 %v1903, %v3007
  %v3184 = vmul.f32 %v1904, %v3022
  %v3185 = vmul.f32 %v1905, %v3037
  %v3186 = vmul.f32 %v1906, %v3052
  %v3187 = vmul.f32 %v1907, %v3067
  %v3188 = vmul.f32 %v1908, %v3082
  %v3189 = vmul.f32 %v1909, %v3097
  %v3190 = vmul.f32 %v1910, %v3112
  %v3191 = vmul.f32 %v1911, %v3127
  %vm3192 = vcmask 64512
  %3193 = vst.msk [vmem:[%s7] sm:$0xff] %vm3192, %v3128
  %3194 = vst.msk [vmem:[%s7 + $0x8] sm:$0xff] %vm3192, %v3129
  %3195 = vst.msk [vmem:[%s7 + $0x10] sm:$0xff] %vm3192, %v3130
  %3196 = vst.msk [vmem:[%s7 + $0x18] sm:$0xff] %vm3192, %v3131
  %3197 = vst.msk [vmem:[%s7 + $0x20] sm:$0xff] %vm3192, %v3132
  %3198 = vst.msk [vmem:[%s7 + $0x28] sm:$0xff] %vm3192, %v3133
  %3199 = vst.msk [vmem:[%s7 + $0x30] sm:$0xff] %vm3192, %v3134
  %3200 = vst.msk [vmem:[%s7 + $0x38] sm:$0xff] %vm3192, %v3135
  %3201 = vst.msk [vmem:[%s7 + $0x40] sm:$0xff] %vm3192, %v3136
  %3202 = vst.msk [vmem:[%s7 + $0x48] sm:$0xff] %vm3192, %v3137
  %3203 = vst.msk [vmem:[%s7 + $0x50] sm:$0xff] %vm3192, %v3138
  %3204 = vst.msk [vmem:[%s7 + $0x58] sm:$0xff] %vm3192, %v3139
  %3205 = vst.msk [vmem:[%s7 + $0x60] sm:$0xff] %vm3192, %v3140
  %3206 = vst.msk [vmem:[%s7 + $0x68] sm:$0xff] %vm3192, %v3141
  %3207 = vst.msk [vmem:[%s7 + $0x70] sm:$0xff] %vm3192, %v3142
  %3208 = vst.msk [vmem:[%s7 + $0x78] sm:$0xff] %vm3192, %v3143
  %3209 = vst.msk [vmem:[%s7 + $0x80] sm:$0xff] %vm3192, %v3144
  %3210 = vst.msk [vmem:[%s7 + $0x88] sm:$0xff] %vm3192, %v3145
  %3211 = vst.msk [vmem:[%s7 + $0x90] sm:$0xff] %vm3192, %v3146
  %3212 = vst.msk [vmem:[%s7 + $0x98] sm:$0xff] %vm3192, %v3147
  %3213 = vst.msk [vmem:[%s7 + $0xa0] sm:$0xff] %vm3192, %v3148
  %3214 = vst.msk [vmem:[%s7 + $0xa8] sm:$0xff] %vm3192, %v3149
  %3215 = vst.msk [vmem:[%s7 + $0xb0] sm:$0xff] %vm3192, %v3150
  %3216 = vst.msk [vmem:[%s7 + $0xb8] sm:$0xff] %vm3192, %v3151
  %3217 = vst.msk [vmem:[%s7 + $0xc0] sm:$0xff] %vm3192, %v3152
  %3218 = vst.msk [vmem:[%s7 + $0xc8] sm:$0xff] %vm3192, %v3153
  %3219 = vst.msk [vmem:[%s7 + $0xd0] sm:$0xff] %vm3192, %v3154
  %3220 = vst.msk [vmem:[%s7 + $0xd8] sm:$0xff] %vm3192, %v3155
  %3221 = vst.msk [vmem:[%s7 + $0xe0] sm:$0xff] %vm3192, %v3156
  %3222 = vst.msk [vmem:[%s7 + $0xe8] sm:$0xff] %vm3192, %v3157
  %3223 = vst.msk [vmem:[%s7 + $0xf0] sm:$0xff] %vm3192, %v3158
  %3224 = vst.msk [vmem:[%s7 + $0xf8] sm:$0xff] %vm3192, %v3159
  %3225 = vst.msk [vmem:[%s7 + $0x100] sm:$0xff] %vm3192, %v3160
  %3226 = vst.msk [vmem:[%s7 + $0x108] sm:$0xff] %vm3192, %v3161
  %3227 = vst.msk [vmem:[%s7 + $0x110] sm:$0xff] %vm3192, %v3162
  %3228 = vst.msk [vmem:[%s7 + $0x118] sm:$0xff] %vm3192, %v3163
  %3229 = vst.msk [vmem:[%s7 + $0x120] sm:$0xff] %vm3192, %v3164
  %3230 = vst.msk [vmem:[%s7 + $0x128] sm:$0xff] %vm3192, %v3165
  %3231 = vst.msk [vmem:[%s7 + $0x130] sm:$0xff] %vm3192, %v3166
  %3232 = vst.msk [vmem:[%s7 + $0x138] sm:$0xff] %vm3192, %v3167
  %3233 = vst.msk [vmem:[%s7 + $0x140] sm:$0xff] %vm3192, %v3168
  %3234 = vst.msk [vmem:[%s7 + $0x148] sm:$0xff] %vm3192, %v3169
  %3235 = vst.msk [vmem:[%s7 + $0x150] sm:$0xff] %vm3192, %v3170
  %3236 = vst.msk [vmem:[%s7 + $0x158] sm:$0xff] %vm3192, %v3171
  %3237 = vst.msk [vmem:[%s7 + $0x160] sm:$0xff] %vm3192, %v3172
  %3238 = vst.msk [vmem:[%s7 + $0x168] sm:$0xff] %vm3192, %v3173
  %3239 = vst.msk [vmem:[%s7 + $0x170] sm:$0xff] %vm3192, %v3174
  %3240 = vst.msk [vmem:[%s7 + $0x178] sm:$0xff] %vm3192, %v3175
  %3241 = vst.msk [vmem:[%s7 + $0x180] sm:$0xff] %vm3192, %v3176
  %3242 = vst.msk [vmem:[%s7 + $0x188] sm:$0xff] %vm3192, %v3177
  %3243 = vst.msk [vmem:[%s7 + $0x190] sm:$0xff] %vm3192, %v3178
  %3244 = vst.msk [vmem:[%s7 + $0x198] sm:$0xff] %vm3192, %v3179
  %3245 = vst.msk [vmem:[%s7 + $0x1a0] sm:$0xff] %vm3192, %v3180
  %3246 = vst.msk [vmem:[%s7 + $0x1a8] sm:$0xff] %vm3192, %v3181
  %3247 = vst.msk [vmem:[%s7 + $0x1b0] sm:$0xff] %vm3192, %v3182
  %3248 = vst.msk [vmem:[%s7 + $0x1b8] sm:$0xff] %vm3192, %v3183
  %3249 = vst.msk [vmem:[%s7 + $0x1c0] sm:$0xff] %vm3192, %v3184
  %3250 = vst.msk [vmem:[%s7 + $0x1c8] sm:$0xff] %vm3192, %v3185
  %3251 = vst.msk [vmem:[%s7 + $0x1d0] sm:$0xff] %vm3192, %v3186
  %3252 = vst.msk [vmem:[%s7 + $0x1d8] sm:$0xff] %vm3192, %v3187
  %3253 = vst.msk [vmem:[%s7 + $0x1e0] sm:$0xff] %vm3192, %v3188
  %3254 = vst.msk [vmem:[%s7 + $0x1e8] sm:$0xff] %vm3192, %v3189
  %3255 = vst.msk [vmem:[%s7 + $0x1f0] sm:$0xff] %vm3192, %v3190
  %3256 = vst.msk [vmem:[%s7 + $0x1f8] sm:$0xff] %vm3192, %v3191
  %v3257 = vld [vmem:[%s4] sm:$0xff]
  %v3258 = vld [vmem:[%s4 + $0x8] sm:$0xff]
  %3259 = vmatpush.msra.mxu0 0.0
  %3260 = vmatpush.msra.mxu0 0.0
  %3261 = vmatpush.msra.mxu0 0.0
  %3262 = vmatpush.msra.mxu0 0.0
  %3263 = vmatpush.msra.mxu0 0.0
  %3264 = vmatpush.msra.mxu0 0.0
  %3265 = vmatpush.msra.mxu0 0.0
  %3266 = vmatpush.msra.mxu0 0.0
  %3267 = vmatpush.msra.mxu0 0.0
  %3268 = vmatpush.msra.mxu0 0.0
  %3269 = vmatpush.msra.mxu0 0.0
  %3270 = vmatpush.msra.mxu0 0.0
  %3271 = vmatpush.msra.mxu0 0.0
  %3272 = vmatpush.msra.mxu0 0.0
  %3273 = vmatpush.msra.mxu0 %v3258
  %3274 = vmatpush.msra.mxu0 %v3257
  %3275 = vmatmul.f32.gmra.mxu0 %v96
  %v3276 = vpop.f32.mrf.mxu0
  %v3277 = vadd.f32 0.0, %v3276
  %3278 = vmatmul.f32.gmra.mxu0 %v99
  %v3279 = vpop.f32.mrf.mxu0
  %v3280 = vadd.f32 0.0, %v3279
  %3281 = vmatmul.f32.gmra.mxu0 %v102
  %v3282 = vpop.f32.mrf.mxu0
  %v3283 = vadd.f32 0.0, %v3282
  %3284 = vmatmul.f32.gmra.mxu0 %v105
  %v3285 = vpop.f32.mrf.mxu0
  %v3286 = vadd.f32 0.0, %v3285
  %3287 = vmatmul.f32.gmra.mxu0 %v108
  %v3288 = vpop.f32.mrf.mxu0
  %v3289 = vadd.f32 0.0, %v3288
  %3290 = vmatmul.f32.gmra.mxu0 %v111
  %v3291 = vpop.f32.mrf.mxu0
  %v3292 = vadd.f32 0.0, %v3291
  %3293 = vmatmul.f32.gmra.mxu0 %v114
  %v3294 = vpop.f32.mrf.mxu0
  %v3295 = vadd.f32 0.0, %v3294
  %3296 = vmatmul.f32.gmra.mxu0 %v117
  %v3297 = vpop.f32.mrf.mxu0
  %v3298 = vadd.f32 0.0, %v3297
  %3299 = vmatmul.f32.gmra.mxu0 %v120
  %v3300 = vpop.f32.mrf.mxu0
  %v3301 = vadd.f32 0.0, %v3300
  %3302 = vmatmul.f32.gmra.mxu0 %v123
  %v3303 = vpop.f32.mrf.mxu0
  %v3304 = vadd.f32 0.0, %v3303
  %3305 = vmatmul.f32.gmra.mxu0 %v126
  %v3306 = vpop.f32.mrf.mxu0
  %v3307 = vadd.f32 0.0, %v3306
  %3308 = vmatmul.f32.gmra.mxu0 %v129
  %v3309 = vpop.f32.mrf.mxu0
  %v3310 = vadd.f32 0.0, %v3309
  %3311 = vmatmul.f32.gmra.mxu0 %v132
  %v3312 = vpop.f32.mrf.mxu0
  %v3313 = vadd.f32 0.0, %v3312
  %3314 = vmatmul.f32.gmra.mxu0 %v135
  %v3315 = vpop.f32.mrf.mxu0
  %v3316 = vadd.f32 0.0, %v3315
  %3317 = vmatmul.f32.gmra.mxu0 %v138
  %v3318 = vpop.f32.mrf.mxu0
  %v3319 = vadd.f32 0.0, %v3318
  %3320 = vmatmul.f32.gmra.mxu0 %v141
  %v3321 = vpop.f32.mrf.mxu0
  %v3322 = vadd.f32 0.0, %v3321
  %3323 = vmatmul.f32.gmra.mxu0 %v144
  %v3324 = vpop.f32.mrf.mxu0
  %v3325 = vadd.f32 0.0, %v3324
  %3326 = vmatmul.f32.gmra.mxu0 %v147
  %v3327 = vpop.f32.mrf.mxu0
  %v3328 = vadd.f32 0.0, %v3327
  %3329 = vmatmul.f32.gmra.mxu0 %v150
  %v3330 = vpop.f32.mrf.mxu0
  %v3331 = vadd.f32 0.0, %v3330
  %3332 = vmatmul.f32.gmra.mxu0 %v153
  %v3333 = vpop.f32.mrf.mxu0
  %v3334 = vadd.f32 0.0, %v3333
  %3335 = vmatmul.f32.gmra.mxu0 %v156
  %v3336 = vpop.f32.mrf.mxu0
  %v3337 = vadd.f32 0.0, %v3336
  %3338 = vmatmul.f32.gmra.mxu0 %v159
  %v3339 = vpop.f32.mrf.mxu0
  %v3340 = vadd.f32 0.0, %v3339
  %3341 = vmatmul.f32.gmra.mxu0 %v162
  %v3342 = vpop.f32.mrf.mxu0
  %v3343 = vadd.f32 0.0, %v3342
  %3344 = vmatmul.f32.gmra.mxu0 %v165
  %v3345 = vpop.f32.mrf.mxu0
  %v3346 = vadd.f32 0.0, %v3345
  %3347 = vmatmul.f32.gmra.mxu0 %v168
  %v3348 = vpop.f32.mrf.mxu0
  %v3349 = vadd.f32 0.0, %v3348
  %3350 = vmatmul.f32.gmra.mxu0 %v171
  %v3351 = vpop.f32.mrf.mxu0
  %v3352 = vadd.f32 0.0, %v3351
  %3353 = vmatmul.f32.gmra.mxu0 %v174
  %v3354 = vpop.f32.mrf.mxu0
  %v3355 = vadd.f32 0.0, %v3354
  %3356 = vmatmul.f32.gmra.mxu0 %v177
  %v3357 = vpop.f32.mrf.mxu0
  %v3358 = vadd.f32 0.0, %v3357
  %3359 = vmatmul.f32.gmra.mxu0 %v180
  %v3360 = vpop.f32.mrf.mxu0
  %v3361 = vadd.f32 0.0, %v3360
  %3362 = vmatmul.f32.gmra.mxu0 %v183
  %v3363 = vpop.f32.mrf.mxu0
  %v3364 = vadd.f32 0.0, %v3363
  %3365 = vmatmul.f32.gmra.mxu0 %v186
  %v3366 = vpop.f32.mrf.mxu0
  %v3367 = vadd.f32 0.0, %v3366
  %3368 = vmatmul.f32.gmra.mxu0 %v189
  %v3369 = vpop.f32.mrf.mxu0
  %v3370 = vadd.f32 0.0, %v3369
  %3371 = vmatmul.f32.gmra.mxu0 %v192
  %v3372 = vpop.f32.mrf.mxu0
  %v3373 = vadd.f32 0.0, %v3372
  %3374 = vmatmul.f32.gmra.mxu0 %v195
  %v3375 = vpop.f32.mrf.mxu0
  %v3376 = vadd.f32 0.0, %v3375
  %3377 = vmatmul.f32.gmra.mxu0 %v198
  %v3378 = vpop.f32.mrf.mxu0
  %v3379 = vadd.f32 0.0, %v3378
  %3380 = vmatmul.f32.gmra.mxu0 %v201
  %v3381 = vpop.f32.mrf.mxu0
  %v3382 = vadd.f32 0.0, %v3381
  %3383 = vmatmul.f32.gmra.mxu0 %v204
  %v3384 = vpop.f32.mrf.mxu0
  %v3385 = vadd.f32 0.0, %v3384
  %3386 = vmatmul.f32.gmra.mxu0 %v207
  %v3387 = vpop.f32.mrf.mxu0
  %v3388 = vadd.f32 0.0, %v3387
  %3389 = vmatmul.f32.gmra.mxu0 %v210
  %v3390 = vpop.f32.mrf.mxu0
  %v3391 = vadd.f32 0.0, %v3390
  %3392 = vmatmul.f32.gmra.mxu0 %v213
  %v3393 = vpop.f32.mrf.mxu0
  %v3394 = vadd.f32 0.0, %v3393
  %3395 = vmatmul.f32.gmra.mxu0 %v216
  %v3396 = vpop.f32.mrf.mxu0
  %v3397 = vadd.f32 0.0, %v3396
  %3398 = vmatmul.f32.gmra.mxu0 %v219
  %v3399 = vpop.f32.mrf.mxu0
  %v3400 = vadd.f32 0.0, %v3399
  %3401 = vmatmul.f32.gmra.mxu0 %v222
  %v3402 = vpop.f32.mrf.mxu0
  %v3403 = vadd.f32 0.0, %v3402
  %3404 = vmatmul.f32.gmra.mxu0 %v225
  %v3405 = vpop.f32.mrf.mxu0
  %v3406 = vadd.f32 0.0, %v3405
  %3407 = vmatmul.f32.gmra.mxu0 %v228
  %v3408 = vpop.f32.mrf.mxu0
  %v3409 = vadd.f32 0.0, %v3408
  %3410 = vmatmul.f32.gmra.mxu0 %v231
  %v3411 = vpop.f32.mrf.mxu0
  %v3412 = vadd.f32 0.0, %v3411
  %3413 = vmatmul.f32.gmra.mxu0 %v234
  %v3414 = vpop.f32.mrf.mxu0
  %v3415 = vadd.f32 0.0, %v3414
  %3416 = vmatmul.f32.gmra.mxu0 %v237
  %v3417 = vpop.f32.mrf.mxu0
  %v3418 = vadd.f32 0.0, %v3417
  %3419 = vmatmul.f32.gmra.mxu0 %v240
  %v3420 = vpop.f32.mrf.mxu0
  %v3421 = vadd.f32 0.0, %v3420
  %3422 = vmatmul.f32.gmra.mxu0 %v243
  %v3423 = vpop.f32.mrf.mxu0
  %v3424 = vadd.f32 0.0, %v3423
  %3425 = vmatmul.f32.gmra.mxu0 %v246
  %v3426 = vpop.f32.mrf.mxu0
  %v3427 = vadd.f32 0.0, %v3426
  %3428 = vmatmul.f32.gmra.mxu0 %v249
  %v3429 = vpop.f32.mrf.mxu0
  %v3430 = vadd.f32 0.0, %v3429
  %3431 = vmatmul.f32.gmra.mxu0 %v252
  %v3432 = vpop.f32.mrf.mxu0
  %v3433 = vadd.f32 0.0, %v3432
  %3434 = vmatmul.f32.gmra.mxu0 %v255
  %v3435 = vpop.f32.mrf.mxu0
  %v3436 = vadd.f32 0.0, %v3435
  %3437 = vmatmul.f32.gmra.mxu0 %v258
  %v3438 = vpop.f32.mrf.mxu0
  %v3439 = vadd.f32 0.0, %v3438
  %3440 = vmatmul.f32.gmra.mxu0 %v261
  %v3441 = vpop.f32.mrf.mxu0
  %v3442 = vadd.f32 0.0, %v3441
  %3443 = vmatmul.f32.gmra.mxu0 %v264
  %v3444 = vpop.f32.mrf.mxu0
  %v3445 = vadd.f32 0.0, %v3444
  %3446 = vmatmul.f32.gmra.mxu0 %v267
  %v3447 = vpop.f32.mrf.mxu0
  %v3448 = vadd.f32 0.0, %v3447
  %3449 = vmatmul.f32.gmra.mxu0 %v270
  %v3450 = vpop.f32.mrf.mxu0
  %v3451 = vadd.f32 0.0, %v3450
  %3452 = vmatmul.f32.gmra.mxu0 %v273
  %v3453 = vpop.f32.mrf.mxu0
  %v3454 = vadd.f32 0.0, %v3453
  %3455 = vmatmul.f32.gmra.mxu0 %v276
  %v3456 = vpop.f32.mrf.mxu0
  %v3457 = vadd.f32 0.0, %v3456
  %3458 = vmatmul.f32.gmra.mxu0 %v279
  %v3459 = vpop.f32.mrf.mxu0
  %v3460 = vadd.f32 0.0, %v3459
  %3461 = vmatmul.f32.gmra.mxu0 %v282
  %v3462 = vpop.f32.mrf.mxu0
  %v3463 = vadd.f32 0.0, %v3462
  %3464 = vmatmul.f32.gmra.mxu0 %v285
  %v3465 = vpop.f32.mrf.mxu0
  %v3466 = vadd.f32 0.0, %v3465
  %3467 = vdwg.mxu0
  %v3468 = vld [vmem:[%s5] sm:$0x1]
  %v3470 = vperm.slane %v3468, 0
  %v3472 = vmul.f32 %v3277, %v3470
  %v3473 = vmul.f32 %v3280, %v3470
  %v3474 = vmul.f32 %v3283, %v3470
  %v3475 = vmul.f32 %v3286, %v3470
  %v3476 = vmul.f32 %v3289, %v3470
  %v3477 = vmul.f32 %v3292, %v3470
  %v3478 = vmul.f32 %v3295, %v3470
  %v3479 = vmul.f32 %v3298, %v3470
  %v3480 = vmul.f32 %v3301, %v3470
  %v3481 = vmul.f32 %v3304, %v3470
  %v3482 = vmul.f32 %v3307, %v3470
  %v3483 = vmul.f32 %v3310, %v3470
  %v3484 = vmul.f32 %v3313, %v3470
  %v3485 = vmul.f32 %v3316, %v3470
  %v3486 = vmul.f32 %v3319, %v3470
  %v3487 = vmul.f32 %v3322, %v3470
  %v3488 = vmul.f32 %v3325, %v3470
  %v3489 = vmul.f32 %v3328, %v3470
  %v3490 = vmul.f32 %v3331, %v3470
  %v3491 = vmul.f32 %v3334, %v3470
  %v3492 = vmul.f32 %v3337, %v3470
  %v3493 = vmul.f32 %v3340, %v3470
  %v3494 = vmul.f32 %v3343, %v3470
  %v3495 = vmul.f32 %v3346, %v3470
  %v3496 = vmul.f32 %v3349, %v3470
  %v3497 = vmul.f32 %v3352, %v3470
  %v3498 = vmul.f32 %v3355, %v3470
  %v3499 = vmul.f32 %v3358, %v3470
  %v3500 = vmul.f32 %v3361, %v3470
  %v3501 = vmul.f32 %v3364, %v3470
  %v3502 = vmul.f32 %v3367, %v3470
  %v3503 = vmul.f32 %v3370, %v3470
  %v3504 = vmul.f32 %v3373, %v3470
  %v3505 = vmul.f32 %v3376, %v3470
  %v3506 = vmul.f32 %v3379, %v3470
  %v3507 = vmul.f32 %v3382, %v3470
  %v3508 = vmul.f32 %v3385, %v3470
  %v3509 = vmul.f32 %v3388, %v3470
  %v3510 = vmul.f32 %v3391, %v3470
  %v3511 = vmul.f32 %v3394, %v3470
  %v3512 = vmul.f32 %v3397, %v3470
  %v3513 = vmul.f32 %v3400, %v3470
  %v3514 = vmul.f32 %v3403, %v3470
  %v3515 = vmul.f32 %v3406, %v3470
  %v3516 = vmul.f32 %v3409, %v3470
  %v3517 = vmul.f32 %v3412, %v3470
  %v3518 = vmul.f32 %v3415, %v3470
  %v3519 = vmul.f32 %v3418, %v3470
  %v3520 = vmul.f32 %v3421, %v3470
  %v3521 = vmul.f32 %v3424, %v3470
  %v3522 = vmul.f32 %v3427, %v3470
  %v3523 = vmul.f32 %v3430, %v3470
  %v3524 = vmul.f32 %v3433, %v3470
  %v3525 = vmul.f32 %v3436, %v3470
  %v3526 = vmul.f32 %v3439, %v3470
  %v3527 = vmul.f32 %v3442, %v3470
  %v3528 = vmul.f32 %v3445, %v3470
  %v3529 = vmul.f32 %v3448, %v3470
  %v3530 = vmul.f32 %v3451, %v3470
  %v3531 = vmul.f32 %v3454, %v3470
  %v3532 = vmul.f32 %v3457, %v3470
  %v3533 = vmul.f32 %v3460, %v3470
  %v3534 = vmul.f32 %v3463, %v3470
  %v3535 = vmul.f32 %v3466, %v3470
  %v3536 = vld [vmem:[%s6] sm:$0x1]
  %v3538 = vperm.slane %v3536, 0
  %v3540 = vadd.f32 %v3472, %v3538
  %v3541 = vadd.f32 %v3473, %v3538
  %v3542 = vadd.f32 %v3474, %v3538
  %v3543 = vadd.f32 %v3475, %v3538
  %v3544 = vadd.f32 %v3476, %v3538
  %v3545 = vadd.f32 %v3477, %v3538
  %v3546 = vadd.f32 %v3478, %v3538
  %v3547 = vadd.f32 %v3479, %v3538
  %v3548 = vadd.f32 %v3480, %v3538
  %v3549 = vadd.f32 %v3481, %v3538
  %v3550 = vadd.f32 %v3482, %v3538
  %v3551 = vadd.f32 %v3483, %v3538
  %v3552 = vadd.f32 %v3484, %v3538
  %v3553 = vadd.f32 %v3485, %v3538
  %v3554 = vadd.f32 %v3486, %v3538
  %v3555 = vadd.f32 %v3487, %v3538
  %v3556 = vadd.f32 %v3488, %v3538
  %v3557 = vadd.f32 %v3489, %v3538
  %v3558 = vadd.f32 %v3490, %v3538
  %v3559 = vadd.f32 %v3491, %v3538
  %v3560 = vadd.f32 %v3492, %v3538
  %v3561 = vadd.f32 %v3493, %v3538
  %v3562 = vadd.f32 %v3494, %v3538
  %v3563 = vadd.f32 %v3495, %v3538
  %v3564 = vadd.f32 %v3496, %v3538
  %v3565 = vadd.f32 %v3497, %v3538
  %v3566 = vadd.f32 %v3498, %v3538
  %v3567 = vadd.f32 %v3499, %v3538
  %v3568 = vadd.f32 %v3500, %v3538
  %v3569 = vadd.f32 %v3501, %v3538
  %v3570 = vadd.f32 %v3502, %v3538
  %v3571 = vadd.f32 %v3503, %v3538
  %v3572 = vadd.f32 %v3504, %v3538
  %v3573 = vadd.f32 %v3505, %v3538
  %v3574 = vadd.f32 %v3506, %v3538
  %v3575 = vadd.f32 %v3507, %v3538
  %v3576 = vadd.f32 %v3508, %v3538
  %v3577 = vadd.f32 %v3509, %v3538
  %v3578 = vadd.f32 %v3510, %v3538
  %v3579 = vadd.f32 %v3511, %v3538
  %v3580 = vadd.f32 %v3512, %v3538
  %v3581 = vadd.f32 %v3513, %v3538
  %v3582 = vadd.f32 %v3514, %v3538
  %v3583 = vadd.f32 %v3515, %v3538
  %v3584 = vadd.f32 %v3516, %v3538
  %v3585 = vadd.f32 %v3517, %v3538
  %v3586 = vadd.f32 %v3518, %v3538
  %v3587 = vadd.f32 %v3519, %v3538
  %v3588 = vadd.f32 %v3520, %v3538
  %v3589 = vadd.f32 %v3521, %v3538
  %v3590 = vadd.f32 %v3522, %v3538
  %v3591 = vadd.f32 %v3523, %v3538
  %v3592 = vadd.f32 %v3524, %v3538
  %v3593 = vadd.f32 %v3525, %v3538
  %v3594 = vadd.f32 %v3526, %v3538
  %v3595 = vadd.f32 %v3527, %v3538
  %v3596 = vadd.f32 %v3528, %v3538
  %v3597 = vadd.f32 %v3529, %v3538
  %v3598 = vadd.f32 %v3530, %v3538
  %v3599 = vadd.f32 %v3531, %v3538
  %v3600 = vadd.f32 %v3532, %v3538
  %v3601 = vadd.f32 %v3533, %v3538
  %v3602 = vadd.f32 %v3534, %v3538
  %v3603 = vadd.f32 %v3535, %v3538
  %v3604 = vxor.u32 %v3540, 2147483648
  %v3605 = vxor.u32 %v3541, 2147483648
  %v3606 = vxor.u32 %v3542, 2147483648
  %v3607 = vxor.u32 %v3543, 2147483648
  %v3608 = vxor.u32 %v3544, 2147483648
  %v3609 = vxor.u32 %v3545, 2147483648
  %v3610 = vxor.u32 %v3546, 2147483648
  %v3611 = vxor.u32 %v3547, 2147483648
  %v3612 = vxor.u32 %v3548, 2147483648
  %v3613 = vxor.u32 %v3549, 2147483648
  %v3614 = vxor.u32 %v3550, 2147483648
  %v3615 = vxor.u32 %v3551, 2147483648
  %v3616 = vxor.u32 %v3552, 2147483648
  %v3617 = vxor.u32 %v3553, 2147483648
  %v3618 = vxor.u32 %v3554, 2147483648
  %v3619 = vxor.u32 %v3555, 2147483648
  %v3620 = vxor.u32 %v3556, 2147483648
  %v3621 = vxor.u32 %v3557, 2147483648
  %v3622 = vxor.u32 %v3558, 2147483648
  %v3623 = vxor.u32 %v3559, 2147483648
  %v3624 = vxor.u32 %v3560, 2147483648
  %v3625 = vxor.u32 %v3561, 2147483648
  %v3626 = vxor.u32 %v3562, 2147483648
  %v3627 = vxor.u32 %v3563, 2147483648
  %v3628 = vxor.u32 %v3564, 2147483648
  %v3629 = vxor.u32 %v3565, 2147483648
  %v3630 = vxor.u32 %v3566, 2147483648
  %v3631 = vxor.u32 %v3567, 2147483648
  %v3632 = vxor.u32 %v3568, 2147483648
  %v3633 = vxor.u32 %v3569, 2147483648
  %v3634 = vxor.u32 %v3570, 2147483648
  %v3635 = vxor.u32 %v3571, 2147483648
  %v3636 = vxor.u32 %v3572, 2147483648
  %v3637 = vxor.u32 %v3573, 2147483648
  %v3638 = vxor.u32 %v3574, 2147483648
  %v3639 = vxor.u32 %v3575, 2147483648
  %v3640 = vxor.u32 %v3576, 2147483648
  %v3641 = vxor.u32 %v3577, 2147483648
  %v3642 = vxor.u32 %v3578, 2147483648
  %v3643 = vxor.u32 %v3579, 2147483648
  %v3644 = vxor.u32 %v3580, 2147483648
  %v3645 = vxor.u32 %v3581, 2147483648
  %v3646 = vxor.u32 %v3582, 2147483648
  %v3647 = vxor.u32 %v3583, 2147483648
  %v3648 = vxor.u32 %v3584, 2147483648
  %v3649 = vxor.u32 %v3585, 2147483648
  %v3650 = vxor.u32 %v3586, 2147483648
  %v3651 = vxor.u32 %v3587, 2147483648
  %v3652 = vxor.u32 %v3588, 2147483648
  %v3653 = vxor.u32 %v3589, 2147483648
  %v3654 = vxor.u32 %v3590, 2147483648
  %v3655 = vxor.u32 %v3591, 2147483648
  %v3656 = vxor.u32 %v3592, 2147483648
  %v3657 = vxor.u32 %v3593, 2147483648
  %v3658 = vxor.u32 %v3594, 2147483648
  %v3659 = vxor.u32 %v3595, 2147483648
  %v3660 = vxor.u32 %v3596, 2147483648
  %v3661 = vxor.u32 %v3597, 2147483648
  %v3662 = vxor.u32 %v3598, 2147483648
  %v3663 = vxor.u32 %v3599, 2147483648
  %v3664 = vxor.u32 %v3600, 2147483648
  %v3665 = vxor.u32 %v3601, 2147483648
  %v3666 = vxor.u32 %v3602, 2147483648
  %v3667 = vxor.u32 %v3603, 2147483648
  %v3668 = vmul.f32 %v3604, 1.442695
  %v3669 = vpow.pop %v3668
  %v3670 = vmul.f32 %v3605, 1.442695
  %v3671 = vpow.pop %v3670
  %v3672 = vmul.f32 %v3606, 1.442695
  %v3673 = vpow.pop %v3672
  %v3674 = vmul.f32 %v3607, 1.442695
  %v3675 = vpow.pop %v3674
  %v3676 = vmul.f32 %v3608, 1.442695
  %v3677 = vpow.pop %v3676
  %v3678 = vmul.f32 %v3609, 1.442695
  %v3679 = vpow.pop %v3678
  %v3680 = vmul.f32 %v3610, 1.442695
  %v3681 = vpow.pop %v3680
  %v3682 = vmul.f32 %v3611, 1.442695
  %v3683 = vpow.pop %v3682
  %v3684 = vmul.f32 %v3612, 1.442695
  %v3685 = vpow.pop %v3684
  %v3686 = vmul.f32 %v3613, 1.442695
  %v3687 = vpow.pop %v3686
  %v3688 = vmul.f32 %v3614, 1.442695
  %v3689 = vpow.pop %v3688
  %v3690 = vmul.f32 %v3615, 1.442695
  %v3691 = vpow.pop %v3690
  %v3692 = vmul.f32 %v3616, 1.442695
  %v3693 = vpow.pop %v3692
  %v3694 = vmul.f32 %v3617, 1.442695
  %v3695 = vpow.pop %v3694
  %v3696 = vmul.f32 %v3618, 1.442695
  %v3697 = vpow.pop %v3696
  %v3698 = vmul.f32 %v3619, 1.442695
  %v3699 = vpow.pop %v3698
  %v3700 = vmul.f32 %v3620, 1.442695
  %v3701 = vpow.pop %v3700
  %v3702 = vmul.f32 %v3621, 1.442695
  %v3703 = vpow.pop %v3702
  %v3704 = vmul.f32 %v3622, 1.442695
  %v3705 = vpow.pop %v3704
  %v3706 = vmul.f32 %v3623, 1.442695
  %v3707 = vpow.pop %v3706
  %v3708 = vmul.f32 %v3624, 1.442695
  %v3709 = vpow.pop %v3708
  %v3710 = vmul.f32 %v3625, 1.442695
  %v3711 = vpow.pop %v3710
  %v3712 = vmul.f32 %v3626, 1.442695
  %v3713 = vpow.pop %v3712
  %v3714 = vmul.f32 %v3627, 1.442695
  %v3715 = vpow.pop %v3714
  %v3716 = vmul.f32 %v3628, 1.442695
  %v3717 = vpow.pop %v3716
  %v3718 = vmul.f32 %v3629, 1.442695
  %v3719 = vpow.pop %v3718
  %v3720 = vmul.f32 %v3630, 1.442695
  %v3721 = vpow.pop %v3720
  %v3722 = vmul.f32 %v3631, 1.442695
  %v3723 = vpow.pop %v3722
  %v3724 = vmul.f32 %v3632, 1.442695
  %v3725 = vpow.pop %v3724
  %v3726 = vmul.f32 %v3633, 1.442695
  %v3727 = vpow.pop %v3726
  %v3728 = vmul.f32 %v3634, 1.442695
  %v3729 = vpow.pop %v3728
  %v3730 = vmul.f32 %v3635, 1.442695
  %v3731 = vpow.pop %v3730
  %v3732 = vmul.f32 %v3636, 1.442695
  %v3733 = vpow.pop %v3732
  %v3734 = vmul.f32 %v3637, 1.442695
  %v3735 = vpow.pop %v3734
  %v3736 = vmul.f32 %v3638, 1.442695
  %v3737 = vpow.pop %v3736
  %v3738 = vmul.f32 %v3639, 1.442695
  %v3739 = vpow.pop %v3738
  %v3740 = vmul.f32 %v3640, 1.442695
  %v3741 = vpow.pop %v3740
  %v3742 = vmul.f32 %v3641, 1.442695
  %v3743 = vpow.pop %v3742
  %v3744 = vmul.f32 %v3642, 1.442695
  %v3745 = vpow.pop %v3744
  %v3746 = vmul.f32 %v3643, 1.442695
  %v3747 = vpow.pop %v3746
  %v3748 = vmul.f32 %v3644, 1.442695
  %v3749 = vpow.pop %v3748
  %v3750 = vmul.f32 %v3645, 1.442695
  %v3751 = vpow.pop %v3750
  %v3752 = vmul.f32 %v3646, 1.442695
  %v3753 = vpow.pop %v3752
  %v3754 = vmul.f32 %v3647, 1.442695
  %v3755 = vpow.pop %v3754
  %v3756 = vmul.f32 %v3648, 1.442695
  %v3757 = vpow.pop %v3756
  %v3758 = vmul.f32 %v3649, 1.442695
  %v3759 = vpow.pop %v3758
  %v3760 = vmul.f32 %v3650, 1.442695
  %v3761 = vpow.pop %v3760
  %v3762 = vmul.f32 %v3651, 1.442695
  %v3763 = vpow.pop %v3762
  %v3764 = vmul.f32 %v3652, 1.442695
  %v3765 = vpow.pop %v3764
  %v3766 = vmul.f32 %v3653, 1.442695
  %v3767 = vpow.pop %v3766
  %v3768 = vmul.f32 %v3654, 1.442695
  %v3769 = vpow.pop %v3768
  %v3770 = vmul.f32 %v3655, 1.442695
  %v3771 = vpow.pop %v3770
  %v3772 = vmul.f32 %v3656, 1.442695
  %v3773 = vpow.pop %v3772
  %v3774 = vmul.f32 %v3657, 1.442695
  %v3775 = vpow.pop %v3774
  %v3776 = vmul.f32 %v3658, 1.442695
  %v3777 = vpow.pop %v3776
  %v3778 = vmul.f32 %v3659, 1.442695
  %v3779 = vpow.pop %v3778
  %v3780 = vmul.f32 %v3660, 1.442695
  %v3781 = vpow.pop %v3780
  %v3782 = vmul.f32 %v3661, 1.442695
  %v3783 = vpow.pop %v3782
  %v3784 = vmul.f32 %v3662, 1.442695
  %v3785 = vpow.pop %v3784
  %v3786 = vmul.f32 %v3663, 1.442695
  %v3787 = vpow.pop %v3786
  %v3788 = vmul.f32 %v3664, 1.442695
  %v3789 = vpow.pop %v3788
  %v3790 = vmul.f32 %v3665, 1.442695
  %v3791 = vpow.pop %v3790
  %v3792 = vmul.f32 %v3666, 1.442695
  %v3793 = vpow.pop %v3792
  %v3794 = vmul.f32 %v3667, 1.442695
  %v3795 = vpow.pop %v3794
  %v3796 = vadd.f32 %v3669, 1.0
  %v3797 = vadd.f32 %v3671, 1.0
  %v3798 = vadd.f32 %v3673, 1.0
  %v3799 = vadd.f32 %v3675, 1.0
  %v3800 = vadd.f32 %v3677, 1.0
  %v3801 = vadd.f32 %v3679, 1.0
  %v3802 = vadd.f32 %v3681, 1.0
  %v3803 = vadd.f32 %v3683, 1.0
  %v3804 = vadd.f32 %v3685, 1.0
  %v3805 = vadd.f32 %v3687, 1.0
  %v3806 = vadd.f32 %v3689, 1.0
  %v3807 = vadd.f32 %v3691, 1.0
  %v3808 = vadd.f32 %v3693, 1.0
  %v3809 = vadd.f32 %v3695, 1.0
  %v3810 = vadd.f32 %v3697, 1.0
  %v3811 = vadd.f32 %v3699, 1.0
  %v3812 = vadd.f32 %v3701, 1.0
  %v3813 = vadd.f32 %v3703, 1.0
  %v3814 = vadd.f32 %v3705, 1.0
  %v3815 = vadd.f32 %v3707, 1.0
  %v3816 = vadd.f32 %v3709, 1.0
  %v3817 = vadd.f32 %v3711, 1.0
  %v3818 = vadd.f32 %v3713, 1.0
  %v3819 = vadd.f32 %v3715, 1.0
  %v3820 = vadd.f32 %v3717, 1.0
  %v3821 = vadd.f32 %v3719, 1.0
  %v3822 = vadd.f32 %v3721, 1.0
  %v3823 = vadd.f32 %v3723, 1.0
  %v3824 = vadd.f32 %v3725, 1.0
  %v3825 = vadd.f32 %v3727, 1.0
  %v3826 = vadd.f32 %v3729, 1.0
  %v3827 = vadd.f32 %v3731, 1.0
  %v3828 = vadd.f32 %v3733, 1.0
  %v3829 = vadd.f32 %v3735, 1.0
  %v3830 = vadd.f32 %v3737, 1.0
  %v3831 = vadd.f32 %v3739, 1.0
  %v3832 = vadd.f32 %v3741, 1.0
  %v3833 = vadd.f32 %v3743, 1.0
  %v3834 = vadd.f32 %v3745, 1.0
  %v3835 = vadd.f32 %v3747, 1.0
  %v3836 = vadd.f32 %v3749, 1.0
  %v3837 = vadd.f32 %v3751, 1.0
  %v3838 = vadd.f32 %v3753, 1.0
  %v3839 = vadd.f32 %v3755, 1.0
  %v3840 = vadd.f32 %v3757, 1.0
  %v3841 = vadd.f32 %v3759, 1.0
  %v3842 = vadd.f32 %v3761, 1.0
  %v3843 = vadd.f32 %v3763, 1.0
  %v3844 = vadd.f32 %v3765, 1.0
  %v3845 = vadd.f32 %v3767, 1.0
  %v3846 = vadd.f32 %v3769, 1.0
  %v3847 = vadd.f32 %v3771, 1.0
  %v3848 = vadd.f32 %v3773, 1.0
  %v3849 = vadd.f32 %v3775, 1.0
  %v3850 = vadd.f32 %v3777, 1.0
  %v3851 = vadd.f32 %v3779, 1.0
  %v3852 = vadd.f32 %v3781, 1.0
  %v3853 = vadd.f32 %v3783, 1.0
  %v3854 = vadd.f32 %v3785, 1.0
  %v3855 = vadd.f32 %v3787, 1.0
  %v3856 = vadd.f32 %v3789, 1.0
  %v3857 = vadd.f32 %v3791, 1.0
  %v3858 = vadd.f32 %v3793, 1.0
  %v3859 = vadd.f32 %v3795, 1.0
  %v3860 = vrcp.pop %v3796
  %v3861 = vmul.f32 %v3796, %v3860
  %v3862 = vsub.f32 1.0, %v3861
  %v3863 = vmul.f32 %v3860, %v3862
  %v3864 = vadd.f32 %v3860, %v3863
  %vm3865 = vweird.f32 %v3796
  %vm3866 = vweird.f32 %v3860
  %vm3867 = vmor %vm3865, %vm3866
  %v3868 = vsel %vm3867, %v3860, %v3864
  %v3869 = vand.u32 2147483647, %v3796
  %vm3870 = vcmp.eq.f32.partialorder %v3869, 8.507059e+37
  %v3871 = vand.u32 %v3796, 2147483648
  %v3872 = vor.u32 1.1754944e-38, %v3871
  %v3873 = vsel %vm3870, %v3872, %v3868
  %v3874 = vmul.f32 1.0, %v3873
  %v3875 = vrcp.pop %v3797
  %v3876 = vmul.f32 %v3797, %v3875
  %v3877 = vsub.f32 1.0, %v3876
  %v3878 = vmul.f32 %v3875, %v3877
  %v3879 = vadd.f32 %v3875, %v3878
  %vm3880 = vweird.f32 %v3797
  %vm3881 = vweird.f32 %v3875
  %vm3882 = vmor %vm3880, %vm3881
  %v3883 = vsel %vm3882, %v3875, %v3879
  %v3884 = vand.u32 2147483647, %v3797
  %vm3885 = vcmp.eq.f32.partialorder %v3884, 8.507059e+37
  %v3886 = vand.u32 %v3797, 2147483648
  %v3887 = vor.u32 1.1754944e-38, %v3886
  %v3888 = vsel %vm3885, %v3887, %v3883
  %v3889 = vmul.f32 1.0, %v3888
  %v3890 = vrcp.pop %v3798
  %v3891 = vmul.f32 %v3798, %v3890
  %v3892 = vsub.f32 1.0, %v3891
  %v3893 = vmul.f32 %v3890, %v3892
  %v3894 = vadd.f32 %v3890, %v3893
  %vm3895 = vweird.f32 %v3798
  %vm3896 = vweird.f32 %v3890
  %vm3897 = vmor %vm3895, %vm3896
  %v3898 = vsel %vm3897, %v3890, %v3894
  %v3899 = vand.u32 2147483647, %v3798
  %vm3900 = vcmp.eq.f32.partialorder %v3899, 8.507059e+37
  %v3901 = vand.u32 %v3798, 2147483648
  %v3902 = vor.u32 1.1754944e-38, %v3901
  %v3903 = vsel %vm3900, %v3902, %v3898
  %v3904 = vmul.f32 1.0, %v3903
  %v3905 = vrcp.pop %v3799
  %v3906 = vmul.f32 %v3799, %v3905
  %v3907 = vsub.f32 1.0, %v3906
  %v3908 = vmul.f32 %v3905, %v3907
  %v3909 = vadd.f32 %v3905, %v3908
  %vm3910 = vweird.f32 %v3799
  %vm3911 = vweird.f32 %v3905
  %vm3912 = vmor %vm3910, %vm3911
  %v3913 = vsel %vm3912, %v3905, %v3909
  %v3914 = vand.u32 2147483647, %v3799
  %vm3915 = vcmp.eq.f32.partialorder %v3914, 8.507059e+37
  %v3916 = vand.u32 %v3799, 2147483648
  %v3917 = vor.u32 1.1754944e-38, %v3916
  %v3918 = vsel %vm3915, %v3917, %v3913
  %v3919 = vmul.f32 1.0, %v3918
  %v3920 = vrcp.pop %v3800
  %v3921 = vmul.f32 %v3800, %v3920
  %v3922 = vsub.f32 1.0, %v3921
  %v3923 = vmul.f32 %v3920, %v3922
  %v3924 = vadd.f32 %v3920, %v3923
  %vm3925 = vweird.f32 %v3800
  %vm3926 = vweird.f32 %v3920
  %vm3927 = vmor %vm3925, %vm3926
  %v3928 = vsel %vm3927, %v3920, %v3924
  %v3929 = vand.u32 2147483647, %v3800
  %vm3930 = vcmp.eq.f32.partialorder %v3929, 8.507059e+37
  %v3931 = vand.u32 %v3800, 2147483648
  %v3932 = vor.u32 1.1754944e-38, %v3931
  %v3933 = vsel %vm3930, %v3932, %v3928
  %v3934 = vmul.f32 1.0, %v3933
  %v3935 = vrcp.pop %v3801
  %v3936 = vmul.f32 %v3801, %v3935
  %v3937 = vsub.f32 1.0, %v3936
  %v3938 = vmul.f32 %v3935, %v3937
  %v3939 = vadd.f32 %v3935, %v3938
  %vm3940 = vweird.f32 %v3801
  %vm3941 = vweird.f32 %v3935
  %vm3942 = vmor %vm3940, %vm3941
  %v3943 = vsel %vm3942, %v3935, %v3939
  %v3944 = vand.u32 2147483647, %v3801
  %vm3945 = vcmp.eq.f32.partialorder %v3944, 8.507059e+37
  %v3946 = vand.u32 %v3801, 2147483648
  %v3947 = vor.u32 1.1754944e-38, %v3946
  %v3948 = vsel %vm3945, %v3947, %v3943
  %v3949 = vmul.f32 1.0, %v3948
  %v3950 = vrcp.pop %v3802
  %v3951 = vmul.f32 %v3802, %v3950
  %v3952 = vsub.f32 1.0, %v3951
  %v3953 = vmul.f32 %v3950, %v3952
  %v3954 = vadd.f32 %v3950, %v3953
  %vm3955 = vweird.f32 %v3802
  %vm3956 = vweird.f32 %v3950
  %vm3957 = vmor %vm3955, %vm3956
  %v3958 = vsel %vm3957, %v3950, %v3954
  %v3959 = vand.u32 2147483647, %v3802
  %vm3960 = vcmp.eq.f32.partialorder %v3959, 8.507059e+37
  %v3961 = vand.u32 %v3802, 2147483648
  %v3962 = vor.u32 1.1754944e-38, %v3961
  %v3963 = vsel %vm3960, %v3962, %v3958
  %v3964 = vmul.f32 1.0, %v3963
  %v3965 = vrcp.pop %v3803
  %v3966 = vmul.f32 %v3803, %v3965
  %v3967 = vsub.f32 1.0, %v3966
  %v3968 = vmul.f32 %v3965, %v3967
  %v3969 = vadd.f32 %v3965, %v3968
  %vm3970 = vweird.f32 %v3803
  %vm3971 = vweird.f32 %v3965
  %vm3972 = vmor %vm3970, %vm3971
  %v3973 = vsel %vm3972, %v3965, %v3969
  %v3974 = vand.u32 2147483647, %v3803
  %vm3975 = vcmp.eq.f32.partialorder %v3974, 8.507059e+37
  %v3976 = vand.u32 %v3803, 2147483648
  %v3977 = vor.u32 1.1754944e-38, %v3976
  %v3978 = vsel %vm3975, %v3977, %v3973
  %v3979 = vmul.f32 1.0, %v3978
  %v3980 = vrcp.pop %v3804
  %v3981 = vmul.f32 %v3804, %v3980
  %v3982 = vsub.f32 1.0, %v3981
  %v3983 = vmul.f32 %v3980, %v3982
  %v3984 = vadd.f32 %v3980, %v3983
  %vm3985 = vweird.f32 %v3804
  %vm3986 = vweird.f32 %v3980
  %vm3987 = vmor %vm3985, %vm3986
  %v3988 = vsel %vm3987, %v3980, %v3984
  %v3989 = vand.u32 2147483647, %v3804
  %vm3990 = vcmp.eq.f32.partialorder %v3989, 8.507059e+37
  %v3991 = vand.u32 %v3804, 2147483648
  %v3992 = vor.u32 1.1754944e-38, %v3991
  %v3993 = vsel %vm3990, %v3992, %v3988
  %v3994 = vmul.f32 1.0, %v3993
  %v3995 = vrcp.pop %v3805
  %v3996 = vmul.f32 %v3805, %v3995
  %v3997 = vsub.f32 1.0, %v3996
  %v3998 = vmul.f32 %v3995, %v3997
  %v3999 = vadd.f32 %v3995, %v3998
  %vm4000 = vweird.f32 %v3805
  %vm4001 = vweird.f32 %v3995
  %vm4002 = vmor %vm4000, %vm4001
  %v4003 = vsel %vm4002, %v3995, %v3999
  %v4004 = vand.u32 2147483647, %v3805
  %vm4005 = vcmp.eq.f32.partialorder %v4004, 8.507059e+37
  %v4006 = vand.u32 %v3805, 2147483648
  %v4007 = vor.u32 1.1754944e-38, %v4006
  %v4008 = vsel %vm4005, %v4007, %v4003
  %v4009 = vmul.f32 1.0, %v4008
  %v4010 = vrcp.pop %v3806
  %v4011 = vmul.f32 %v3806, %v4010
  %v4012 = vsub.f32 1.0, %v4011
  %v4013 = vmul.f32 %v4010, %v4012
  %v4014 = vadd.f32 %v4010, %v4013
  %vm4015 = vweird.f32 %v3806
  %vm4016 = vweird.f32 %v4010
  %vm4017 = vmor %vm4015, %vm4016
  %v4018 = vsel %vm4017, %v4010, %v4014
  %v4019 = vand.u32 2147483647, %v3806
  %vm4020 = vcmp.eq.f32.partialorder %v4019, 8.507059e+37
  %v4021 = vand.u32 %v3806, 2147483648
  %v4022 = vor.u32 1.1754944e-38, %v4021
  %v4023 = vsel %vm4020, %v4022, %v4018
  %v4024 = vmul.f32 1.0, %v4023
  %v4025 = vrcp.pop %v3807
  %v4026 = vmul.f32 %v3807, %v4025
  %v4027 = vsub.f32 1.0, %v4026
  %v4028 = vmul.f32 %v4025, %v4027
  %v4029 = vadd.f32 %v4025, %v4028
  %vm4030 = vweird.f32 %v3807
  %vm4031 = vweird.f32 %v4025
  %vm4032 = vmor %vm4030, %vm4031
  %v4033 = vsel %vm4032, %v4025, %v4029
  %v4034 = vand.u32 2147483647, %v3807
  %vm4035 = vcmp.eq.f32.partialorder %v4034, 8.507059e+37
  %v4036 = vand.u32 %v3807, 2147483648
  %v4037 = vor.u32 1.1754944e-38, %v4036
  %v4038 = vsel %vm4035, %v4037, %v4033
  %v4039 = vmul.f32 1.0, %v4038
  %v4040 = vrcp.pop %v3808
  %v4041 = vmul.f32 %v3808, %v4040
  %v4042 = vsub.f32 1.0, %v4041
  %v4043 = vmul.f32 %v4040, %v4042
  %v4044 = vadd.f32 %v4040, %v4043
  %vm4045 = vweird.f32 %v3808
  %vm4046 = vweird.f32 %v4040
  %vm4047 = vmor %vm4045, %vm4046
  %v4048 = vsel %vm4047, %v4040, %v4044
  %v4049 = vand.u32 2147483647, %v3808
  %vm4050 = vcmp.eq.f32.partialorder %v4049, 8.507059e+37
  %v4051 = vand.u32 %v3808, 2147483648
  %v4052 = vor.u32 1.1754944e-38, %v4051
  %v4053 = vsel %vm4050, %v4052, %v4048
  %v4054 = vmul.f32 1.0, %v4053
  %v4055 = vrcp.pop %v3809
  %v4056 = vmul.f32 %v3809, %v4055
  %v4057 = vsub.f32 1.0, %v4056
  %v4058 = vmul.f32 %v4055, %v4057
  %v4059 = vadd.f32 %v4055, %v4058
  %vm4060 = vweird.f32 %v3809
  %vm4061 = vweird.f32 %v4055
  %vm4062 = vmor %vm4060, %vm4061
  %v4063 = vsel %vm4062, %v4055, %v4059
  %v4064 = vand.u32 2147483647, %v3809
  %vm4065 = vcmp.eq.f32.partialorder %v4064, 8.507059e+37
  %v4066 = vand.u32 %v3809, 2147483648
  %v4067 = vor.u32 1.1754944e-38, %v4066
  %v4068 = vsel %vm4065, %v4067, %v4063
  %v4069 = vmul.f32 1.0, %v4068
  %v4070 = vrcp.pop %v3810
  %v4071 = vmul.f32 %v3810, %v4070
  %v4072 = vsub.f32 1.0, %v4071
  %v4073 = vmul.f32 %v4070, %v4072
  %v4074 = vadd.f32 %v4070, %v4073
  %vm4075 = vweird.f32 %v3810
  %vm4076 = vweird.f32 %v4070
  %vm4077 = vmor %vm4075, %vm4076
  %v4078 = vsel %vm4077, %v4070, %v4074
  %v4079 = vand.u32 2147483647, %v3810
  %vm4080 = vcmp.eq.f32.partialorder %v4079, 8.507059e+37
  %v4081 = vand.u32 %v3810, 2147483648
  %v4082 = vor.u32 1.1754944e-38, %v4081
  %v4083 = vsel %vm4080, %v4082, %v4078
  %v4084 = vmul.f32 1.0, %v4083
  %v4085 = vrcp.pop %v3811
  %v4086 = vmul.f32 %v3811, %v4085
  %v4087 = vsub.f32 1.0, %v4086
  %v4088 = vmul.f32 %v4085, %v4087
  %v4089 = vadd.f32 %v4085, %v4088
  %vm4090 = vweird.f32 %v3811
  %vm4091 = vweird.f32 %v4085
  %vm4092 = vmor %vm4090, %vm4091
  %v4093 = vsel %vm4092, %v4085, %v4089
  %v4094 = vand.u32 2147483647, %v3811
  %vm4095 = vcmp.eq.f32.partialorder %v4094, 8.507059e+37
  %v4096 = vand.u32 %v3811, 2147483648
  %v4097 = vor.u32 1.1754944e-38, %v4096
  %v4098 = vsel %vm4095, %v4097, %v4093
  %v4099 = vmul.f32 1.0, %v4098
  %v4100 = vrcp.pop %v3812
  %v4101 = vmul.f32 %v3812, %v4100
  %v4102 = vsub.f32 1.0, %v4101
  %v4103 = vmul.f32 %v4100, %v4102
  %v4104 = vadd.f32 %v4100, %v4103
  %vm4105 = vweird.f32 %v3812
  %vm4106 = vweird.f32 %v4100
  %vm4107 = vmor %vm4105, %vm4106
  %v4108 = vsel %vm4107, %v4100, %v4104
  %v4109 = vand.u32 2147483647, %v3812
  %vm4110 = vcmp.eq.f32.partialorder %v4109, 8.507059e+37
  %v4111 = vand.u32 %v3812, 2147483648
  %v4112 = vor.u32 1.1754944e-38, %v4111
  %v4113 = vsel %vm4110, %v4112, %v4108
  %v4114 = vmul.f32 1.0, %v4113
  %v4115 = vrcp.pop %v3813
  %v4116 = vmul.f32 %v3813, %v4115
  %v4117 = vsub.f32 1.0, %v4116
  %v4118 = vmul.f32 %v4115, %v4117
  %v4119 = vadd.f32 %v4115, %v4118
  %vm4120 = vweird.f32 %v3813
  %vm4121 = vweird.f32 %v4115
  %vm4122 = vmor %vm4120, %vm4121
  %v4123 = vsel %vm4122, %v4115, %v4119
  %v4124 = vand.u32 2147483647, %v3813
  %vm4125 = vcmp.eq.f32.partialorder %v4124, 8.507059e+37
  %v4126 = vand.u32 %v3813, 2147483648
  %v4127 = vor.u32 1.1754944e-38, %v4126
  %v4128 = vsel %vm4125, %v4127, %v4123
  %v4129 = vmul.f32 1.0, %v4128
  %v4130 = vrcp.pop %v3814
  %v4131 = vmul.f32 %v3814, %v4130
  %v4132 = vsub.f32 1.0, %v4131
  %v4133 = vmul.f32 %v4130, %v4132
  %v4134 = vadd.f32 %v4130, %v4133
  %vm4135 = vweird.f32 %v3814
  %vm4136 = vweird.f32 %v4130
  %vm4137 = vmor %vm4135, %vm4136
  %v4138 = vsel %vm4137, %v4130, %v4134
  %v4139 = vand.u32 2147483647, %v3814
  %vm4140 = vcmp.eq.f32.partialorder %v4139, 8.507059e+37
  %v4141 = vand.u32 %v3814, 2147483648
  %v4142 = vor.u32 1.1754944e-38, %v4141
  %v4143 = vsel %vm4140, %v4142, %v4138
  %v4144 = vmul.f32 1.0, %v4143
  %v4145 = vrcp.pop %v3815
  %v4146 = vmul.f32 %v3815, %v4145
  %v4147 = vsub.f32 1.0, %v4146
  %v4148 = vmul.f32 %v4145, %v4147
  %v4149 = vadd.f32 %v4145, %v4148
  %vm4150 = vweird.f32 %v3815
  %vm4151 = vweird.f32 %v4145
  %vm4152 = vmor %vm4150, %vm4151
  %v4153 = vsel %vm4152, %v4145, %v4149
  %v4154 = vand.u32 2147483647, %v3815
  %vm4155 = vcmp.eq.f32.partialorder %v4154, 8.507059e+37
  %v4156 = vand.u32 %v3815, 2147483648
  %v4157 = vor.u32 1.1754944e-38, %v4156
  %v4158 = vsel %vm4155, %v4157, %v4153
  %v4159 = vmul.f32 1.0, %v4158
  %v4160 = vrcp.pop %v3816
  %v4161 = vmul.f32 %v3816, %v4160
  %v4162 = vsub.f32 1.0, %v4161
  %v4163 = vmul.f32 %v4160, %v4162
  %v4164 = vadd.f32 %v4160, %v4163
  %vm4165 = vweird.f32 %v3816
  %vm4166 = vweird.f32 %v4160
  %vm4167 = vmor %vm4165, %vm4166
  %v4168 = vsel %vm4167, %v4160, %v4164
  %v4169 = vand.u32 2147483647, %v3816
  %vm4170 = vcmp.eq.f32.partialorder %v4169, 8.507059e+37
  %v4171 = vand.u32 %v3816, 2147483648
  %v4172 = vor.u32 1.1754944e-38, %v4171
  %v4173 = vsel %vm4170, %v4172, %v4168
  %v4174 = vmul.f32 1.0, %v4173
  %v4175 = vrcp.pop %v3817
  %v4176 = vmul.f32 %v3817, %v4175
  %v4177 = vsub.f32 1.0, %v4176
  %v4178 = vmul.f32 %v4175, %v4177
  %v4179 = vadd.f32 %v4175, %v4178
  %vm4180 = vweird.f32 %v3817
  %vm4181 = vweird.f32 %v4175
  %vm4182 = vmor %vm4180, %vm4181
  %v4183 = vsel %vm4182, %v4175, %v4179
  %v4184 = vand.u32 2147483647, %v3817
  %vm4185 = vcmp.eq.f32.partialorder %v4184, 8.507059e+37
  %v4186 = vand.u32 %v3817, 2147483648
  %v4187 = vor.u32 1.1754944e-38, %v4186
  %v4188 = vsel %vm4185, %v4187, %v4183
  %v4189 = vmul.f32 1.0, %v4188
  %v4190 = vrcp.pop %v3818
  %v4191 = vmul.f32 %v3818, %v4190
  %v4192 = vsub.f32 1.0, %v4191
  %v4193 = vmul.f32 %v4190, %v4192
  %v4194 = vadd.f32 %v4190, %v4193
  %vm4195 = vweird.f32 %v3818
  %vm4196 = vweird.f32 %v4190
  %vm4197 = vmor %vm4195, %vm4196
  %v4198 = vsel %vm4197, %v4190, %v4194
  %v4199 = vand.u32 2147483647, %v3818
  %vm4200 = vcmp.eq.f32.partialorder %v4199, 8.507059e+37
  %v4201 = vand.u32 %v3818, 2147483648
  %v4202 = vor.u32 1.1754944e-38, %v4201
  %v4203 = vsel %vm4200, %v4202, %v4198
  %v4204 = vmul.f32 1.0, %v4203
  %v4205 = vrcp.pop %v3819
  %v4206 = vmul.f32 %v3819, %v4205
  %v4207 = vsub.f32 1.0, %v4206
  %v4208 = vmul.f32 %v4205, %v4207
  %v4209 = vadd.f32 %v4205, %v4208
  %vm4210 = vweird.f32 %v3819
  %vm4211 = vweird.f32 %v4205
  %vm4212 = vmor %vm4210, %vm4211
  %v4213 = vsel %vm4212, %v4205, %v4209
  %v4214 = vand.u32 2147483647, %v3819
  %vm4215 = vcmp.eq.f32.partialorder %v4214, 8.507059e+37
  %v4216 = vand.u32 %v3819, 2147483648
  %v4217 = vor.u32 1.1754944e-38, %v4216
  %v4218 = vsel %vm4215, %v4217, %v4213
  %v4219 = vmul.f32 1.0, %v4218
  %v4220 = vrcp.pop %v3820
  %v4221 = vmul.f32 %v3820, %v4220
  %v4222 = vsub.f32 1.0, %v4221
  %v4223 = vmul.f32 %v4220, %v4222
  %v4224 = vadd.f32 %v4220, %v4223
  %vm4225 = vweird.f32 %v3820
  %vm4226 = vweird.f32 %v4220
  %vm4227 = vmor %vm4225, %vm4226
  %v4228 = vsel %vm4227, %v4220, %v4224
  %v4229 = vand.u32 2147483647, %v3820
  %vm4230 = vcmp.eq.f32.partialorder %v4229, 8.507059e+37
  %v4231 = vand.u32 %v3820, 2147483648
  %v4232 = vor.u32 1.1754944e-38, %v4231
  %v4233 = vsel %vm4230, %v4232, %v4228
  %v4234 = vmul.f32 1.0, %v4233
  %v4235 = vrcp.pop %v3821
  %v4236 = vmul.f32 %v3821, %v4235
  %v4237 = vsub.f32 1.0, %v4236
  %v4238 = vmul.f32 %v4235, %v4237
  %v4239 = vadd.f32 %v4235, %v4238
  %vm4240 = vweird.f32 %v3821
  %vm4241 = vweird.f32 %v4235
  %vm4242 = vmor %vm4240, %vm4241
  %v4243 = vsel %vm4242, %v4235, %v4239
  %v4244 = vand.u32 2147483647, %v3821
  %vm4245 = vcmp.eq.f32.partialorder %v4244, 8.507059e+37
  %v4246 = vand.u32 %v3821, 2147483648
  %v4247 = vor.u32 1.1754944e-38, %v4246
  %v4248 = vsel %vm4245, %v4247, %v4243
  %v4249 = vmul.f32 1.0, %v4248
  %v4250 = vrcp.pop %v3822
  %v4251 = vmul.f32 %v3822, %v4250
  %v4252 = vsub.f32 1.0, %v4251
  %v4253 = vmul.f32 %v4250, %v4252
  %v4254 = vadd.f32 %v4250, %v4253
  %vm4255 = vweird.f32 %v3822
  %vm4256 = vweird.f32 %v4250
  %vm4257 = vmor %vm4255, %vm4256
  %v4258 = vsel %vm4257, %v4250, %v4254
  %v4259 = vand.u32 2147483647, %v3822
  %vm4260 = vcmp.eq.f32.partialorder %v4259, 8.507059e+37
  %v4261 = vand.u32 %v3822, 2147483648
  %v4262 = vor.u32 1.1754944e-38, %v4261
  %v4263 = vsel %vm4260, %v4262, %v4258
  %v4264 = vmul.f32 1.0, %v4263
  %v4265 = vrcp.pop %v3823
  %v4266 = vmul.f32 %v3823, %v4265
  %v4267 = vsub.f32 1.0, %v4266
  %v4268 = vmul.f32 %v4265, %v4267
  %v4269 = vadd.f32 %v4265, %v4268
  %vm4270 = vweird.f32 %v3823
  %vm4271 = vweird.f32 %v4265
  %vm4272 = vmor %vm4270, %vm4271
  %v4273 = vsel %vm4272, %v4265, %v4269
  %v4274 = vand.u32 2147483647, %v3823
  %vm4275 = vcmp.eq.f32.partialorder %v4274, 8.507059e+37
  %v4276 = vand.u32 %v3823, 2147483648
  %v4277 = vor.u32 1.1754944e-38, %v4276
  %v4278 = vsel %vm4275, %v4277, %v4273
  %v4279 = vmul.f32 1.0, %v4278
  %v4280 = vrcp.pop %v3824
  %v4281 = vmul.f32 %v3824, %v4280
  %v4282 = vsub.f32 1.0, %v4281
  %v4283 = vmul.f32 %v4280, %v4282
  %v4284 = vadd.f32 %v4280, %v4283
  %vm4285 = vweird.f32 %v3824
  %vm4286 = vweird.f32 %v4280
  %vm4287 = vmor %vm4285, %vm4286
  %v4288 = vsel %vm4287, %v4280, %v4284
  %v4289 = vand.u32 2147483647, %v3824
  %vm4290 = vcmp.eq.f32.partialorder %v4289, 8.507059e+37
  %v4291 = vand.u32 %v3824, 2147483648
  %v4292 = vor.u32 1.1754944e-38, %v4291
  %v4293 = vsel %vm4290, %v4292, %v4288
  %v4294 = vmul.f32 1.0, %v4293
  %v4295 = vrcp.pop %v3825
  %v4296 = vmul.f32 %v3825, %v4295
  %v4297 = vsub.f32 1.0, %v4296
  %v4298 = vmul.f32 %v4295, %v4297
  %v4299 = vadd.f32 %v4295, %v4298
  %vm4300 = vweird.f32 %v3825
  %vm4301 = vweird.f32 %v4295
  %vm4302 = vmor %vm4300, %vm4301
  %v4303 = vsel %vm4302, %v4295, %v4299
  %v4304 = vand.u32 2147483647, %v3825
  %vm4305 = vcmp.eq.f32.partialorder %v4304, 8.507059e+37
  %v4306 = vand.u32 %v3825, 2147483648
  %v4307 = vor.u32 1.1754944e-38, %v4306
  %v4308 = vsel %vm4305, %v4307, %v4303
  %v4309 = vmul.f32 1.0, %v4308
  %v4310 = vrcp.pop %v3826
  %v4311 = vmul.f32 %v3826, %v4310
  %v4312 = vsub.f32 1.0, %v4311
  %v4313 = vmul.f32 %v4310, %v4312
  %v4314 = vadd.f32 %v4310, %v4313
  %vm4315 = vweird.f32 %v3826
  %vm4316 = vweird.f32 %v4310
  %vm4317 = vmor %vm4315, %vm4316
  %v4318 = vsel %vm4317, %v4310, %v4314
  %v4319 = vand.u32 2147483647, %v3826
  %vm4320 = vcmp.eq.f32.partialorder %v4319, 8.507059e+37
  %v4321 = vand.u32 %v3826, 2147483648
  %v4322 = vor.u32 1.1754944e-38, %v4321
  %v4323 = vsel %vm4320, %v4322, %v4318
  %v4324 = vmul.f32 1.0, %v4323
  %v4325 = vrcp.pop %v3827
  %v4326 = vmul.f32 %v3827, %v4325
  %v4327 = vsub.f32 1.0, %v4326
  %v4328 = vmul.f32 %v4325, %v4327
  %v4329 = vadd.f32 %v4325, %v4328
  %vm4330 = vweird.f32 %v3827
  %vm4331 = vweird.f32 %v4325
  %vm4332 = vmor %vm4330, %vm4331
  %v4333 = vsel %vm4332, %v4325, %v4329
  %v4334 = vand.u32 2147483647, %v3827
  %vm4335 = vcmp.eq.f32.partialorder %v4334, 8.507059e+37
  %v4336 = vand.u32 %v3827, 2147483648
  %v4337 = vor.u32 1.1754944e-38, %v4336
  %v4338 = vsel %vm4335, %v4337, %v4333
  %v4339 = vmul.f32 1.0, %v4338
  %v4340 = vrcp.pop %v3828
  %v4341 = vmul.f32 %v3828, %v4340
  %v4342 = vsub.f32 1.0, %v4341
  %v4343 = vmul.f32 %v4340, %v4342
  %v4344 = vadd.f32 %v4340, %v4343
  %vm4345 = vweird.f32 %v3828
  %vm4346 = vweird.f32 %v4340
  %vm4347 = vmor %vm4345, %vm4346
  %v4348 = vsel %vm4347, %v4340, %v4344
  %v4349 = vand.u32 2147483647, %v3828
  %vm4350 = vcmp.eq.f32.partialorder %v4349, 8.507059e+37
  %v4351 = vand.u32 %v3828, 2147483648
  %v4352 = vor.u32 1.1754944e-38, %v4351
  %v4353 = vsel %vm4350, %v4352, %v4348
  %v4354 = vmul.f32 1.0, %v4353
  %v4355 = vrcp.pop %v3829
  %v4356 = vmul.f32 %v3829, %v4355
  %v4357 = vsub.f32 1.0, %v4356
  %v4358 = vmul.f32 %v4355, %v4357
  %v4359 = vadd.f32 %v4355, %v4358
  %vm4360 = vweird.f32 %v3829
  %vm4361 = vweird.f32 %v4355
  %vm4362 = vmor %vm4360, %vm4361
  %v4363 = vsel %vm4362, %v4355, %v4359
  %v4364 = vand.u32 2147483647, %v3829
  %vm4365 = vcmp.eq.f32.partialorder %v4364, 8.507059e+37
  %v4366 = vand.u32 %v3829, 2147483648
  %v4367 = vor.u32 1.1754944e-38, %v4366
  %v4368 = vsel %vm4365, %v4367, %v4363
  %v4369 = vmul.f32 1.0, %v4368
  %v4370 = vrcp.pop %v3830
  %v4371 = vmul.f32 %v3830, %v4370
  %v4372 = vsub.f32 1.0, %v4371
  %v4373 = vmul.f32 %v4370, %v4372
  %v4374 = vadd.f32 %v4370, %v4373
  %vm4375 = vweird.f32 %v3830
  %vm4376 = vweird.f32 %v4370
  %vm4377 = vmor %vm4375, %vm4376
  %v4378 = vsel %vm4377, %v4370, %v4374
  %v4379 = vand.u32 2147483647, %v3830
  %vm4380 = vcmp.eq.f32.partialorder %v4379, 8.507059e+37
  %v4381 = vand.u32 %v3830, 2147483648
  %v4382 = vor.u32 1.1754944e-38, %v4381
  %v4383 = vsel %vm4380, %v4382, %v4378
  %v4384 = vmul.f32 1.0, %v4383
  %v4385 = vrcp.pop %v3831
  %v4386 = vmul.f32 %v3831, %v4385
  %v4387 = vsub.f32 1.0, %v4386
  %v4388 = vmul.f32 %v4385, %v4387
  %v4389 = vadd.f32 %v4385, %v4388
  %vm4390 = vweird.f32 %v3831
  %vm4391 = vweird.f32 %v4385
  %vm4392 = vmor %vm4390, %vm4391
  %v4393 = vsel %vm4392, %v4385, %v4389
  %v4394 = vand.u32 2147483647, %v3831
  %vm4395 = vcmp.eq.f32.partialorder %v4394, 8.507059e+37
  %v4396 = vand.u32 %v3831, 2147483648
  %v4397 = vor.u32 1.1754944e-38, %v4396
  %v4398 = vsel %vm4395, %v4397, %v4393
  %v4399 = vmul.f32 1.0, %v4398
  %v4400 = vrcp.pop %v3832
  %v4401 = vmul.f32 %v3832, %v4400
  %v4402 = vsub.f32 1.0, %v4401
  %v4403 = vmul.f32 %v4400, %v4402
  %v4404 = vadd.f32 %v4400, %v4403
  %vm4405 = vweird.f32 %v3832
  %vm4406 = vweird.f32 %v4400
  %vm4407 = vmor %vm4405, %vm4406
  %v4408 = vsel %vm4407, %v4400, %v4404
  %v4409 = vand.u32 2147483647, %v3832
  %vm4410 = vcmp.eq.f32.partialorder %v4409, 8.507059e+37
  %v4411 = vand.u32 %v3832, 2147483648
  %v4412 = vor.u32 1.1754944e-38, %v4411
  %v4413 = vsel %vm4410, %v4412, %v4408
  %v4414 = vmul.f32 1.0, %v4413
  %v4415 = vrcp.pop %v3833
  %v4416 = vmul.f32 %v3833, %v4415
  %v4417 = vsub.f32 1.0, %v4416
  %v4418 = vmul.f32 %v4415, %v4417
  %v4419 = vadd.f32 %v4415, %v4418
  %vm4420 = vweird.f32 %v3833
  %vm4421 = vweird.f32 %v4415
  %vm4422 = vmor %vm4420, %vm4421
  %v4423 = vsel %vm4422, %v4415, %v4419
  %v4424 = vand.u32 2147483647, %v3833
  %vm4425 = vcmp.eq.f32.partialorder %v4424, 8.507059e+37
  %v4426 = vand.u32 %v3833, 2147483648
  %v4427 = vor.u32 1.1754944e-38, %v4426
  %v4428 = vsel %vm4425, %v4427, %v4423
  %v4429 = vmul.f32 1.0, %v4428
  %v4430 = vrcp.pop %v3834
  %v4431 = vmul.f32 %v3834, %v4430
  %v4432 = vsub.f32 1.0, %v4431
  %v4433 = vmul.f32 %v4430, %v4432
  %v4434 = vadd.f32 %v4430, %v4433
  %vm4435 = vweird.f32 %v3834
  %vm4436 = vweird.f32 %v4430
  %vm4437 = vmor %vm4435, %vm4436
  %v4438 = vsel %vm4437, %v4430, %v4434
  %v4439 = vand.u32 2147483647, %v3834
  %vm4440 = vcmp.eq.f32.partialorder %v4439, 8.507059e+37
  %v4441 = vand.u32 %v3834, 2147483648
  %v4442 = vor.u32 1.1754944e-38, %v4441
  %v4443 = vsel %vm4440, %v4442, %v4438
  %v4444 = vmul.f32 1.0, %v4443
  %v4445 = vrcp.pop %v3835
  %v4446 = vmul.f32 %v3835, %v4445
  %v4447 = vsub.f32 1.0, %v4446
  %v4448 = vmul.f32 %v4445, %v4447
  %v4449 = vadd.f32 %v4445, %v4448
  %vm4450 = vweird.f32 %v3835
  %vm4451 = vweird.f32 %v4445
  %vm4452 = vmor %vm4450, %vm4451
  %v4453 = vsel %vm4452, %v4445, %v4449
  %v4454 = vand.u32 2147483647, %v3835
  %vm4455 = vcmp.eq.f32.partialorder %v4454, 8.507059e+37
  %v4456 = vand.u32 %v3835, 2147483648
  %v4457 = vor.u32 1.1754944e-38, %v4456
  %v4458 = vsel %vm4455, %v4457, %v4453
  %v4459 = vmul.f32 1.0, %v4458
  %v4460 = vrcp.pop %v3836
  %v4461 = vmul.f32 %v3836, %v4460
  %v4462 = vsub.f32 1.0, %v4461
  %v4463 = vmul.f32 %v4460, %v4462
  %v4464 = vadd.f32 %v4460, %v4463
  %vm4465 = vweird.f32 %v3836
  %vm4466 = vweird.f32 %v4460
  %vm4467 = vmor %vm4465, %vm4466
  %v4468 = vsel %vm4467, %v4460, %v4464
  %v4469 = vand.u32 2147483647, %v3836
  %vm4470 = vcmp.eq.f32.partialorder %v4469, 8.507059e+37
  %v4471 = vand.u32 %v3836, 2147483648
  %v4472 = vor.u32 1.1754944e-38, %v4471
  %v4473 = vsel %vm4470, %v4472, %v4468
  %v4474 = vmul.f32 1.0, %v4473
  %v4475 = vrcp.pop %v3837
  %v4476 = vmul.f32 %v3837, %v4475
  %v4477 = vsub.f32 1.0, %v4476
  %v4478 = vmul.f32 %v4475, %v4477
  %v4479 = vadd.f32 %v4475, %v4478
  %vm4480 = vweird.f32 %v3837
  %vm4481 = vweird.f32 %v4475
  %vm4482 = vmor %vm4480, %vm4481
  %v4483 = vsel %vm4482, %v4475, %v4479
  %v4484 = vand.u32 2147483647, %v3837
  %vm4485 = vcmp.eq.f32.partialorder %v4484, 8.507059e+37
  %v4486 = vand.u32 %v3837, 2147483648
  %v4487 = vor.u32 1.1754944e-38, %v4486
  %v4488 = vsel %vm4485, %v4487, %v4483
  %v4489 = vmul.f32 1.0, %v4488
  %v4490 = vrcp.pop %v3838
  %v4491 = vmul.f32 %v3838, %v4490
  %v4492 = vsub.f32 1.0, %v4491
  %v4493 = vmul.f32 %v4490, %v4492
  %v4494 = vadd.f32 %v4490, %v4493
  %vm4495 = vweird.f32 %v3838
  %vm4496 = vweird.f32 %v4490
  %vm4497 = vmor %vm4495, %vm4496
  %v4498 = vsel %vm4497, %v4490, %v4494
  %v4499 = vand.u32 2147483647, %v3838
  %vm4500 = vcmp.eq.f32.partialorder %v4499, 8.507059e+37
  %v4501 = vand.u32 %v3838, 2147483648
  %v4502 = vor.u32 1.1754944e-38, %v4501
  %v4503 = vsel %vm4500, %v4502, %v4498
  %v4504 = vmul.f32 1.0, %v4503
  %v4505 = vrcp.pop %v3839
  %v4506 = vmul.f32 %v3839, %v4505
  %v4507 = vsub.f32 1.0, %v4506
  %v4508 = vmul.f32 %v4505, %v4507
  %v4509 = vadd.f32 %v4505, %v4508
  %vm4510 = vweird.f32 %v3839
  %vm4511 = vweird.f32 %v4505
  %vm4512 = vmor %vm4510, %vm4511
  %v4513 = vsel %vm4512, %v4505, %v4509
  %v4514 = vand.u32 2147483647, %v3839
  %vm4515 = vcmp.eq.f32.partialorder %v4514, 8.507059e+37
  %v4516 = vand.u32 %v3839, 2147483648
  %v4517 = vor.u32 1.1754944e-38, %v4516
  %v4518 = vsel %vm4515, %v4517, %v4513
  %v4519 = vmul.f32 1.0, %v4518
  %v4520 = vrcp.pop %v3840
  %v4521 = vmul.f32 %v3840, %v4520
  %v4522 = vsub.f32 1.0, %v4521
  %v4523 = vmul.f32 %v4520, %v4522
  %v4524 = vadd.f32 %v4520, %v4523
  %vm4525 = vweird.f32 %v3840
  %vm4526 = vweird.f32 %v4520
  %vm4527 = vmor %vm4525, %vm4526
  %v4528 = vsel %vm4527, %v4520, %v4524
  %v4529 = vand.u32 2147483647, %v3840
  %vm4530 = vcmp.eq.f32.partialorder %v4529, 8.507059e+37
  %v4531 = vand.u32 %v3840, 2147483648
  %v4532 = vor.u32 1.1754944e-38, %v4531
  %v4533 = vsel %vm4530, %v4532, %v4528
  %v4534 = vmul.f32 1.0, %v4533
  %v4535 = vrcp.pop %v3841
  %v4536 = vmul.f32 %v3841, %v4535
  %v4537 = vsub.f32 1.0, %v4536
  %v4538 = vmul.f32 %v4535, %v4537
  %v4539 = vadd.f32 %v4535, %v4538
  %vm4540 = vweird.f32 %v3841
  %vm4541 = vweird.f32 %v4535
  %vm4542 = vmor %vm4540, %vm4541
  %v4543 = vsel %vm4542, %v4535, %v4539
  %v4544 = vand.u32 2147483647, %v3841
  %vm4545 = vcmp.eq.f32.partialorder %v4544, 8.507059e+37
  %v4546 = vand.u32 %v3841, 2147483648
  %v4547 = vor.u32 1.1754944e-38, %v4546
  %v4548 = vsel %vm4545, %v4547, %v4543
  %v4549 = vmul.f32 1.0, %v4548
  %v4550 = vrcp.pop %v3842
  %v4551 = vmul.f32 %v3842, %v4550
  %v4552 = vsub.f32 1.0, %v4551
  %v4553 = vmul.f32 %v4550, %v4552
  %v4554 = vadd.f32 %v4550, %v4553
  %vm4555 = vweird.f32 %v3842
  %vm4556 = vweird.f32 %v4550
  %vm4557 = vmor %vm4555, %vm4556
  %v4558 = vsel %vm4557, %v4550, %v4554
  %v4559 = vand.u32 2147483647, %v3842
  %vm4560 = vcmp.eq.f32.partialorder %v4559, 8.507059e+37
  %v4561 = vand.u32 %v3842, 2147483648
  %v4562 = vor.u32 1.1754944e-38, %v4561
  %v4563 = vsel %vm4560, %v4562, %v4558
  %v4564 = vmul.f32 1.0, %v4563
  %v4565 = vrcp.pop %v3843
  %v4566 = vmul.f32 %v3843, %v4565
  %v4567 = vsub.f32 1.0, %v4566
  %v4568 = vmul.f32 %v4565, %v4567
  %v4569 = vadd.f32 %v4565, %v4568
  %vm4570 = vweird.f32 %v3843
  %vm4571 = vweird.f32 %v4565
  %vm4572 = vmor %vm4570, %vm4571
  %v4573 = vsel %vm4572, %v4565, %v4569
  %v4574 = vand.u32 2147483647, %v3843
  %vm4575 = vcmp.eq.f32.partialorder %v4574, 8.507059e+37
  %v4576 = vand.u32 %v3843, 2147483648
  %v4577 = vor.u32 1.1754944e-38, %v4576
  %v4578 = vsel %vm4575, %v4577, %v4573
  %v4579 = vmul.f32 1.0, %v4578
  %v4580 = vrcp.pop %v3844
  %v4581 = vmul.f32 %v3844, %v4580
  %v4582 = vsub.f32 1.0, %v4581
  %v4583 = vmul.f32 %v4580, %v4582
  %v4584 = vadd.f32 %v4580, %v4583
  %vm4585 = vweird.f32 %v3844
  %vm4586 = vweird.f32 %v4580
  %vm4587 = vmor %vm4585, %vm4586
  %v4588 = vsel %vm4587, %v4580, %v4584
  %v4589 = vand.u32 2147483647, %v3844
  %vm4590 = vcmp.eq.f32.partialorder %v4589, 8.507059e+37
  %v4591 = vand.u32 %v3844, 2147483648
  %v4592 = vor.u32 1.1754944e-38, %v4591
  %v4593 = vsel %vm4590, %v4592, %v4588
  %v4594 = vmul.f32 1.0, %v4593
  %v4595 = vrcp.pop %v3845
  %v4596 = vmul.f32 %v3845, %v4595
  %v4597 = vsub.f32 1.0, %v4596
  %v4598 = vmul.f32 %v4595, %v4597
  %v4599 = vadd.f32 %v4595, %v4598
  %vm4600 = vweird.f32 %v3845
  %vm4601 = vweird.f32 %v4595
  %vm4602 = vmor %vm4600, %vm4601
  %v4603 = vsel %vm4602, %v4595, %v4599
  %v4604 = vand.u32 2147483647, %v3845
  %vm4605 = vcmp.eq.f32.partialorder %v4604, 8.507059e+37
  %v4606 = vand.u32 %v3845, 2147483648
  %v4607 = vor.u32 1.1754944e-38, %v4606
  %v4608 = vsel %vm4605, %v4607, %v4603
  %v4609 = vmul.f32 1.0, %v4608
  %v4610 = vrcp.pop %v3846
  %v4611 = vmul.f32 %v3846, %v4610
  %v4612 = vsub.f32 1.0, %v4611
  %v4613 = vmul.f32 %v4610, %v4612
  %v4614 = vadd.f32 %v4610, %v4613
  %vm4615 = vweird.f32 %v3846
  %vm4616 = vweird.f32 %v4610
  %vm4617 = vmor %vm4615, %vm4616
  %v4618 = vsel %vm4617, %v4610, %v4614
  %v4619 = vand.u32 2147483647, %v3846
  %vm4620 = vcmp.eq.f32.partialorder %v4619, 8.507059e+37
  %v4621 = vand.u32 %v3846, 2147483648
  %v4622 = vor.u32 1.1754944e-38, %v4621
  %v4623 = vsel %vm4620, %v4622, %v4618
  %v4624 = vmul.f32 1.0, %v4623
  %v4625 = vrcp.pop %v3847
  %v4626 = vmul.f32 %v3847, %v4625
  %v4627 = vsub.f32 1.0, %v4626
  %v4628 = vmul.f32 %v4625, %v4627
  %v4629 = vadd.f32 %v4625, %v4628
  %vm4630 = vweird.f32 %v3847
  %vm4631 = vweird.f32 %v4625
  %vm4632 = vmor %vm4630, %vm4631
  %v4633 = vsel %vm4632, %v4625, %v4629
  %v4634 = vand.u32 2147483647, %v3847
  %vm4635 = vcmp.eq.f32.partialorder %v4634, 8.507059e+37
  %v4636 = vand.u32 %v3847, 2147483648
  %v4637 = vor.u32 1.1754944e-38, %v4636
  %v4638 = vsel %vm4635, %v4637, %v4633
  %v4639 = vmul.f32 1.0, %v4638
  %v4640 = vrcp.pop %v3848
  %v4641 = vmul.f32 %v3848, %v4640
  %v4642 = vsub.f32 1.0, %v4641
  %v4643 = vmul.f32 %v4640, %v4642
  %v4644 = vadd.f32 %v4640, %v4643
  %vm4645 = vweird.f32 %v3848
  %vm4646 = vweird.f32 %v4640
  %vm4647 = vmor %vm4645, %vm4646
  %v4648 = vsel %vm4647, %v4640, %v4644
  %v4649 = vand.u32 2147483647, %v3848
  %vm4650 = vcmp.eq.f32.partialorder %v4649, 8.507059e+37
  %v4651 = vand.u32 %v3848, 2147483648
  %v4652 = vor.u32 1.1754944e-38, %v4651
  %v4653 = vsel %vm4650, %v4652, %v4648
  %v4654 = vmul.f32 1.0, %v4653
  %v4655 = vrcp.pop %v3849
  %v4656 = vmul.f32 %v3849, %v4655
  %v4657 = vsub.f32 1.0, %v4656
  %v4658 = vmul.f32 %v4655, %v4657
  %v4659 = vadd.f32 %v4655, %v4658
  %vm4660 = vweird.f32 %v3849
  %vm4661 = vweird.f32 %v4655
  %vm4662 = vmor %vm4660, %vm4661
  %v4663 = vsel %vm4662, %v4655, %v4659
  %v4664 = vand.u32 2147483647, %v3849
  %vm4665 = vcmp.eq.f32.partialorder %v4664, 8.507059e+37
  %v4666 = vand.u32 %v3849, 2147483648
  %v4667 = vor.u32 1.1754944e-38, %v4666
  %v4668 = vsel %vm4665, %v4667, %v4663
  %v4669 = vmul.f32 1.0, %v4668
  %v4670 = vrcp.pop %v3850
  %v4671 = vmul.f32 %v3850, %v4670
  %v4672 = vsub.f32 1.0, %v4671
  %v4673 = vmul.f32 %v4670, %v4672
  %v4674 = vadd.f32 %v4670, %v4673
  %vm4675 = vweird.f32 %v3850
  %vm4676 = vweird.f32 %v4670
  %vm4677 = vmor %vm4675, %vm4676
  %v4678 = vsel %vm4677, %v4670, %v4674
  %v4679 = vand.u32 2147483647, %v3850
  %vm4680 = vcmp.eq.f32.partialorder %v4679, 8.507059e+37
  %v4681 = vand.u32 %v3850, 2147483648
  %v4682 = vor.u32 1.1754944e-38, %v4681
  %v4683 = vsel %vm4680, %v4682, %v4678
  %v4684 = vmul.f32 1.0, %v4683
  %v4685 = vrcp.pop %v3851
  %v4686 = vmul.f32 %v3851, %v4685
  %v4687 = vsub.f32 1.0, %v4686
  %v4688 = vmul.f32 %v4685, %v4687
  %v4689 = vadd.f32 %v4685, %v4688
  %vm4690 = vweird.f32 %v3851
  %vm4691 = vweird.f32 %v4685
  %vm4692 = vmor %vm4690, %vm4691
  %v4693 = vsel %vm4692, %v4685, %v4689
  %v4694 = vand.u32 2147483647, %v3851
  %vm4695 = vcmp.eq.f32.partialorder %v4694, 8.507059e+37
  %v4696 = vand.u32 %v3851, 2147483648
  %v4697 = vor.u32 1.1754944e-38, %v4696
  %v4698 = vsel %vm4695, %v4697, %v4693
  %v4699 = vmul.f32 1.0, %v4698
  %v4700 = vrcp.pop %v3852
  %v4701 = vmul.f32 %v3852, %v4700
  %v4702 = vsub.f32 1.0, %v4701
  %v4703 = vmul.f32 %v4700, %v4702
  %v4704 = vadd.f32 %v4700, %v4703
  %vm4705 = vweird.f32 %v3852
  %vm4706 = vweird.f32 %v4700
  %vm4707 = vmor %vm4705, %vm4706
  %v4708 = vsel %vm4707, %v4700, %v4704
  %v4709 = vand.u32 2147483647, %v3852
  %vm4710 = vcmp.eq.f32.partialorder %v4709, 8.507059e+37
  %v4711 = vand.u32 %v3852, 2147483648
  %v4712 = vor.u32 1.1754944e-38, %v4711
  %v4713 = vsel %vm4710, %v4712, %v4708
  %v4714 = vmul.f32 1.0, %v4713
  %v4715 = vrcp.pop %v3853
  %v4716 = vmul.f32 %v3853, %v4715
  %v4717 = vsub.f32 1.0, %v4716
  %v4718 = vmul.f32 %v4715, %v4717
  %v4719 = vadd.f32 %v4715, %v4718
  %vm4720 = vweird.f32 %v3853
  %vm4721 = vweird.f32 %v4715
  %vm4722 = vmor %vm4720, %vm4721
  %v4723 = vsel %vm4722, %v4715, %v4719
  %v4724 = vand.u32 2147483647, %v3853
  %vm4725 = vcmp.eq.f32.partialorder %v4724, 8.507059e+37
  %v4726 = vand.u32 %v3853, 2147483648
  %v4727 = vor.u32 1.1754944e-38, %v4726
  %v4728 = vsel %vm4725, %v4727, %v4723
  %v4729 = vmul.f32 1.0, %v4728
  %v4730 = vrcp.pop %v3854
  %v4731 = vmul.f32 %v3854, %v4730
  %v4732 = vsub.f32 1.0, %v4731
  %v4733 = vmul.f32 %v4730, %v4732
  %v4734 = vadd.f32 %v4730, %v4733
  %vm4735 = vweird.f32 %v3854
  %vm4736 = vweird.f32 %v4730
  %vm4737 = vmor %vm4735, %vm4736
  %v4738 = vsel %vm4737, %v4730, %v4734
  %v4739 = vand.u32 2147483647, %v3854
  %vm4740 = vcmp.eq.f32.partialorder %v4739, 8.507059e+37
  %v4741 = vand.u32 %v3854, 2147483648
  %v4742 = vor.u32 1.1754944e-38, %v4741
  %v4743 = vsel %vm4740, %v4742, %v4738
  %v4744 = vmul.f32 1.0, %v4743
  %v4745 = vrcp.pop %v3855
  %v4746 = vmul.f32 %v3855, %v4745
  %v4747 = vsub.f32 1.0, %v4746
  %v4748 = vmul.f32 %v4745, %v4747
  %v4749 = vadd.f32 %v4745, %v4748
  %vm4750 = vweird.f32 %v3855
  %vm4751 = vweird.f32 %v4745
  %vm4752 = vmor %vm4750, %vm4751
  %v4753 = vsel %vm4752, %v4745, %v4749
  %v4754 = vand.u32 2147483647, %v3855
  %vm4755 = vcmp.eq.f32.partialorder %v4754, 8.507059e+37
  %v4756 = vand.u32 %v3855, 2147483648
  %v4757 = vor.u32 1.1754944e-38, %v4756
  %v4758 = vsel %vm4755, %v4757, %v4753
  %v4759 = vmul.f32 1.0, %v4758
  %v4760 = vrcp.pop %v3856
  %v4761 = vmul.f32 %v3856, %v4760
  %v4762 = vsub.f32 1.0, %v4761
  %v4763 = vmul.f32 %v4760, %v4762
  %v4764 = vadd.f32 %v4760, %v4763
  %vm4765 = vweird.f32 %v3856
  %vm4766 = vweird.f32 %v4760
  %vm4767 = vmor %vm4765, %vm4766
  %v4768 = vsel %vm4767, %v4760, %v4764
  %v4769 = vand.u32 2147483647, %v3856
  %vm4770 = vcmp.eq.f32.partialorder %v4769, 8.507059e+37
  %v4771 = vand.u32 %v3856, 2147483648
  %v4772 = vor.u32 1.1754944e-38, %v4771
  %v4773 = vsel %vm4770, %v4772, %v4768
  %v4774 = vmul.f32 1.0, %v4773
  %v4775 = vrcp.pop %v3857
  %v4776 = vmul.f32 %v3857, %v4775
  %v4777 = vsub.f32 1.0, %v4776
  %v4778 = vmul.f32 %v4775, %v4777
  %v4779 = vadd.f32 %v4775, %v4778
  %vm4780 = vweird.f32 %v3857
  %vm4781 = vweird.f32 %v4775
  %vm4782 = vmor %vm4780, %vm4781
  %v4783 = vsel %vm4782, %v4775, %v4779
  %v4784 = vand.u32 2147483647, %v3857
  %vm4785 = vcmp.eq.f32.partialorder %v4784, 8.507059e+37
  %v4786 = vand.u32 %v3857, 2147483648
  %v4787 = vor.u32 1.1754944e-38, %v4786
  %v4788 = vsel %vm4785, %v4787, %v4783
  %v4789 = vmul.f32 1.0, %v4788
  %v4790 = vrcp.pop %v3858
  %v4791 = vmul.f32 %v3858, %v4790
  %v4792 = vsub.f32 1.0, %v4791
  %v4793 = vmul.f32 %v4790, %v4792
  %v4794 = vadd.f32 %v4790, %v4793
  %vm4795 = vweird.f32 %v3858
  %vm4796 = vweird.f32 %v4790
  %vm4797 = vmor %vm4795, %vm4796
  %v4798 = vsel %vm4797, %v4790, %v4794
  %v4799 = vand.u32 2147483647, %v3858
  %vm4800 = vcmp.eq.f32.partialorder %v4799, 8.507059e+37
  %v4801 = vand.u32 %v3858, 2147483648
  %v4802 = vor.u32 1.1754944e-38, %v4801
  %v4803 = vsel %vm4800, %v4802, %v4798
  %v4804 = vmul.f32 1.0, %v4803
  %v4805 = vrcp.pop %v3859
  %v4806 = vmul.f32 %v3859, %v4805
  %v4807 = vsub.f32 1.0, %v4806
  %v4808 = vmul.f32 %v4805, %v4807
  %v4809 = vadd.f32 %v4805, %v4808
  %vm4810 = vweird.f32 %v3859
  %vm4811 = vweird.f32 %v4805
  %vm4812 = vmor %vm4810, %vm4811
  %v4813 = vsel %vm4812, %v4805, %v4809
  %v4814 = vand.u32 2147483647, %v3859
  %vm4815 = vcmp.eq.f32.partialorder %v4814, 8.507059e+37
  %v4816 = vand.u32 %v3859, 2147483648
  %v4817 = vor.u32 1.1754944e-38, %v4816
  %v4818 = vsel %vm4815, %v4817, %v4813
  %v4819 = vmul.f32 1.0, %v4818
  %v4820 = vmul.f32 %v3540, %v3874
  %v4821 = vmul.f32 %v3541, %v3889
  %v4822 = vmul.f32 %v3542, %v3904
  %v4823 = vmul.f32 %v3543, %v3919
  %v4824 = vmul.f32 %v3544, %v3934
  %v4825 = vmul.f32 %v3545, %v3949
  %v4826 = vmul.f32 %v3546, %v3964
  %v4827 = vmul.f32 %v3547, %v3979
  %v4828 = vmul.f32 %v3548, %v3994
  %v4829 = vmul.f32 %v3549, %v4009
  %v4830 = vmul.f32 %v3550, %v4024
  %v4831 = vmul.f32 %v3551, %v4039
  %v4832 = vmul.f32 %v3552, %v4054
  %v4833 = vmul.f32 %v3553, %v4069
  %v4834 = vmul.f32 %v3554, %v4084
  %v4835 = vmul.f32 %v3555, %v4099
  %v4836 = vmul.f32 %v3556, %v4114
  %v4837 = vmul.f32 %v3557, %v4129
  %v4838 = vmul.f32 %v3558, %v4144
  %v4839 = vmul.f32 %v3559, %v4159
  %v4840 = vmul.f32 %v3560, %v4174
  %v4841 = vmul.f32 %v3561, %v4189
  %v4842 = vmul.f32 %v3562, %v4204
  %v4843 = vmul.f32 %v3563, %v4219
  %v4844 = vmul.f32 %v3564, %v4234
  %v4845 = vmul.f32 %v3565, %v4249
  %v4846 = vmul.f32 %v3566, %v4264
  %v4847 = vmul.f32 %v3567, %v4279
  %v4848 = vmul.f32 %v3568, %v4294
  %v4849 = vmul.f32 %v3569, %v4309
  %v4850 = vmul.f32 %v3570, %v4324
  %v4851 = vmul.f32 %v3571, %v4339
  %v4852 = vmul.f32 %v3572, %v4354
  %v4853 = vmul.f32 %v3573, %v4369
  %v4854 = vmul.f32 %v3574, %v4384
  %v4855 = vmul.f32 %v3575, %v4399
  %v4856 = vmul.f32 %v3576, %v4414
  %v4857 = vmul.f32 %v3577, %v4429
  %v4858 = vmul.f32 %v3578, %v4444
  %v4859 = vmul.f32 %v3579, %v4459
  %v4860 = vmul.f32 %v3580, %v4474
  %v4861 = vmul.f32 %v3581, %v4489
  %v4862 = vmul.f32 %v3582, %v4504
  %v4863 = vmul.f32 %v3583, %v4519
  %v4864 = vmul.f32 %v3584, %v4534
  %v4865 = vmul.f32 %v3585, %v4549
  %v4866 = vmul.f32 %v3586, %v4564
  %v4867 = vmul.f32 %v3587, %v4579
  %v4868 = vmul.f32 %v3588, %v4594
  %v4869 = vmul.f32 %v3589, %v4609
  %v4870 = vmul.f32 %v3590, %v4624
  %v4871 = vmul.f32 %v3591, %v4639
  %v4872 = vmul.f32 %v3592, %v4654
  %v4873 = vmul.f32 %v3593, %v4669
  %v4874 = vmul.f32 %v3594, %v4684
  %v4875 = vmul.f32 %v3595, %v4699
  %v4876 = vmul.f32 %v3596, %v4714
  %v4877 = vmul.f32 %v3597, %v4729
  %v4878 = vmul.f32 %v3598, %v4744
  %v4879 = vmul.f32 %v3599, %v4759
  %v4880 = vmul.f32 %v3600, %v4774
  %v4881 = vmul.f32 %v3601, %v4789
  %v4882 = vmul.f32 %v3602, %v4804
  %v4883 = vmul.f32 %v3603, %v4819
  %4884 = vst.msk [vmem:[%s8] sm:$0xff] %vm3192, %v4820
  %4885 = vst.msk [vmem:[%s8 + $0x8] sm:$0xff] %vm3192, %v4821
  %4886 = vst.msk [vmem:[%s8 + $0x10] sm:$0xff] %vm3192, %v4822
  %4887 = vst.msk [vmem:[%s8 + $0x18] sm:$0xff] %vm3192, %v4823
  %4888 = vst.msk [vmem:[%s8 + $0x20] sm:$0xff] %vm3192, %v4824
  %4889 = vst.msk [vmem:[%s8 + $0x28] sm:$0xff] %vm3192, %v4825
  %4890 = vst.msk [vmem:[%s8 + $0x30] sm:$0xff] %vm3192, %v4826
  %4891 = vst.msk [vmem:[%s8 + $0x38] sm:$0xff] %vm3192, %v4827
  %4892 = vst.msk [vmem:[%s8 + $0x40] sm:$0xff] %vm3192, %v4828
  %4893 = vst.msk [vmem:[%s8 + $0x48] sm:$0xff] %vm3192, %v4829
  %4894 = vst.msk [vmem:[%s8 + $0x50] sm:$0xff] %vm3192, %v4830
  %4895 = vst.msk [vmem:[%s8 + $0x58] sm:$0xff] %vm3192, %v4831
  %4896 = vst.msk [vmem:[%s8 + $0x60] sm:$0xff] %vm3192, %v4832
  %4897 = vst.msk [vmem:[%s8 + $0x68] sm:$0xff] %vm3192, %v4833
  %4898 = vst.msk [vmem:[%s8 + $0x70] sm:$0xff] %vm3192, %v4834
  %4899 = vst.msk [vmem:[%s8 + $0x78] sm:$0xff] %vm3192, %v4835
  %4900 = vst.msk [vmem:[%s8 + $0x80] sm:$0xff] %vm3192, %v4836
  %4901 = vst.msk [vmem:[%s8 + $0x88] sm:$0xff] %vm3192, %v4837
  %4902 = vst.msk [vmem:[%s8 + $0x90] sm:$0xff] %vm3192, %v4838
  %4903 = vst.msk [vmem:[%s8 + $0x98] sm:$0xff] %vm3192, %v4839
  %4904 = vst.msk [vmem:[%s8 + $0xa0] sm:$0xff] %vm3192, %v4840
  %4905 = vst.msk [vmem:[%s8 + $0xa8] sm:$0xff] %vm3192, %v4841
  %4906 = vst.msk [vmem:[%s8 + $0xb0] sm:$0xff] %vm3192, %v4842
  %4907 = vst.msk [vmem:[%s8 + $0xb8] sm:$0xff] %vm3192, %v4843
  %4908 = vst.msk [vmem:[%s8 + $0xc0] sm:$0xff] %vm3192, %v4844
  %4909 = vst.msk [vmem:[%s8 + $0xc8] sm:$0xff] %vm3192, %v4845
  %4910 = vst.msk [vmem:[%s8 + $0xd0] sm:$0xff] %vm3192, %v4846
  %4911 = vst.msk [vmem:[%s8 + $0xd8] sm:$0xff] %vm3192, %v4847
  %4912 = vst.msk [vmem:[%s8 + $0xe0] sm:$0xff] %vm3192, %v4848
  %4913 = vst.msk [vmem:[%s8 + $0xe8] sm:$0xff] %vm3192, %v4849
  %4914 = vst.msk [vmem:[%s8 + $0xf0] sm:$0xff] %vm3192, %v4850
  %4915 = vst.msk [vmem:[%s8 + $0xf8] sm:$0xff] %vm3192, %v4851
  %4916 = vst.msk [vmem:[%s8 + $0x100] sm:$0xff] %vm3192, %v4852
  %4917 = vst.msk [vmem:[%s8 + $0x108] sm:$0xff] %vm3192, %v4853
  %4918 = vst.msk [vmem:[%s8 + $0x110] sm:$0xff] %vm3192, %v4854
  %4919 = vst.msk [vmem:[%s8 + $0x118] sm:$0xff] %vm3192, %v4855
  %4920 = vst.msk [vmem:[%s8 + $0x120] sm:$0xff] %vm3192, %v4856
  %4921 = vst.msk [vmem:[%s8 + $0x128] sm:$0xff] %vm3192, %v4857
  %4922 = vst.msk [vmem:[%s8 + $0x130] sm:$0xff] %vm3192, %v4858
  %4923 = vst.msk [vmem:[%s8 + $0x138] sm:$0xff] %vm3192, %v4859
  %4924 = vst.msk [vmem:[%s8 + $0x140] sm:$0xff] %vm3192, %v4860
  %4925 = vst.msk [vmem:[%s8 + $0x148] sm:$0xff] %vm3192, %v4861
  %4926 = vst.msk [vmem:[%s8 + $0x150] sm:$0xff] %vm3192, %v4862
  %4927 = vst.msk [vmem:[%s8 + $0x158] sm:$0xff] %vm3192, %v4863
  %4928 = vst.msk [vmem:[%s8 + $0x160] sm:$0xff] %vm3192, %v4864
  %4929 = vst.msk [vmem:[%s8 + $0x168] sm:$0xff] %vm3192, %v4865
  %4930 = vst.msk [vmem:[%s8 + $0x170] sm:$0xff] %vm3192, %v4866
  %4931 = vst.msk [vmem:[%s8 + $0x178] sm:$0xff] %vm3192, %v4867
  %4932 = vst.msk [vmem:[%s8 + $0x180] sm:$0xff] %vm3192, %v4868
  %4933 = vst.msk [vmem:[%s8 + $0x188] sm:$0xff] %vm3192, %v4869
  %4934 = vst.msk [vmem:[%s8 + $0x190] sm:$0xff] %vm3192, %v4870
  %4935 = vst.msk [vmem:[%s8 + $0x198] sm:$0xff] %vm3192, %v4871
  %4936 = vst.msk [vmem:[%s8 + $0x1a0] sm:$0xff] %vm3192, %v4872
  %4937 = vst.msk [vmem:[%s8 + $0x1a8] sm:$0xff] %vm3192, %v4873
  %4938 = vst.msk [vmem:[%s8 + $0x1b0] sm:$0xff] %vm3192, %v4874
  %4939 = vst.msk [vmem:[%s8 + $0x1b8] sm:$0xff] %vm3192, %v4875
  %4940 = vst.msk [vmem:[%s8 + $0x1c0] sm:$0xff] %vm3192, %v4876
  %4941 = vst.msk [vmem:[%s8 + $0x1c8] sm:$0xff] %vm3192, %v4877
  %4942 = vst.msk [vmem:[%s8 + $0x1d0] sm:$0xff] %vm3192, %v4878
  %4943 = vst.msk [vmem:[%s8 + $0x1d8] sm:$0xff] %vm3192, %v4879
  %4944 = vst.msk [vmem:[%s8 + $0x1e0] sm:$0xff] %vm3192, %v4880
  %4945 = vst.msk [vmem:[%s8 + $0x1e8] sm:$0xff] %vm3192, %v4881
  %4946 = vst.msk [vmem:[%s8 + $0x1f0] sm:$0xff] %vm3192, %v4882
  %4947 = vst.msk [vmem:[%s8 + $0x1f8] sm:$0xff] %vm3192, %v4883
  // Predicated region
  $region30: #{tpu_custom_call.1} parent=0 // pred_check
    _
  $region31: #{tpu_custom_call.1} parent=0 // pred_check_branch
    %4949 = sbr.rel (0) target = $region33
  $region32: #{tpu_custom_call.1} parent=0 // pred_region
    _
  $region33: #{tpu_custom_call.1} parent=0 // pred_fallthru
    _
  // Predicated region
  $region34: #{tpu_custom_call.1} parent=0 // pred_check
    _
  $region35: #{tpu_custom_call.1} parent=0 // pred_check_branch
    %4951 = sbr.rel (0) target = $region37
  $region36: #{tpu_custom_call.1} parent=0 // pred_region
    _
  $region37: #{tpu_custom_call.1} parent=0 // pred_fallthru
    _
  // Predicated region
  $region38: #{tpu_custom_call.1} parent=0 // pred_check
    _
  $region39: #{tpu_custom_call.1} parent=0 // pred_check_branch
    %4953 = sbr.rel (0) target = $region41
  $region40: #{tpu_custom_call.1} parent=0 // pred_region
    _
  $region41: #{tpu_custom_call.1} parent=0 // pred_fallthru
    _
  // Predicated region
  $region42: #{tpu_custom_call.1} parent=0 // pred_check
    _
  $region43: #{tpu_custom_call.1} parent=0 // pred_check_branch
    %4955 = sbr.rel (0) target = $region45
  $region44: #{tpu_custom_call.1} parent=0 // pred_region
    _
  $region45: #{tpu_custom_call.1} parent=0 // pred_fallthru
    _

</llo_original>
